<compile_context>
chip_gen: v6e
topology: v6e:2x2x1
jax: 0.10.0
libtpu: 0.0.40
codegen_flags: <defaults>
</compile_context>

<pallas_src>
import functools

import jax
import jax.numpy as jnp
from jax.experimental import pallas as pl
from jax.experimental.pallas import tpu as pltpu

LANE = 128


def _round_up(x, m):
    return -(-x // m) * m


# ----------------------------------------------------------------------------
# One-time weight packing ("model load"), hoisted out of the forward path.
# ----------------------------------------------------------------------------
def prepare_box_params(w_cls, b_cls, w_bbox, b_bbox, compute_dtype=jnp.bfloat16):
    """FastRCNNPredictor: pack cls_score + bbox_pred into one (F, 128) GEMM."""
    f = w_cls.shape[1]
    n_cls = w_cls.shape[0]
    n_out = n_cls + w_bbox.shape[0]                 # 2 + 8 = 10
    assert n_out <= LANE
    w = jnp.zeros((f, LANE), jnp.float32)
    w = w.at[:, :n_cls].set(w_cls.T)
    w = w.at[:, n_cls:n_out].set(w_bbox.T)
    b = jnp.zeros((1, LANE), jnp.float32)
    b = b.at[0, :n_cls].set(b_cls)
    b = b.at[0, n_cls:n_out].set(b_bbox)
    return dict(w=w.astype(compute_dtype), b=b, n_cls=n_cls, n_out=n_out)


def prepare_mask_params(w_deconv, b_deconv, w_conv, b_conv,
                        compute_dtype=jnp.bfloat16):
    """MaskRCNNPredictor weight re-layout.

    ConvTranspose2d(2x2, s2) with stride == kernel means each output pixel
    (2i+kh, 2j+kw) gets exactly one tap k = 2*kh + kw:
        y_k = x @ Wd[:, :, kh, kw]
    All 4 taps are fused into one (Cin, 4*Chid) weight (tap-major columns).
    The tap-wise 1x1 conv becomes a block-diagonal (4*Chid, 128) weight whose
    tap-k block maps into columns [k*Cout, (k+1)*Cout) of a single 128-lane
    slab -> lane-dense stores with 4x less writeback than per-tap padding.
    """
    cin, chid = w_deconv.shape[0], w_deconv.shape[1]
    cout = w_conv.shape[0]
    assert 4 * cout <= LANE
    # ConvTranspose2d weight (Cin, Chid, 2, 2) -> fused (Cin, 4*Chid), k = 2*kh+kw
    wd = jnp.transpose(w_deconv, (2, 3, 0, 1)).reshape(4, cin, chid)
    wd = jnp.transpose(wd, (1, 0, 2)).reshape(cin, 4 * chid)
    bd = jnp.tile(b_deconv, 4)[None, :]                      # (1, 4*Chid)
    # Conv2d 1x1 weight (Cout, Chid, 1, 1) -> packed block-diag (4*Chid, 128)
    wc1 = jnp.transpose(w_conv[:, :, 0, 0], (1, 0))          # (Chid, Cout)
    wc = jnp.zeros((4 * chid, LANE), jnp.float32)
    bc = jnp.zeros((1, LANE), jnp.float32)
    for k in range(4):
        wc = wc.at[k * chid:(k + 1) * chid,
                   k * cout:(k + 1) * cout].set(wc1)
        bc = bc.at[0, k * cout:(k + 1) * cout].set(b_conv)
    return dict(wd=wd.astype(compute_dtype), bd=bd,
                wc=wc.astype(compute_dtype), bc=bc, cout=cout)


# ----------------------------------------------------------------------------
# Fused heads kernel: mask head (per M-tile) + box head (tiny, per step).
# ----------------------------------------------------------------------------
def _heads_kernel(xm_ref, wd_ref, bd_ref, wc_ref, bc_ref,
                  xb_ref, wb_ref, bb_ref,
                  om_ref, ob_ref):
    # ---- mask head for this tile of flattened ROI pixels -------------------
    # xm_ref: (tm, Cin)        bf16 channels-last rows
    # wd_ref: (Cin, 4*Chid)    fused conv5_mask weights (tap-major)
    # wc_ref: (4*Chid, 128)    packed block-diagonal mask_fcn_logits weights
    y = jnp.dot(xm_ref[...], wd_ref[...], preferred_element_type=jnp.float32)
    y = jnp.maximum(y + bd_ref[...], 0.0)              # bias + ReLU in f32
    z = jnp.dot(y.astype(wc_ref.dtype), wc_ref[...],
                preferred_element_type=jnp.float32)
    om_ref[...] = (z + bc_ref[...]).astype(om_ref.dtype)

    # ---- box head: (Nb, 1024) @ (1024, 128); recomputed each step (cheap) --
    # so every grid step writes its own valid output block (parallel-safe).
    acc = jnp.dot(xb_ref[...], wb_ref[...], preferred_element_type=jnp.float32)
    ob_ref[...] = (acc + bb_ref[...]).astype(ob_ref.dtype)


@functools.partial(jax.jit, static_argnames=("tm", "mask_out_dtype"))
def _heads_call(xm, wd, bd, wc, bc, xb, wb, bb, *, tm=256,
                mask_out_dtype=jnp.float32):
    m, cin = xm.shape
    four_chid = wd.shape[1]
    nb, f = xb.shape
    assert tm % 16 == 0                       # bf16 sublane packing
    m_pad = _round_up(max(m, tm), tm)
    nb_pad = _round_up(max(nb, 16), 16)

    xmp = xm.astype(wd.dtype)
    if m_pad != m:
        xmp = jnp.pad(xmp, ((0, m_pad - m), (0, 0)))
    xbp = xb.astype(wb.dtype)
    if nb_pad != nb:
        xbp = jnp.pad(xbp, ((0, nb_pad - nb), (0, 0)))

    n_tiles = m_pad // tm
    return pl.pallas_call(
        _heads_kernel,
        out_shape=(
            jax.ShapeDtypeStruct((m_pad, LANE), mask_out_dtype),
            jax.ShapeDtypeStruct((n_tiles, nb_pad, LANE), jnp.float32),
        ),
        grid_spec=pltpu.PrefetchScalarGridSpec(
            num_scalar_prefetch=0,
            grid=(n_tiles,),
            in_specs=[
                pl.BlockSpec((tm, cin), lambda i: (i, 0)),
                pl.BlockSpec((cin, four_chid), lambda i: (0, 0)),
                pl.BlockSpec((1, four_chid), lambda i: (0, 0)),
                pl.BlockSpec((four_chid, LANE), lambda i: (0, 0)),
                pl.BlockSpec((1, LANE), lambda i: (0, 0)),
                pl.BlockSpec((nb_pad, f), lambda i: (0, 0)),
                pl.BlockSpec((f, LANE), lambda i: (0, 0)),
                pl.BlockSpec((1, LANE), lambda i: (0, 0)),
            ],
            out_specs=[
                pl.BlockSpec((tm, LANE), lambda i: (i, 0)),
                pl.BlockSpec((None, nb_pad, LANE), lambda i: (i, 0, 0)),
            ],
        ),
        compiler_params=pltpu.CompilerParams(
            # Only v7x (2 TCs) benefits from "parallel"; harmless on v5e/v6e.
            dimension_semantics=("parallel",),
            # Per-step working set is a few MiB; this cap is safe on all of
            # v5e (128 MiB), v6e (128 MiB), v7x (64 MiB physical).
            vmem_limit_bytes=32 * 1024 * 1024,
        ),
    )(xmp, wd, bd, wc, bc, xbp, wb, bb)


def mask_rg_heads(box_feats, mask_feats_nchw, box_params, mask_params, *,
                  tm=256, mask_out_dtype=jnp.float32):
    """Fused head forward.

    box_feats       : [Nb, 1024]        pooled box features
    mask_feats_nchw : [N, 256, H, W]    pooled mask features (PyTorch NCHW)
    Returns (cls_logits [Nb, 2], bbox_deltas [Nb, 8], mask_logits [N, 2, 2H, 2W]).
    """
    n, cin, h, w = mask_feats_nchw.shape
    nb = box_feats.shape[0]
    m = n * h * w
    # glue: NCHW -> channels-last flattened rows (N*H*W, Cin).
    # TODO(synk): pass NHWC features upstream to remove this full-array pass.
    xm = jnp.transpose(mask_feats_nchw, (0, 2, 3, 1)).reshape(m, cin)

    om, ob = _heads_call(xm, mask_params["wd"], mask_params["bd"],
                         mask_params["wc"], mask_params["bc"],
                         box_feats, box_params["w"], box_params["b"],
                         tm=tm, mask_out_dtype=mask_out_dtype)

    # box head: only block 0 is needed.
    n_cls, n_out = box_params["n_cls"], box_params["n_out"]
    ob0 = ob[0]
    cls_logits = ob0[:nb, :n_cls]
    bbox_deltas = ob0[:nb, n_cls:n_out]

    # mask head: keep only the 4*Cout useful columns, un-interleave the 2x2 taps.
    cout = mask_params["cout"]
    mm = om[:m, :4 * cout].reshape(n, h, w, 2, 2, cout)   # (n, i, j, kh, kw, c)
    mm = jnp.transpose(mm, (0, 1, 3, 2, 4, 5))            # (n, i, kh, j, kw, c)
    mm = mm.reshape(n, 2 * h, 2 * w, cout)
    mask_logits = jnp.transpose(mm, (0, 3, 1, 2))         # back to NCHW
    return cls_logits, bbox_deltas, mask_logits


# ----------------------------------------------------------------------------
# Pure-JAX references (PyTorch semantics) for correctness checking
# ----------------------------------------------------------------------------
def _ref_box_predictor(x, w_cls, b_cls, w_bbox, b_bbox):
    return x @ w_cls.T + b_cls, x @ w_bbox.T + b_bbox


def _ref_mask_predictor(x_nchw, w_deconv, b_deconv, w_conv, b_conv):
    n, cin, h, w = x_nchw.shape
    chid = w_deconv.shape[1]
    y = jnp.zeros((n, chid, 2 * h, 2 * w), x_nchw.dtype)
    for kh in range(2):
        for kw in range(2):
            r = jnp.einsum('nchw,cd->ndhw', x_nchw, w_deconv[:, :, kh, kw])
            y = y.at[:, :, kh::2, kw::2].set(r)
    y = jnp.maximum(y + b_deconv[None, :, None, None], 0.0)
    z = jnp.einsum('nchw,dc->ndhw', y, w_conv[:, :, 0, 0])
    return z + b_conv[None, :, None, None]


if __name__ == "__main__":
    key = jax.random.PRNGKey(0)
    ks = jax.random.split(key, 8)

    # Shapes implied by MaskRGNetwork's head replacement (small ROI count).
    num_rois = 8
    in_features = 1024          # resnet50-FPN box head feature dim
    cin_mask, hidden, num_classes = 256, 256, 2
    hm = wm = 14                # standard RoIAlign mask feature resolution

    # Deterministic synthetic parameters (not a checkpoint load).
    box_feats = jax.random.normal(ks[0], (num_rois, in_features), jnp.float32)
    mask_feats = jax.random.normal(ks[1], (num_rois, cin_mask, hm, wm), jnp.float32)

    w_cls = 0.02 * jax.random.normal(ks[2], (num_classes, in_features), jnp.float32)
    b_cls = 0.01 * jnp.arange(num_classes, dtype=jnp.float32)
    w_bbox = 0.02 * jax.random.normal(ks[3], (num_classes * 4, in_features), jnp.float32)
    b_bbox = 0.01 * jnp.arange(num_classes * 4, dtype=jnp.float32)

    w_deconv = 0.05 * jax.random.normal(ks[4], (cin_mask, hidden, 2, 2), jnp.float32)
    b_deconv = 0.01 * jax.random.normal(ks[5], (hidden,), jnp.float32)
    w_conv = 0.05 * jax.random.normal(ks[6], (num_classes, hidden, 1, 1), jnp.float32)
    b_conv = 0.01 * jax.random.normal(ks[7], (num_classes,), jnp.float32)

    # One-time weight packing ("model load"), hoisted out of the forward path.
    box_params = prepare_box_params(w_cls, b_cls, w_bbox, b_bbox)
    mask_params = prepare_mask_params(w_deconv, b_deconv, w_conv, b_conv)

    # Run the fused Pallas head kernel.
    cls_logits, bbox_deltas, mask_logits = mask_rg_heads(
        box_feats, mask_feats, box_params, mask_params)
    jax.block_until_ready((cls_logits, bbox_deltas, mask_logits))

    # Check against pure-JAX f32 references (bf16 MXU inputs => looser tolerance).
    cls_ref, bbox_ref = _ref_box_predictor(box_feats, w_cls, b_cls, w_bbox, b_bbox)
    mask_ref = _ref_mask_predictor(mask_feats, w_deconv, b_deconv, w_conv, b_conv)
    assert cls_logits.shape == (num_rois, num_classes)
    assert bbox_deltas.shape == (num_rois, num_classes * 4)
    assert mask_logits.shape == (num_rois, num_classes, 2 * hm, 2 * wm)
    assert jnp.allclose(cls_logits, cls_ref, rtol=2e-2, atol=2e-2)
    assert jnp.allclose(bbox_deltas, bbox_ref, rtol=2e-2, atol=2e-2)
    assert jnp.allclose(mask_logits, mask_ref, rtol=2e-2, atol=2e-2)

    print("KERNEL_OK")
</pallas_src>

<mosaic_0001>
module attributes {stable_mosaic.version = 11 : i64} {
  func.func @_heads_kernel(%arg0: i32, %arg1: memref<256x256xbf16, #tpu.memory_space<vmem>>, %arg2: memref<256x1024xbf16, #tpu.memory_space<vmem>>, %arg3: memref<1x1024xf32, #tpu.memory_space<vmem>>, %arg4: memref<1024x128xbf16, #tpu.memory_space<vmem>>, %arg5: memref<1x128xf32, #tpu.memory_space<vmem>>, %arg6: memref<16x1024xbf16, #tpu.memory_space<vmem>>, %arg7: memref<1024x128xbf16, #tpu.memory_space<vmem>>, %arg8: memref<1x128xf32, #tpu.memory_space<vmem>>, %arg9: memref<256x128xf32, #tpu.memory_space<vmem>>, %arg10: memref<1x16x128xf32, #tpu.memory_space<vmem>>) attributes {dimension_semantics = [#tpu.dimension_semantics<parallel>], iteration_bounds = array<i64: 7>, scalar_prefetch = 0 : i64, scratch_operands = 0 : i64, tpu.core_type = #tpu.core_type<tc>, window_params = [{transform_indices = @transform_0, window_bounds = array<i64: 256, 256>}, {pipeline_mode = #tpu.pipeline_mode<synchronous>, transform_indices = @transform_1, window_bounds = array<i64: 256, 1024>}, {pipeline_mode = #tpu.pipeline_mode<synchronous>, transform_indices = @transform_2, window_bounds = array<i64: 1, 1024>}, {pipeline_mode = #tpu.pipeline_mode<synchronous>, transform_indices = @transform_3, window_bounds = array<i64: 1024, 128>}, {pipeline_mode = #tpu.pipeline_mode<synchronous>, transform_indices = @transform_4, window_bounds = array<i64: 1, 128>}, {pipeline_mode = #tpu.pipeline_mode<synchronous>, transform_indices = @transform_5, window_bounds = array<i64: 16, 1024>}, {pipeline_mode = #tpu.pipeline_mode<synchronous>, transform_indices = @transform_6, window_bounds = array<i64: 1024, 128>}, {pipeline_mode = #tpu.pipeline_mode<synchronous>, transform_indices = @transform_7, window_bounds = array<i64: 1, 128>}, {transform_indices = @transform_8, window_bounds = array<i64: 256, 128>}, {transform_indices = @transform_9, window_bounds = array<i64: 1, 16, 128>}]} {
    %c0 = arith.constant 0 : index
    %c0_0 = arith.constant 0 : index
    %0 = vector.load %arg1[%c0, %c0_0] : memref<256x256xbf16, #tpu.memory_space<vmem>>, vector<256x256xbf16>
    %c0_1 = arith.constant 0 : index
    %c0_2 = arith.constant 0 : index
    %1 = vector.load %arg2[%c0_1, %c0_2] : memref<256x1024xbf16, #tpu.memory_space<vmem>>, vector<256x1024xbf16>
    %cst = arith.constant dense<0.000000e+00> : vector<256x1024xf32>
    %2 = tpu.matmul %0, %1, %cst {dimension_numbers = #tpu.dot_dimension_numbers<[1], [0], [0], [1], [0, 0, 1, 1], [], []>} : vector<256x256xbf16>, vector<256x1024xbf16>, vector<256x1024xf32> -> vector<256x1024xf32>
    %c0_3 = arith.constant 0 : index
    %c0_4 = arith.constant 0 : index
    %3 = vector.load %arg3[%c0_3, %c0_4] : memref<1x1024xf32, #tpu.memory_space<vmem>>, vector<1x1024xf32>
    %4 = vector.broadcast %3 : vector<1x1024xf32> to vector<256x1024xf32>
    %5 = arith.addf %2, %4 : vector<256x1024xf32>
    %cst_5 = arith.constant 0.000000e+00 : f32
    %6 = vector.broadcast %cst_5 : f32 to vector<256x1024xf32>
    %7 = arith.maximumf %5, %6 : vector<256x1024xf32>
    %8 = arith.truncf %7 : vector<256x1024xf32> to vector<256x1024xbf16>
    %c0_6 = arith.constant 0 : index
    %c0_7 = arith.constant 0 : index
    %9 = vector.load %arg4[%c0_6, %c0_7] : memref<1024x128xbf16, #tpu.memory_space<vmem>>, vector<1024x128xbf16>
    %cst_8 = arith.constant dense<0.000000e+00> : vector<256x128xf32>
    %10 = tpu.matmul %8, %9, %cst_8 {dimension_numbers = #tpu.dot_dimension_numbers<[1], [0], [0], [1], [0, 0, 1, 1], [], []>} : vector<256x1024xbf16>, vector<1024x128xbf16>, vector<256x128xf32> -> vector<256x128xf32>
    %c0_9 = arith.constant 0 : index
    %c0_10 = arith.constant 0 : index
    %11 = vector.load %arg5[%c0_9, %c0_10] : memref<1x128xf32, #tpu.memory_space<vmem>>, vector<1x128xf32>
    %12 = vector.broadcast %11 : vector<1x128xf32> to vector<256x128xf32>
    %13 = arith.addf %10, %12 : vector<256x128xf32>
    %c0_11 = arith.constant 0 : index
    %c0_12 = arith.constant 0 : index
    %14 = vector.load %arg9[%c0_11, %c0_12] : memref<256x128xf32, #tpu.memory_space<vmem>>, vector<256x128xf32>
    tpu.vector_store %arg9[%c0_11, %c0_12], %13 {strides = array<i32>} : memref<256x128xf32, #tpu.memory_space<vmem>>, vector<256x128xf32>,
    %c0_13 = arith.constant 0 : index
    %c0_14 = arith.constant 0 : index
    %15 = vector.load %arg6[%c0_13, %c0_14] : memref<16x1024xbf16, #tpu.memory_space<vmem>>, vector<16x1024xbf16>
    %c0_15 = arith.constant 0 : index
    %c0_16 = arith.constant 0 : index
    %16 = vector.load %arg7[%c0_15, %c0_16] : memref<1024x128xbf16, #tpu.memory_space<vmem>>, vector<1024x128xbf16>
    %cst_17 = arith.constant dense<0.000000e+00> : vector<16x128xf32>
    %17 = tpu.matmul %15, %16, %cst_17 {dimension_numbers = #tpu.dot_dimension_numbers<[1], [0], [0], [1], [0, 0, 1, 1], [], []>} : vector<16x1024xbf16>, vector<1024x128xbf16>, vector<16x128xf32> -> vector<16x128xf32>
    %c0_18 = arith.constant 0 : index
    %c0_19 = arith.constant 0 : index
    %18 = vector.load %arg8[%c0_18, %c0_19] : memref<1x128xf32, #tpu.memory_space<vmem>>, vector<1x128xf32>
    %19 = vector.broadcast %18 : vector<1x128xf32> to vector<16x128xf32>
    %20 = arith.addf %17, %19 : vector<16x128xf32>
    %c0_20 = arith.constant 0 : index
    %c0_21 = arith.constant 0 : index
    %c0_22 = arith.constant 0 : index
    %21 = vector.load %arg10[%c0_20, %c0_21, %c0_22] : memref<1x16x128xf32, #tpu.memory_space<vmem>>, vector<1x16x128xf32>
    %22 = vector.shape_cast %21 : vector<1x16x128xf32> to vector<16x128xf32>
    %23 = vector.shape_cast %20 : vector<16x128xf32> to vector<1x16x128xf32>
    tpu.vector_store %arg10[%c0_20, %c0_21, %c0_22], %23 {strides = array<i32>} : memref<1x16x128xf32, #tpu.memory_space<vmem>>, vector<1x16x128xf32>,
    return
  }
  func.func @transform_0(%arg0: i32) -> (i32, i32) {
    %c0_i32 = arith.constant 0 : i32
    %c0_i32_0 = arith.constant 0 : i32
    return %arg0, %c0_i32 : i32, i32
  }
  func.func @transform_1(%arg0: i32) -> (i32, i32) {
    %c0_i32 = arith.constant 0 : i32
    %c0_i32_0 = arith.constant 0 : i32
    %c0_i32_1 = arith.constant 0 : i32
    return %c0_i32, %c0_i32_0 : i32, i32
  }
  func.func @transform_2(%arg0: i32) -> (i32, i32) {
    %c0_i32 = arith.constant 0 : i32
    %c0_i32_0 = arith.constant 0 : i32
    %c0_i32_1 = arith.constant 0 : i32
    return %c0_i32, %c0_i32_0 : i32, i32
  }
  func.func @transform_3(%arg0: i32) -> (i32, i32) {
    %c0_i32 = arith.constant 0 : i32
    %c0_i32_0 = arith.constant 0 : i32
    %c0_i32_1 = arith.constant 0 : i32
    return %c0_i32, %c0_i32_0 : i32, i32
  }
  func.func @transform_4(%arg0: i32) -> (i32, i32) {
    %c0_i32 = arith.constant 0 : i32
    %c0_i32_0 = arith.constant 0 : i32
    %c0_i32_1 = arith.constant 0 : i32
    return %c0_i32, %c0_i32_0 : i32, i32
  }
  func.func @transform_5(%arg0: i32) -> (i32, i32) {
    %c0_i32 = arith.constant 0 : i32
    %c0_i32_0 = arith.constant 0 : i32
    %c0_i32_1 = arith.constant 0 : i32
    return %c0_i32, %c0_i32_0 : i32, i32
  }
  func.func @transform_6(%arg0: i32) -> (i32, i32) {
    %c0_i32 = arith.constant 0 : i32
    %c0_i32_0 = arith.constant 0 : i32
    %c0_i32_1 = arith.constant 0 : i32
    return %c0_i32, %c0_i32_0 : i32, i32
  }
  func.func @transform_7(%arg0: i32) -> (i32, i32) {
    %c0_i32 = arith.constant 0 : i32
    %c0_i32_0 = arith.constant 0 : i32
    %c0_i32_1 = arith.constant 0 : i32
    return %c0_i32, %c0_i32_0 : i32, i32
  }
  func.func @transform_8(%arg0: i32) -> (i32, i32) {
    %c0_i32 = arith.constant 0 : i32
    %c0_i32_0 = arith.constant 0 : i32
    return %arg0, %c0_i32 : i32, i32
  }
  func.func @transform_9(%arg0: i32) -> (i32, i32, i32) {
    %c0_i32 = arith.constant 0 : i32
    %c0_i32_0 = arith.constant 0 : i32
    %c0_i32_1 = arith.constant 0 : i32
    return %arg0, %c0_i32, %c0_i32_0 : i32, i32, i32
  }
}

</mosaic_0001>

<llo_original>
// kernel: _heads_call.1
$region0: #{_heads_call.1}
  #allocation0 [shape = 'u32[]', space=smem, size = 0x4, offset = 0x4, fixed_abs, tag = 'smem constant byte address 0x4 - core index']
  #allocation1 [shape = 'u32[144,128]{1,0:T(1,128)}', space=vmem, size = 0x12000, scoped, tag = 'internal scratch']
  %s0 = inlined_call_operand.vmem [shape: bf16[1792,256], index: 0, kind: input, shape index: {}]
  %s1 = inlined_call_operand.vmem [shape: bf16[256,1024], index: 1, kind: input, shape index: {}]
  %s2 = inlined_call_operand.vmem [shape: f32[1,1024], index: 2, kind: input, shape index: {}]
  %s3 = inlined_call_operand.vmem [shape: bf16[1024,128], index: 3, kind: input, shape index: {}]
  %s4 = inlined_call_operand.vmem [shape: f32[1,128], index: 4, kind: input, shape index: {}]
  %s5 = inlined_call_operand.vmem [shape: bf16[16,1024], index: 5, kind: input, shape index: {}]
  %s6 = inlined_call_operand.vmem [shape: bf16[1024,128], index: 6, kind: input, shape index: {}]
  %s7 = inlined_call_operand.vmem [shape: f32[1,128], index: 7, kind: input, shape index: {}]
  %s8 = inlined_call_operand.hbm [shape: f32[1792,128], index: 8, kind: output, shape index: {0}]
  %s9 = inlined_call_operand.hbm [shape: f32[7,16,128], index: 9, kind: output, shape index: {1}]
  %10 = xla_tuple %s8, %s9
  %s11 = sld [smem:[#allocation0]]
  $region73: #{_heads_call.1} parent=0
    _
  %s13 = ssub.s32 1, %s11
  %s14 = scalar_select 0, %s13, %s11
  $region1: #{_heads_call.1} parent=0
    #allocation2 [shape = 'u8[262144]{0}', space=vmem, size = 0x40000, scoped, tag = 'output window, operand 0']
    #allocation3 [shape = 's32[2]{0}', space=sflag, size = 0x8, scoped, tag = 'scoped memory for _heads_call.1']
    #allocation4 [shape = 'u8[16384]{0}', space=vmem, size = 0x4000, scoped, tag = 'output window, operand 1']
    #allocation5 [shape = 's32[2]{0}', space=sflag, size = 0x8, scoped, tag = 'scoped memory for _heads_call.1']
    %15 = vsyncpa [#allocation3], 0
    %s16 = scalar_lea.sflag [#allocation3], 1
    %17 = vsyncpa %s16, 0
    %18 = vsyncpa [#allocation5], 0
    %s19 = scalar_lea.sflag [#allocation5], 1
    %20 = vsyncpa %s19, 0
    loop: start=0, step=1, limit=9
    $region2: #{_heads_call.1} parent=1 // loop_pre_header
      _
    $region3: #{_heads_call.1} parent=1 // loop_header
      %s22 = sphi 0, %s26
      %p23 = scmp.ge.s32.totalorder %s22, 9
      %s32 = sphi 0, %s34
      %s35 = sphi 0, %s32
      %s36 = sphi 0, %s35
      %s52 = sphi 0, %s36
      %s56 = sphi 0, %s56
      %s58 = sphi 0, %s56
      %s59 = sphi 0, %s58
      %s73 = sphi 0, %s59
      %s77 = sphi 0, %s77
      %s79 = sphi 0, %s77
      %s80 = sphi 0, %s79
      %s94 = sphi 0, %s80
      %s98 = sphi 0, %s98
      %s100 = sphi 0, %s98
      %s101 = sphi 0, %s100
      %s115 = sphi 0, %s101
      %s119 = sphi 0, %s119
      %s121 = sphi 0, %s119
      %s122 = sphi 0, %s121
      %s136 = sphi 0, %s122
      %s140 = sphi 0, %s140
      %s142 = sphi 0, %s140
      %s143 = sphi 0, %s142
      %s157 = sphi 0, %s143
      %s161 = sphi 0, %s161
      %s163 = sphi 0, %s161
      %s164 = sphi 0, %s163
      %s178 = sphi 0, %s164
      %s182 = sphi 0, %s182
      %s184 = sphi 0, %s182
      %s185 = sphi 0, %s184
      %s199 = sphi 0, %s185
      %s205 = sphi 0, %s207
      %s208 = sphi 0, %s205
      %s209 = sphi 0, %s208
      %s225 = sphi 0, %s209
      %s231 = sphi 0, %s233
      %s234 = sphi 0, %s231
      %s235 = sphi 0, %s234
      %s251 = sphi 0, %s235
    $region4: #{_heads_call.1} parent=1 // loop_header_branch
      %25 = sbr.rel (%p23) target = $region8
    $region5: #{_heads_call.1} parent=1 // loop_body
      %s27 = ssub.s32 %s22, 1
      %s28 = ssub.s32 %s22, 2
      %s29 = sadd.s32 %s22, 1
      %s30 = ssub.s32 %s22, %s29
      %p31 = scmp.eq.s32.totalorder %s30, 0
      %s33 = sadd.s32 %s32, 1
      %s34 = scalar_select %p31, %s32, %s33
      %p37 = pneg %p31
      %p38 = scmp.eq.s32.totalorder %s22, 6
      %p39 = por %p37, %p38
      %p40 = scmp.ne.s32.totalorder %s32, %s35
      %p41 = scmp.eq.s32.totalorder %s22, 0
      %p42 = por %p40, %p41
      %p43 = scmp.ne.s32.totalorder %s32, %s35
      %p44 = scmp.eq.s32.totalorder %s27, 6
      %p45 = por %p43, %p44
      %p46 = scmp.ne.s32.totalorder %s35, %s36
      %p47 = scmp.eq.s32.totalorder %s27, 0
      %p48 = por %p46, %p47
      %p49 = scmp.ne.s32.totalorder %s35, %s36
      %p50 = scmp.eq.s32.totalorder %s28, 6
      %p51 = por %p49, %p50
      %p53 = scmp.ne.s32.totalorder %s36, %s52
      %p54 = scmp.eq.s32.totalorder %s28, 0
      %p55 = por %p53, %p54
      %s57 = sadd.s32 %s56, 1
      %p60 = scmp.eq.s32.totalorder %s22, 6
      %p61 = scmp.ne.s32.totalorder %s56, %s58
      %p62 = scmp.eq.s32.totalorder %s22, 0
      %p63 = por %p61, %p62
      %p64 = scmp.ne.s32.totalorder %s56, %s58
      %p65 = scmp.eq.s32.totalorder %s27, 6
      %p66 = por %p64, %p65
      %p67 = scmp.ne.s32.totalorder %s58, %s59
      %p68 = scmp.eq.s32.totalorder %s27, 0
      %p69 = por %p67, %p68
      %p70 = scmp.ne.s32.totalorder %s58, %s59
      %p71 = scmp.eq.s32.totalorder %s28, 6
      %p72 = por %p70, %p71
      %p74 = scmp.ne.s32.totalorder %s59, %s73
      %p75 = scmp.eq.s32.totalorder %s28, 0
      %p76 = por %p74, %p75
      %s78 = sadd.s32 %s77, 1
      %p81 = scmp.eq.s32.totalorder %s22, 6
      %p82 = scmp.ne.s32.totalorder %s77, %s79
      %p83 = scmp.eq.s32.totalorder %s22, 0
      %p84 = por %p82, %p83
      %p85 = scmp.ne.s32.totalorder %s77, %s79
      %p86 = scmp.eq.s32.totalorder %s27, 6
      %p87 = por %p85, %p86
      %p88 = scmp.ne.s32.totalorder %s79, %s80
      %p89 = scmp.eq.s32.totalorder %s27, 0
      %p90 = por %p88, %p89
      %p91 = scmp.ne.s32.totalorder %s79, %s80
      %p92 = scmp.eq.s32.totalorder %s28, 6
      %p93 = por %p91, %p92
      %p95 = scmp.ne.s32.totalorder %s80, %s94
      %p96 = scmp.eq.s32.totalorder %s28, 0
      %p97 = por %p95, %p96
      %s99 = sadd.s32 %s98, 1
      %p102 = scmp.eq.s32.totalorder %s22, 6
      %p103 = scmp.ne.s32.totalorder %s98, %s100
      %p104 = scmp.eq.s32.totalorder %s22, 0
      %p105 = por %p103, %p104
      %p106 = scmp.ne.s32.totalorder %s98, %s100
      %p107 = scmp.eq.s32.totalorder %s27, 6
      %p108 = por %p106, %p107
      %p109 = scmp.ne.s32.totalorder %s100, %s101
      %p110 = scmp.eq.s32.totalorder %s27, 0
      %p111 = por %p109, %p110
      %p112 = scmp.ne.s32.totalorder %s100, %s101
      %p113 = scmp.eq.s32.totalorder %s28, 6
      %p114 = por %p112, %p113
      %p116 = scmp.ne.s32.totalorder %s101, %s115
      %p117 = scmp.eq.s32.totalorder %s28, 0
      %p118 = por %p116, %p117
      %s120 = sadd.s32 %s119, 1
      %p123 = scmp.eq.s32.totalorder %s22, 6
      %p124 = scmp.ne.s32.totalorder %s119, %s121
      %p125 = scmp.eq.s32.totalorder %s22, 0
      %p126 = por %p124, %p125
      %p127 = scmp.ne.s32.totalorder %s119, %s121
      %p128 = scmp.eq.s32.totalorder %s27, 6
      %p129 = por %p127, %p128
      %p130 = scmp.ne.s32.totalorder %s121, %s122
      %p131 = scmp.eq.s32.totalorder %s27, 0
      %p132 = por %p130, %p131
      %p133 = scmp.ne.s32.totalorder %s121, %s122
      %p134 = scmp.eq.s32.totalorder %s28, 6
      %p135 = por %p133, %p134
      %p137 = scmp.ne.s32.totalorder %s122, %s136
      %p138 = scmp.eq.s32.totalorder %s28, 0
      %p139 = por %p137, %p138
      %s141 = sadd.s32 %s140, 1
      %p144 = scmp.eq.s32.totalorder %s22, 6
      %p145 = scmp.ne.s32.totalorder %s140, %s142
      %p146 = scmp.eq.s32.totalorder %s22, 0
      %p147 = por %p145, %p146
      %p148 = scmp.ne.s32.totalorder %s140, %s142
      %p149 = scmp.eq.s32.totalorder %s27, 6
      %p150 = por %p148, %p149
      %p151 = scmp.ne.s32.totalorder %s142, %s143
      %p152 = scmp.eq.s32.totalorder %s27, 0
      %p153 = por %p151, %p152
      %p154 = scmp.ne.s32.totalorder %s142, %s143
      %p155 = scmp.eq.s32.totalorder %s28, 6
      %p156 = por %p154, %p155
      %p158 = scmp.ne.s32.totalorder %s143, %s157
      %p159 = scmp.eq.s32.totalorder %s28, 0
      %p160 = por %p158, %p159
      %s162 = sadd.s32 %s161, 1
      %p165 = scmp.eq.s32.totalorder %s22, 6
      %p166 = scmp.ne.s32.totalorder %s161, %s163
      %p167 = scmp.eq.s32.totalorder %s22, 0
      %p168 = por %p166, %p167
      %p169 = scmp.ne.s32.totalorder %s161, %s163
      %p170 = scmp.eq.s32.totalorder %s27, 6
      %p171 = por %p169, %p170
      %p172 = scmp.ne.s32.totalorder %s163, %s164
      %p173 = scmp.eq.s32.totalorder %s27, 0
      %p174 = por %p172, %p173
      %p175 = scmp.ne.s32.totalorder %s163, %s164
      %p176 = scmp.eq.s32.totalorder %s28, 6
      %p177 = por %p175, %p176
      %p179 = scmp.ne.s32.totalorder %s164, %s178
      %p180 = scmp.eq.s32.totalorder %s28, 0
      %p181 = por %p179, %p180
      %s183 = sadd.s32 %s182, 1
      %p186 = scmp.eq.s32.totalorder %s22, 6
      %p187 = scmp.ne.s32.totalorder %s182, %s184
      %p188 = scmp.eq.s32.totalorder %s22, 0
      %p189 = por %p187, %p188
      %p190 = scmp.ne.s32.totalorder %s182, %s184
      %p191 = scmp.eq.s32.totalorder %s27, 6
      %p192 = por %p190, %p191
      %p193 = scmp.ne.s32.totalorder %s184, %s185
      %p194 = scmp.eq.s32.totalorder %s27, 0
      %p195 = por %p193, %p194
      %p196 = scmp.ne.s32.totalorder %s184, %s185
      %p197 = scmp.eq.s32.totalorder %s28, 6
      %p198 = por %p196, %p197
      %p200 = scmp.ne.s32.totalorder %s185, %s199
      %p201 = scmp.eq.s32.totalorder %s28, 0
      %p202 = por %p200, %p201
      %s203 = ssub.s32 %s22, %s29
      %p204 = scmp.eq.s32.totalorder %s203, 0
      %s206 = sadd.s32 %s205, 1
      %s207 = scalar_select %p204, %s205, %s206
      %p210 = pneg %p204
      %p211 = scmp.eq.s32.totalorder %s22, 6
      %p212 = por %p210, %p211
      %p213 = scmp.ne.s32.totalorder %s205, %s208
      %p214 = scmp.eq.s32.totalorder %s22, 0
      %p215 = por %p213, %p214
      %p216 = scmp.ne.s32.totalorder %s205, %s208
      %p217 = scmp.eq.s32.totalorder %s27, 6
      %p218 = por %p216, %p217
      %p219 = scmp.ne.s32.totalorder %s208, %s209
      %p220 = scmp.eq.s32.totalorder %s27, 0
      %p221 = por %p219, %p220
      %p222 = scmp.ne.s32.totalorder %s208, %s209
      %p223 = scmp.eq.s32.totalorder %s28, 6
      %p224 = por %p222, %p223
      %p226 = scmp.ne.s32.totalorder %s209, %s225
      %p227 = scmp.eq.s32.totalorder %s28, 0
      %p228 = por %p226, %p227
      %s229 = ssub.s32 %s22, %s29
      %p230 = scmp.eq.s32.totalorder %s229, 0
      %s232 = sadd.s32 %s231, 1
      %s233 = scalar_select %p230, %s231, %s232
      %p236 = pneg %p230
      %p237 = scmp.eq.s32.totalorder %s22, 6
      %p238 = por %p236, %p237
      %p239 = scmp.ne.s32.totalorder %s231, %s234
      %p240 = scmp.eq.s32.totalorder %s22, 0
      %p241 = por %p239, %p240
      %p242 = scmp.ne.s32.totalorder %s231, %s234
      %p243 = scmp.eq.s32.totalorder %s27, 6
      %p244 = por %p242, %p243
      %p245 = scmp.ne.s32.totalorder %s234, %s235
      %p246 = scmp.eq.s32.totalorder %s27, 0
      %p247 = por %p245, %p246
      %p248 = scmp.ne.s32.totalorder %s234, %s235
      %p249 = scmp.eq.s32.totalorder %s28, 6
      %p250 = por %p248, %p249
      %p252 = scmp.ne.s32.totalorder %s235, %s251
      %p253 = scmp.eq.s32.totalorder %s28, 0
      %p254 = por %p252, %p253
      %p255 = scmp.le.s32.totalorder 1, %s22
      %p256 = scmp.lt.s32.totalorder %s22, 8
      %p257 = pnand %p255, %p256
      %p258 = pneg %p257
      // Predicated region
      $region9: #{_heads_call.1} parent=5 // pred_check
        _
      $region10: #{_heads_call.1} parent=5 // pred_check_branch
        %260 = sbr.rel (%p257) target = $region12
      $region11: #{_heads_call.1} parent=5 // pred_region
        %s261 = ssub.s32 %s22, 1
        // Predicated region
        $region13: #{_heads_call.1} parent=11 // pred_check
          %p262 = pneg %p69
        $region14: #{_heads_call.1} parent=11 // pred_check_branch
          %264 = sbr.rel (%p262) target = $region16
        $region15: #{_heads_call.1} parent=11 // pred_region
          _
        $region16: #{_heads_call.1} parent=11 // pred_fallthru
          _
        // Predicated region
        $region17: #{_heads_call.1} parent=11 // pred_check
          %p265 = pneg %p90
        $region18: #{_heads_call.1} parent=11 // pred_check_branch
          %267 = sbr.rel (%p265) target = $region20
        $region19: #{_heads_call.1} parent=11 // pred_region
          _
        $region20: #{_heads_call.1} parent=11 // pred_fallthru
          _
        // Predicated region
        $region21: #{_heads_call.1} parent=11 // pred_check
          %p268 = pneg %p111
        $region22: #{_heads_call.1} parent=11 // pred_check_branch
          %270 = sbr.rel (%p268) target = $region24
        $region23: #{_heads_call.1} parent=11 // pred_region
          _
        $region24: #{_heads_call.1} parent=11 // pred_fallthru
          _
        // Predicated region
        $region25: #{_heads_call.1} parent=11 // pred_check
          %p271 = pneg %p132
        $region26: #{_heads_call.1} parent=11 // pred_check_branch
          %273 = sbr.rel (%p271) target = $region28
        $region27: #{_heads_call.1} parent=11 // pred_region
          _
        $region28: #{_heads_call.1} parent=11 // pred_fallthru
          _
        // Predicated region
        $region29: #{_heads_call.1} parent=11 // pred_check
          %p274 = pneg %p153
        $region30: #{_heads_call.1} parent=11 // pred_check_branch
          %276 = sbr.rel (%p274) target = $region32
        $region31: #{_heads_call.1} parent=11 // pred_region
          _
        $region32: #{_heads_call.1} parent=11 // pred_fallthru
          _
        // Predicated region
        $region33: #{_heads_call.1} parent=11 // pred_check
          %p277 = pneg %p174
        $region34: #{_heads_call.1} parent=11 // pred_check_branch
          %279 = sbr.rel (%p277) target = $region36
        $region35: #{_heads_call.1} parent=11 // pred_region
          _
        $region36: #{_heads_call.1} parent=11 // pred_fallthru
          _
        // Predicated region
        $region37: #{_heads_call.1} parent=11 // pred_check
          %p280 = pneg %p195
        $region38: #{_heads_call.1} parent=11 // pred_check_branch
          %282 = sbr.rel (%p280) target = $region40
        $region39: #{_heads_call.1} parent=11 // pred_region
          _
        $region40: #{_heads_call.1} parent=11 // pred_fallthru
          _
      $region12: #{_heads_call.1} parent=5 // pred_fallthru
        _
      %p283 = scmp.lt.s32.totalorder %s22, 7
      // Predicated region
      $region41: #{_heads_call.1} parent=5 // pred_check
        %p284 = pneg %p283
      $region42: #{_heads_call.1} parent=5 // pred_check_branch
        %286 = sbr.rel (%p284) target = $region44
      $region43: #{_heads_call.1} parent=5 // pred_region
        // Predicated region
        $region45: #{_heads_call.1} parent=43 // pred_check
          %p287 = pneg %p42
        $region46: #{_heads_call.1} parent=43 // pred_check_branch
          %289 = sbr.rel (%p287) target = $region48
        $region47: #{_heads_call.1} parent=43 // pred_region
          %s290 = smul.u32 32, %s22
          %p291 = scmp.lt.s32.totalorder %s290, 223
          %s292 = scalar_select %p291, %s290, 223
          %s293 = smul.addr %s292, 2
          %s294 = smul.addr %s293, 4
          %s295 = scalar_lea.vmem %s0, %s294
          %s296 = smul.u32 32, %s22
        $region48: #{_heads_call.1} parent=43 // pred_fallthru
          _
      $region44: #{_heads_call.1} parent=5 // pred_fallthru
        _
      %p297 = scmp.le.s32.totalorder 1, %s22
      %p298 = scmp.lt.s32.totalorder %s22, 8
      %p299 = pnand %p297, %p298
      %p300 = pneg %p299
      // Predicated region
      $region49: #{_heads_call.1} parent=5 // pred_check
        _
      $region50: #{_heads_call.1} parent=5 // pred_check_branch
        %302 = sbr.rel (%p299) target = $region52
      $region51: #{_heads_call.1} parent=5 // pred_region
        %s303 = ssub.s32 %s22, 1
        %s304 = smul.u32 32, %s27
        %p305 = scmp.lt.s32.totalorder %s304, 223
        %s306 = scalar_select %p305, %s304, 223
        %s307 = smul.addr %s306, 2
        %s308 = smul.addr %s307, 4
        %s309 = scalar_lea.vmem %s0, %s308
        %p310 = pneg %p48
        %p311 = pneg %p45
        %p312 = pneg %p69
        %p313 = pneg %p66
        %p314 = pneg %p90
        %p315 = pneg %p87
        %p316 = pneg %p111
        %p317 = pneg %p108
        %p318 = pneg %p132
        %p319 = pneg %p129
        %p320 = pneg %p153
        %p321 = pneg %p150
        %p322 = pneg %p174
        %p323 = pneg %p171
        %p324 = pneg %p195
        %p325 = pneg %p192
        %p326 = pneg %p221
        %p327 = pneg %p218
        %s328 = sand.u32 %s208, 1
        %s329 = scalar_lea.sflag [#allocation3], %s328
        %s330 = sand.u32 %s208, 1
        %s331 = smul.addr %s330, 256
        %s332 = scalar_lea.vmem [#allocation2], %s331
        %p333 = pneg %p247
        %p334 = pneg %p244
        %s335 = sand.u32 %s234, 1
        %s336 = scalar_lea.sflag [#allocation5], %s335
        %s337 = sand.u32 %s234, 1
        %s338 = smul.addr %s337, 16
        %s339 = scalar_lea.vmem [#allocation4], %s338
        %s340 = smul.u32 32, %s27
        %p341 = scmp.lt.s32.totalorder %s340, 223
        %s342 = scalar_select %p341, %s340, 223
        %s343 = smul.addr %s342, 2
        %s344 = smul.addr %s343, 4
        %s345 = scalar_lea.vmem %s0, %s344
        %s346 = smul.u32 32, %s27
        %s347 = smul.u32 32, %s27
        %v349 = vld [vmem:[%s345] sm:$0xff]
        %v350 = vld [vmem:[%s345 + $0x8] sm:$0xff]
        %v351 = vld [vmem:[%s345 + $0x10] sm:$0xff]
        %v352 = vld [vmem:[%s345 + $0x18] sm:$0xff]
        %v353 = vld [vmem:[%s345 + $0x20] sm:$0xff]
        %v354 = vld [vmem:[%s345 + $0x28] sm:$0xff]
        %v355 = vld [vmem:[%s345 + $0x30] sm:$0xff]
        %v356 = vld [vmem:[%s345 + $0x38] sm:$0xff]
        %v357 = vld [vmem:[%s345 + $0x40] sm:$0xff]
        %v358 = vld [vmem:[%s345 + $0x48] sm:$0xff]
        %v359 = vld [vmem:[%s345 + $0x50] sm:$0xff]
        %v360 = vld [vmem:[%s345 + $0x58] sm:$0xff]
        %v361 = vld [vmem:[%s345 + $0x60] sm:$0xff]
        %v362 = vld [vmem:[%s345 + $0x68] sm:$0xff]
        %v363 = vld [vmem:[%s345 + $0x70] sm:$0xff]
        %v364 = vld [vmem:[%s345 + $0x78] sm:$0xff]
        %v365 = vld [vmem:[%s345 + $0x80] sm:$0xff]
        %v366 = vld [vmem:[%s345 + $0x88] sm:$0xff]
        %v367 = vld [vmem:[%s345 + $0x90] sm:$0xff]
        %v368 = vld [vmem:[%s345 + $0x98] sm:$0xff]
        %v369 = vld [vmem:[%s345 + $0xa0] sm:$0xff]
        %v370 = vld [vmem:[%s345 + $0xa8] sm:$0xff]
        %v371 = vld [vmem:[%s345 + $0xb0] sm:$0xff]
        %v372 = vld [vmem:[%s345 + $0xb8] sm:$0xff]
        %v373 = vld [vmem:[%s345 + $0xc0] sm:$0xff]
        %v374 = vld [vmem:[%s345 + $0xc8] sm:$0xff]
        %v375 = vld [vmem:[%s345 + $0xd0] sm:$0xff]
        %v376 = vld [vmem:[%s345 + $0xd8] sm:$0xff]
        %v377 = vld [vmem:[%s345 + $0xe0] sm:$0xff]
        %v378 = vld [vmem:[%s345 + $0xe8] sm:$0xff]
        %v379 = vld [vmem:[%s345 + $0xf0] sm:$0xff]
        %v380 = vld [vmem:[%s345 + $0xf8] sm:$0xff]
        %v381 = vld [vmem:[%s1] sm:$0xff]
        %v382 = vld [vmem:[%s1 + $0x8] sm:$0xff]
        %v383 = vld [vmem:[%s1 + $0x10] sm:$0xff]
        %v384 = vld [vmem:[%s1 + $0x18] sm:$0xff]
        %v385 = vld [vmem:[%s1 + $0x20] sm:$0xff]
        %v386 = vld [vmem:[%s1 + $0x28] sm:$0xff]
        %v387 = vld [vmem:[%s1 + $0x30] sm:$0xff]
        %v388 = vld [vmem:[%s1 + $0x38] sm:$0xff]
        %v389 = vld [vmem:[%s1 + $0x40] sm:$0xff]
        %v390 = vld [vmem:[%s1 + $0x48] sm:$0xff]
        %v391 = vld [vmem:[%s1 + $0x50] sm:$0xff]
        %v392 = vld [vmem:[%s1 + $0x58] sm:$0xff]
        %v393 = vld [vmem:[%s1 + $0x60] sm:$0xff]
        %v394 = vld [vmem:[%s1 + $0x68] sm:$0xff]
        %v395 = vld [vmem:[%s1 + $0x70] sm:$0xff]
        %v396 = vld [vmem:[%s1 + $0x78] sm:$0xff]
        %v397 = vld [vmem:[%s1 + $0x80] sm:$0xff]
        %v398 = vld [vmem:[%s1 + $0x88] sm:$0xff]
        %v399 = vld [vmem:[%s1 + $0x90] sm:$0xff]
        %v400 = vld [vmem:[%s1 + $0x98] sm:$0xff]
        %v401 = vld [vmem:[%s1 + $0xa0] sm:$0xff]
        %v402 = vld [vmem:[%s1 + $0xa8] sm:$0xff]
        %v403 = vld [vmem:[%s1 + $0xb0] sm:$0xff]
        %v404 = vld [vmem:[%s1 + $0xb8] sm:$0xff]
        %v405 = vld [vmem:[%s1 + $0xc0] sm:$0xff]
        %v406 = vld [vmem:[%s1 + $0xc8] sm:$0xff]
        %v407 = vld [vmem:[%s1 + $0xd0] sm:$0xff]
        %v408 = vld [vmem:[%s1 + $0xd8] sm:$0xff]
        %v409 = vld [vmem:[%s1 + $0xe0] sm:$0xff]
        %v410 = vld [vmem:[%s1 + $0xe8] sm:$0xff]
        %v411 = vld [vmem:[%s1 + $0xf0] sm:$0xff]
        %v412 = vld [vmem:[%s1 + $0xf8] sm:$0xff]
        %v413 = vld [vmem:[%s1 + $0x100] sm:$0xff]
        %v414 = vld [vmem:[%s1 + $0x108] sm:$0xff]
        %v415 = vld [vmem:[%s1 + $0x110] sm:$0xff]
        %v416 = vld [vmem:[%s1 + $0x118] sm:$0xff]
        %v417 = vld [vmem:[%s1 + $0x120] sm:$0xff]
        %v418 = vld [vmem:[%s1 + $0x128] sm:$0xff]
        %v419 = vld [vmem:[%s1 + $0x130] sm:$0xff]
        %v420 = vld [vmem:[%s1 + $0x138] sm:$0xff]
        %v421 = vld [vmem:[%s1 + $0x140] sm:$0xff]
        %v422 = vld [vmem:[%s1 + $0x148] sm:$0xff]
        %v423 = vld [vmem:[%s1 + $0x150] sm:$0xff]
        %v424 = vld [vmem:[%s1 + $0x158] sm:$0xff]
        %v425 = vld [vmem:[%s1 + $0x160] sm:$0xff]
        %v426 = vld [vmem:[%s1 + $0x168] sm:$0xff]
        %v427 = vld [vmem:[%s1 + $0x170] sm:$0xff]
        %v428 = vld [vmem:[%s1 + $0x178] sm:$0xff]
        %v429 = vld [vmem:[%s1 + $0x180] sm:$0xff]
        %v430 = vld [vmem:[%s1 + $0x188] sm:$0xff]
        %v431 = vld [vmem:[%s1 + $0x190] sm:$0xff]
        %v432 = vld [vmem:[%s1 + $0x198] sm:$0xff]
        %v433 = vld [vmem:[%s1 + $0x1a0] sm:$0xff]
        %v434 = vld [vmem:[%s1 + $0x1a8] sm:$0xff]
        %v435 = vld [vmem:[%s1 + $0x1b0] sm:$0xff]
        %v436 = vld [vmem:[%s1 + $0x1b8] sm:$0xff]
        %v437 = vld [vmem:[%s1 + $0x1c0] sm:$0xff]
        %v438 = vld [vmem:[%s1 + $0x1c8] sm:$0xff]
        %v439 = vld [vmem:[%s1 + $0x1d0] sm:$0xff]
        %v440 = vld [vmem:[%s1 + $0x1d8] sm:$0xff]
        %v441 = vld [vmem:[%s1 + $0x1e0] sm:$0xff]
        %v442 = vld [vmem:[%s1 + $0x1e8] sm:$0xff]
        %v443 = vld [vmem:[%s1 + $0x1f0] sm:$0xff]
        %v444 = vld [vmem:[%s1 + $0x1f8] sm:$0xff]
        %v445 = vld [vmem:[%s1 + $0x200] sm:$0xff]
        %v446 = vld [vmem:[%s1 + $0x208] sm:$0xff]
        %v447 = vld [vmem:[%s1 + $0x210] sm:$0xff]
        %v448 = vld [vmem:[%s1 + $0x218] sm:$0xff]
        %v449 = vld [vmem:[%s1 + $0x220] sm:$0xff]
        %v450 = vld [vmem:[%s1 + $0x228] sm:$0xff]
        %v451 = vld [vmem:[%s1 + $0x230] sm:$0xff]
        %v452 = vld [vmem:[%s1 + $0x238] sm:$0xff]
        %v453 = vld [vmem:[%s1 + $0x240] sm:$0xff]
        %v454 = vld [vmem:[%s1 + $0x248] sm:$0xff]
        %v455 = vld [vmem:[%s1 + $0x250] sm:$0xff]
        %v456 = vld [vmem:[%s1 + $0x258] sm:$0xff]
        %v457 = vld [vmem:[%s1 + $0x260] sm:$0xff]
        %v458 = vld [vmem:[%s1 + $0x268] sm:$0xff]
        %v459 = vld [vmem:[%s1 + $0x270] sm:$0xff]
        %v460 = vld [vmem:[%s1 + $0x278] sm:$0xff]
        %v461 = vld [vmem:[%s1 + $0x280] sm:$0xff]
        %v462 = vld [vmem:[%s1 + $0x288] sm:$0xff]
        %v463 = vld [vmem:[%s1 + $0x290] sm:$0xff]
        %v464 = vld [vmem:[%s1 + $0x298] sm:$0xff]
        %v465 = vld [vmem:[%s1 + $0x2a0] sm:$0xff]
        %v466 = vld [vmem:[%s1 + $0x2a8] sm:$0xff]
        %v467 = vld [vmem:[%s1 + $0x2b0] sm:$0xff]
        %v468 = vld [vmem:[%s1 + $0x2b8] sm:$0xff]
        %v469 = vld [vmem:[%s1 + $0x2c0] sm:$0xff]
        %v470 = vld [vmem:[%s1 + $0x2c8] sm:$0xff]
        %v471 = vld [vmem:[%s1 + $0x2d0] sm:$0xff]
        %v472 = vld [vmem:[%s1 + $0x2d8] sm:$0xff]
        %v473 = vld [vmem:[%s1 + $0x2e0] sm:$0xff]
        %v474 = vld [vmem:[%s1 + $0x2e8] sm:$0xff]
        %v475 = vld [vmem:[%s1 + $0x2f0] sm:$0xff]
        %v476 = vld [vmem:[%s1 + $0x2f8] sm:$0xff]
        %v477 = vld [vmem:[%s1 + $0x300] sm:$0xff]
        %v478 = vld [vmem:[%s1 + $0x308] sm:$0xff]
        %v479 = vld [vmem:[%s1 + $0x310] sm:$0xff]
        %v480 = vld [vmem:[%s1 + $0x318] sm:$0xff]
        %v481 = vld [vmem:[%s1 + $0x320] sm:$0xff]
        %v482 = vld [vmem:[%s1 + $0x328] sm:$0xff]
        %v483 = vld [vmem:[%s1 + $0x330] sm:$0xff]
        %v484 = vld [vmem:[%s1 + $0x338] sm:$0xff]
        %v485 = vld [vmem:[%s1 + $0x340] sm:$0xff]
        %v486 = vld [vmem:[%s1 + $0x348] sm:$0xff]
        %v487 = vld [vmem:[%s1 + $0x350] sm:$0xff]
        %v488 = vld [vmem:[%s1 + $0x358] sm:$0xff]
        %v489 = vld [vmem:[%s1 + $0x360] sm:$0xff]
        %v490 = vld [vmem:[%s1 + $0x368] sm:$0xff]
        %v491 = vld [vmem:[%s1 + $0x370] sm:$0xff]
        %v492 = vld [vmem:[%s1 + $0x378] sm:$0xff]
        %v493 = vld [vmem:[%s1 + $0x380] sm:$0xff]
        %v494 = vld [vmem:[%s1 + $0x388] sm:$0xff]
        %v495 = vld [vmem:[%s1 + $0x390] sm:$0xff]
        %v496 = vld [vmem:[%s1 + $0x398] sm:$0xff]
        %v497 = vld [vmem:[%s1 + $0x3a0] sm:$0xff]
        %v498 = vld [vmem:[%s1 + $0x3a8] sm:$0xff]
        %v499 = vld [vmem:[%s1 + $0x3b0] sm:$0xff]
        %v500 = vld [vmem:[%s1 + $0x3b8] sm:$0xff]
        %v501 = vld [vmem:[%s1 + $0x3c0] sm:$0xff]
        %v502 = vld [vmem:[%s1 + $0x3c8] sm:$0xff]
        %v503 = vld [vmem:[%s1 + $0x3d0] sm:$0xff]
        %v504 = vld [vmem:[%s1 + $0x3d8] sm:$0xff]
        %v505 = vld [vmem:[%s1 + $0x3e0] sm:$0xff]
        %v506 = vld [vmem:[%s1 + $0x3e8] sm:$0xff]
        %v507 = vld [vmem:[%s1 + $0x3f0] sm:$0xff]
        %v508 = vld [vmem:[%s1 + $0x3f8] sm:$0xff]
        %v509 = vld [vmem:[%s2] sm:$0xff]
        %v511 = vlaneseq
        %v512 = vshrl.u32 %v511, 7
        %v513 = vsub.s32 0, %v512
        %v514 = vrot.slane %v509, %v513
        %v515 = vlaneseq
        %v516 = vshrl.u32 %v515, 7
        %v517 = vsub.s32 1, %v516
        %v518 = vrot.slane %v509, %v517
        %v519 = vlaneseq
        %v520 = vshrl.u32 %v519, 7
        %v521 = vsub.s32 2, %v520
        %v522 = vrot.slane %v509, %v521
        %v523 = vlaneseq
        %v524 = vshrl.u32 %v523, 7
        %v525 = vsub.s32 3, %v524
        %v526 = vrot.slane %v509, %v525
        %v527 = vlaneseq
        %v528 = vshrl.u32 %v527, 7
        %v529 = vsub.s32 4, %v528
        %v530 = vrot.slane %v509, %v529
        %v531 = vlaneseq
        %v532 = vshrl.u32 %v531, 7
        %v533 = vsub.s32 5, %v532
        %v534 = vrot.slane %v509, %v533
        %v535 = vlaneseq
        %v536 = vshrl.u32 %v535, 7
        %v537 = vsub.s32 6, %v536
        %v538 = vrot.slane %v509, %v537
        %v539 = vlaneseq
        %v540 = vshrl.u32 %v539, 7
        %v541 = vsub.s32 7, %v540
        %v542 = vrot.slane %v509, %v541
        %v583 = vunpack.c.l.b16 %v349
        %v584 = vunpack.c.h.b16 %v349
        %v585 = vunpack.c.l.b16 %v350
        %v586 = vunpack.c.h.b16 %v350
        %v587 = vunpack.c.l.b16 %v351
        %v588 = vunpack.c.h.b16 %v351
        %v589 = vunpack.c.l.b16 %v352
        %v590 = vunpack.c.h.b16 %v352
        %v591 = vunpack.c.l.b16 %v353
        %v592 = vunpack.c.h.b16 %v353
        %v593 = vunpack.c.l.b16 %v354
        %v594 = vunpack.c.h.b16 %v354
        %v595 = vunpack.c.l.b16 %v355
        %v596 = vunpack.c.h.b16 %v355
        %v597 = vunpack.c.l.b16 %v356
        %v598 = vunpack.c.h.b16 %v356
        %v599 = vunpack.c.l.b16 %v357
        %v600 = vunpack.c.h.b16 %v357
        %v601 = vunpack.c.l.b16 %v358
        %v602 = vunpack.c.h.b16 %v358
        %v603 = vunpack.c.l.b16 %v359
        %v604 = vunpack.c.h.b16 %v359
        %v605 = vunpack.c.l.b16 %v360
        %v606 = vunpack.c.h.b16 %v360
        %v607 = vunpack.c.l.b16 %v361
        %v608 = vunpack.c.h.b16 %v361
        %v609 = vunpack.c.l.b16 %v362
        %v610 = vunpack.c.h.b16 %v362
        %v611 = vunpack.c.l.b16 %v363
        %v612 = vunpack.c.h.b16 %v363
        %v613 = vunpack.c.l.b16 %v364
        %v614 = vunpack.c.h.b16 %v364
        %v615 = vunpack.c.l.b16 %v365
        %v616 = vunpack.c.h.b16 %v365
        %v617 = vunpack.c.l.b16 %v366
        %v618 = vunpack.c.h.b16 %v366
        %v619 = vunpack.c.l.b16 %v367
        %v620 = vunpack.c.h.b16 %v367
        %v621 = vunpack.c.l.b16 %v368
        %v622 = vunpack.c.h.b16 %v368
        %v623 = vunpack.c.l.b16 %v369
        %v624 = vunpack.c.h.b16 %v369
        %v625 = vunpack.c.l.b16 %v370
        %v626 = vunpack.c.h.b16 %v370
        %v627 = vunpack.c.l.b16 %v371
        %v628 = vunpack.c.h.b16 %v371
        %v629 = vunpack.c.l.b16 %v372
        %v630 = vunpack.c.h.b16 %v372
        %v631 = vunpack.c.l.b16 %v373
        %v632 = vunpack.c.h.b16 %v373
        %v633 = vunpack.c.l.b16 %v374
        %v634 = vunpack.c.h.b16 %v374
        %v635 = vunpack.c.l.b16 %v375
        %v636 = vunpack.c.h.b16 %v375
        %v637 = vunpack.c.l.b16 %v376
        %v638 = vunpack.c.h.b16 %v376
        %v639 = vunpack.c.l.b16 %v377
        %v640 = vunpack.c.h.b16 %v377
        %v641 = vunpack.c.l.b16 %v378
        %v642 = vunpack.c.h.b16 %v378
        %v643 = vunpack.c.l.b16 %v379
        %v644 = vunpack.c.h.b16 %v379
        %v645 = vunpack.c.l.b16 %v380
        %v646 = vunpack.c.h.b16 %v380
        %v647 = vpack.c.b16 %v585, %v583
        %v648 = vpack.c.b16 %v586, %v584
        %v649 = vpack.c.b16 %v589, %v587
        %v650 = vpack.c.b16 %v590, %v588
        %v651 = vpack.c.b16 %v593, %v591
        %v652 = vpack.c.b16 %v594, %v592
        %v653 = vpack.c.b16 %v597, %v595
        %v654 = vpack.c.b16 %v598, %v596
        %v655 = vpack.c.b16 %v601, %v599
        %v656 = vpack.c.b16 %v602, %v600
        %v657 = vpack.c.b16 %v605, %v603
        %v658 = vpack.c.b16 %v606, %v604
        %v659 = vpack.c.b16 %v609, %v607
        %v660 = vpack.c.b16 %v610, %v608
        %v661 = vpack.c.b16 %v613, %v611
        %v662 = vpack.c.b16 %v614, %v612
        %v663 = vpack.c.b16 %v617, %v615
        %v664 = vpack.c.b16 %v618, %v616
        %v665 = vpack.c.b16 %v621, %v619
        %v666 = vpack.c.b16 %v622, %v620
        %v667 = vpack.c.b16 %v625, %v623
        %v668 = vpack.c.b16 %v626, %v624
        %v669 = vpack.c.b16 %v629, %v627
        %v670 = vpack.c.b16 %v630, %v628
        %v671 = vpack.c.b16 %v633, %v631
        %v672 = vpack.c.b16 %v634, %v632
        %v673 = vpack.c.b16 %v637, %v635
        %v674 = vpack.c.b16 %v638, %v636
        %v675 = vpack.c.b16 %v641, %v639
        %v676 = vpack.c.b16 %v642, %v640
        %v677 = vpack.c.b16 %v645, %v643
        %v678 = vpack.c.b16 %v646, %v644
        %v839 = vunpack.c.l.b16 %v381
        %v840 = vunpack.c.h.b16 %v381
        %v841 = vunpack.c.l.b16 %v382
        %v842 = vunpack.c.h.b16 %v382
        %v843 = vunpack.c.l.b16 %v383
        %v844 = vunpack.c.h.b16 %v383
        %v845 = vunpack.c.l.b16 %v384
        %v846 = vunpack.c.h.b16 %v384
        %v847 = vunpack.c.l.b16 %v385
        %v848 = vunpack.c.h.b16 %v385
        %v849 = vunpack.c.l.b16 %v386
        %v850 = vunpack.c.h.b16 %v386
        %v851 = vunpack.c.l.b16 %v387
        %v852 = vunpack.c.h.b16 %v387
        %v853 = vunpack.c.l.b16 %v388
        %v854 = vunpack.c.h.b16 %v388
        %v855 = vunpack.c.l.b16 %v389
        %v856 = vunpack.c.h.b16 %v389
        %v857 = vunpack.c.l.b16 %v390
        %v858 = vunpack.c.h.b16 %v390
        %v859 = vunpack.c.l.b16 %v391
        %v860 = vunpack.c.h.b16 %v391
        %v861 = vunpack.c.l.b16 %v392
        %v862 = vunpack.c.h.b16 %v392
        %v863 = vunpack.c.l.b16 %v393
        %v864 = vunpack.c.h.b16 %v393
        %v865 = vunpack.c.l.b16 %v394
        %v866 = vunpack.c.h.b16 %v394
        %v867 = vunpack.c.l.b16 %v395
        %v868 = vunpack.c.h.b16 %v395
        %v869 = vunpack.c.l.b16 %v396
        %v870 = vunpack.c.h.b16 %v396
        %v871 = vunpack.c.l.b16 %v397
        %v872 = vunpack.c.h.b16 %v397
        %v873 = vunpack.c.l.b16 %v398
        %v874 = vunpack.c.h.b16 %v398
        %v875 = vunpack.c.l.b16 %v399
        %v876 = vunpack.c.h.b16 %v399
        %v877 = vunpack.c.l.b16 %v400
        %v878 = vunpack.c.h.b16 %v400
        %v879 = vunpack.c.l.b16 %v401
        %v880 = vunpack.c.h.b16 %v401
        %v881 = vunpack.c.l.b16 %v402
        %v882 = vunpack.c.h.b16 %v402
        %v883 = vunpack.c.l.b16 %v403
        %v884 = vunpack.c.h.b16 %v403
        %v885 = vunpack.c.l.b16 %v404
        %v886 = vunpack.c.h.b16 %v404
        %v887 = vunpack.c.l.b16 %v405
        %v888 = vunpack.c.h.b16 %v405
        %v889 = vunpack.c.l.b16 %v406
        %v890 = vunpack.c.h.b16 %v406
        %v891 = vunpack.c.l.b16 %v407
        %v892 = vunpack.c.h.b16 %v407
        %v893 = vunpack.c.l.b16 %v408
        %v894 = vunpack.c.h.b16 %v408
        %v895 = vunpack.c.l.b16 %v409
        %v896 = vunpack.c.h.b16 %v409
        %v897 = vunpack.c.l.b16 %v410
        %v898 = vunpack.c.h.b16 %v410
        %v899 = vunpack.c.l.b16 %v411
        %v900 = vunpack.c.h.b16 %v411
        %v901 = vunpack.c.l.b16 %v412
        %v902 = vunpack.c.h.b16 %v412
        %v903 = vunpack.c.l.b16 %v413
        %v904 = vunpack.c.h.b16 %v413
        %v905 = vunpack.c.l.b16 %v414
        %v906 = vunpack.c.h.b16 %v414
        %v907 = vunpack.c.l.b16 %v415
        %v908 = vunpack.c.h.b16 %v415
        %v909 = vunpack.c.l.b16 %v416
        %v910 = vunpack.c.h.b16 %v416
        %v911 = vunpack.c.l.b16 %v417
        %v912 = vunpack.c.h.b16 %v417
        %v913 = vunpack.c.l.b16 %v418
        %v914 = vunpack.c.h.b16 %v418
        %v915 = vunpack.c.l.b16 %v419
        %v916 = vunpack.c.h.b16 %v419
        %v917 = vunpack.c.l.b16 %v420
        %v918 = vunpack.c.h.b16 %v420
        %v919 = vunpack.c.l.b16 %v421
        %v920 = vunpack.c.h.b16 %v421
        %v921 = vunpack.c.l.b16 %v422
        %v922 = vunpack.c.h.b16 %v422
        %v923 = vunpack.c.l.b16 %v423
        %v924 = vunpack.c.h.b16 %v423
        %v925 = vunpack.c.l.b16 %v424
        %v926 = vunpack.c.h.b16 %v424
        %v927 = vunpack.c.l.b16 %v425
        %v928 = vunpack.c.h.b16 %v425
        %v929 = vunpack.c.l.b16 %v426
        %v930 = vunpack.c.h.b16 %v426
        %v931 = vunpack.c.l.b16 %v427
        %v932 = vunpack.c.h.b16 %v427
        %v933 = vunpack.c.l.b16 %v428
        %v934 = vunpack.c.h.b16 %v428
        %v935 = vunpack.c.l.b16 %v429
        %v936 = vunpack.c.h.b16 %v429
        %v937 = vunpack.c.l.b16 %v430
        %v938 = vunpack.c.h.b16 %v430
        %v939 = vunpack.c.l.b16 %v431
        %v940 = vunpack.c.h.b16 %v431
        %v941 = vunpack.c.l.b16 %v432
        %v942 = vunpack.c.h.b16 %v432
        %v943 = vunpack.c.l.b16 %v433
        %v944 = vunpack.c.h.b16 %v433
        %v945 = vunpack.c.l.b16 %v434
        %v946 = vunpack.c.h.b16 %v434
        %v947 = vunpack.c.l.b16 %v435
        %v948 = vunpack.c.h.b16 %v435
        %v949 = vunpack.c.l.b16 %v436
        %v950 = vunpack.c.h.b16 %v436
        %v951 = vunpack.c.l.b16 %v437
        %v952 = vunpack.c.h.b16 %v437
        %v953 = vunpack.c.l.b16 %v438
        %v954 = vunpack.c.h.b16 %v438
        %v955 = vunpack.c.l.b16 %v439
        %v956 = vunpack.c.h.b16 %v439
        %v957 = vunpack.c.l.b16 %v440
        %v958 = vunpack.c.h.b16 %v440
        %v959 = vunpack.c.l.b16 %v441
        %v960 = vunpack.c.h.b16 %v441
        %v961 = vunpack.c.l.b16 %v442
        %v962 = vunpack.c.h.b16 %v442
        %v963 = vunpack.c.l.b16 %v443
        %v964 = vunpack.c.h.b16 %v443
        %v965 = vunpack.c.l.b16 %v444
        %v966 = vunpack.c.h.b16 %v444
        %v967 = vunpack.c.l.b16 %v445
        %v968 = vunpack.c.h.b16 %v445
        %v969 = vunpack.c.l.b16 %v446
        %v970 = vunpack.c.h.b16 %v446
        %v971 = vunpack.c.l.b16 %v447
        %v972 = vunpack.c.h.b16 %v447
        %v973 = vunpack.c.l.b16 %v448
        %v974 = vunpack.c.h.b16 %v448
        %v975 = vunpack.c.l.b16 %v449
        %v976 = vunpack.c.h.b16 %v449
        %v977 = vunpack.c.l.b16 %v450
        %v978 = vunpack.c.h.b16 %v450
        %v979 = vunpack.c.l.b16 %v451
        %v980 = vunpack.c.h.b16 %v451
        %v981 = vunpack.c.l.b16 %v452
        %v982 = vunpack.c.h.b16 %v452
        %v983 = vunpack.c.l.b16 %v453
        %v984 = vunpack.c.h.b16 %v453
        %v985 = vunpack.c.l.b16 %v454
        %v986 = vunpack.c.h.b16 %v454
        %v987 = vunpack.c.l.b16 %v455
        %v988 = vunpack.c.h.b16 %v455
        %v989 = vunpack.c.l.b16 %v456
        %v990 = vunpack.c.h.b16 %v456
        %v991 = vunpack.c.l.b16 %v457
        %v992 = vunpack.c.h.b16 %v457
        %v993 = vunpack.c.l.b16 %v458
        %v994 = vunpack.c.h.b16 %v458
        %v995 = vunpack.c.l.b16 %v459
        %v996 = vunpack.c.h.b16 %v459
        %v997 = vunpack.c.l.b16 %v460
        %v998 = vunpack.c.h.b16 %v460
        %v999 = vunpack.c.l.b16 %v461
        %v1000 = vunpack.c.h.b16 %v461
        %v1001 = vunpack.c.l.b16 %v462
        %v1002 = vunpack.c.h.b16 %v462
        %v1003 = vunpack.c.l.b16 %v463
        %v1004 = vunpack.c.h.b16 %v463
        %v1005 = vunpack.c.l.b16 %v464
        %v1006 = vunpack.c.h.b16 %v464
        %v1007 = vunpack.c.l.b16 %v465
        %v1008 = vunpack.c.h.b16 %v465
        %v1009 = vunpack.c.l.b16 %v466
        %v1010 = vunpack.c.h.b16 %v466
        %v1011 = vunpack.c.l.b16 %v467
        %v1012 = vunpack.c.h.b16 %v467
        %v1013 = vunpack.c.l.b16 %v468
        %v1014 = vunpack.c.h.b16 %v468
        %v1015 = vunpack.c.l.b16 %v469
        %v1016 = vunpack.c.h.b16 %v469
        %v1017 = vunpack.c.l.b16 %v470
        %v1018 = vunpack.c.h.b16 %v470
        %v1019 = vunpack.c.l.b16 %v471
        %v1020 = vunpack.c.h.b16 %v471
        %v1021 = vunpack.c.l.b16 %v472
        %v1022 = vunpack.c.h.b16 %v472
        %v1023 = vunpack.c.l.b16 %v473
        %v1024 = vunpack.c.h.b16 %v473
        %v1025 = vunpack.c.l.b16 %v474
        %v1026 = vunpack.c.h.b16 %v474
        %v1027 = vunpack.c.l.b16 %v475
        %v1028 = vunpack.c.h.b16 %v475
        %v1029 = vunpack.c.l.b16 %v476
        %v1030 = vunpack.c.h.b16 %v476
        %v1031 = vunpack.c.l.b16 %v477
        %v1032 = vunpack.c.h.b16 %v477
        %v1033 = vunpack.c.l.b16 %v478
        %v1034 = vunpack.c.h.b16 %v478
        %v1035 = vunpack.c.l.b16 %v479
        %v1036 = vunpack.c.h.b16 %v479
        %v1037 = vunpack.c.l.b16 %v480
        %v1038 = vunpack.c.h.b16 %v480
        %v1039 = vunpack.c.l.b16 %v481
        %v1040 = vunpack.c.h.b16 %v481
        %v1041 = vunpack.c.l.b16 %v482
        %v1042 = vunpack.c.h.b16 %v482
        %v1043 = vunpack.c.l.b16 %v483
        %v1044 = vunpack.c.h.b16 %v483
        %v1045 = vunpack.c.l.b16 %v484
        %v1046 = vunpack.c.h.b16 %v484
        %v1047 = vunpack.c.l.b16 %v485
        %v1048 = vunpack.c.h.b16 %v485
        %v1049 = vunpack.c.l.b16 %v486
        %v1050 = vunpack.c.h.b16 %v486
        %v1051 = vunpack.c.l.b16 %v487
        %v1052 = vunpack.c.h.b16 %v487
        %v1053 = vunpack.c.l.b16 %v488
        %v1054 = vunpack.c.h.b16 %v488
        %v1055 = vunpack.c.l.b16 %v489
        %v1056 = vunpack.c.h.b16 %v489
        %v1057 = vunpack.c.l.b16 %v490
        %v1058 = vunpack.c.h.b16 %v490
        %v1059 = vunpack.c.l.b16 %v491
        %v1060 = vunpack.c.h.b16 %v491
        %v1061 = vunpack.c.l.b16 %v492
        %v1062 = vunpack.c.h.b16 %v492
        %v1063 = vunpack.c.l.b16 %v493
        %v1064 = vunpack.c.h.b16 %v493
        %v1065 = vunpack.c.l.b16 %v494
        %v1066 = vunpack.c.h.b16 %v494
        %v1067 = vunpack.c.l.b16 %v495
        %v1068 = vunpack.c.h.b16 %v495
        %v1069 = vunpack.c.l.b16 %v496
        %v1070 = vunpack.c.h.b16 %v496
        %v1071 = vunpack.c.l.b16 %v497
        %v1072 = vunpack.c.h.b16 %v497
        %v1073 = vunpack.c.l.b16 %v498
        %v1074 = vunpack.c.h.b16 %v498
        %v1075 = vunpack.c.l.b16 %v499
        %v1076 = vunpack.c.h.b16 %v499
        %v1077 = vunpack.c.l.b16 %v500
        %v1078 = vunpack.c.h.b16 %v500
        %v1079 = vunpack.c.l.b16 %v501
        %v1080 = vunpack.c.h.b16 %v501
        %v1081 = vunpack.c.l.b16 %v502
        %v1082 = vunpack.c.h.b16 %v502
        %v1083 = vunpack.c.l.b16 %v503
        %v1084 = vunpack.c.h.b16 %v503
        %v1085 = vunpack.c.l.b16 %v504
        %v1086 = vunpack.c.h.b16 %v504
        %v1087 = vunpack.c.l.b16 %v505
        %v1088 = vunpack.c.h.b16 %v505
        %v1089 = vunpack.c.l.b16 %v506
        %v1090 = vunpack.c.h.b16 %v506
        %v1091 = vunpack.c.l.b16 %v507
        %v1092 = vunpack.c.h.b16 %v507
        %v1093 = vunpack.c.l.b16 %v508
        %v1094 = vunpack.c.h.b16 %v508
        %v1095 = vpack.c.b16 %v847, %v839
        %v1096 = vpack.c.b16 %v848, %v840
        %v1097 = vpack.c.b16 %v849, %v841
        %v1098 = vpack.c.b16 %v850, %v842
        %v1099 = vpack.c.b16 %v851, %v843
        %v1100 = vpack.c.b16 %v852, %v844
        %v1101 = vpack.c.b16 %v853, %v845
        %v1102 = vpack.c.b16 %v854, %v846
        %v1103 = vpack.c.b16 %v863, %v855
        %v1104 = vpack.c.b16 %v864, %v856
        %v1105 = vpack.c.b16 %v865, %v857
        %v1106 = vpack.c.b16 %v866, %v858
        %v1107 = vpack.c.b16 %v867, %v859
        %v1108 = vpack.c.b16 %v868, %v860
        %v1109 = vpack.c.b16 %v869, %v861
        %v1110 = vpack.c.b16 %v870, %v862
        %v1111 = vpack.c.b16 %v879, %v871
        %v1112 = vpack.c.b16 %v880, %v872
        %v1113 = vpack.c.b16 %v881, %v873
        %v1114 = vpack.c.b16 %v882, %v874
        %v1115 = vpack.c.b16 %v883, %v875
        %v1116 = vpack.c.b16 %v884, %v876
        %v1117 = vpack.c.b16 %v885, %v877
        %v1118 = vpack.c.b16 %v886, %v878
        %v1119 = vpack.c.b16 %v895, %v887
        %v1120 = vpack.c.b16 %v896, %v888
        %v1121 = vpack.c.b16 %v897, %v889
        %v1122 = vpack.c.b16 %v898, %v890
        %v1123 = vpack.c.b16 %v899, %v891
        %v1124 = vpack.c.b16 %v900, %v892
        %v1125 = vpack.c.b16 %v901, %v893
        %v1126 = vpack.c.b16 %v902, %v894
        %v1127 = vpack.c.b16 %v911, %v903
        %v1128 = vpack.c.b16 %v912, %v904
        %v1129 = vpack.c.b16 %v913, %v905
        %v1130 = vpack.c.b16 %v914, %v906
        %v1131 = vpack.c.b16 %v915, %v907
        %v1132 = vpack.c.b16 %v916, %v908
        %v1133 = vpack.c.b16 %v917, %v909
        %v1134 = vpack.c.b16 %v918, %v910
        %v1135 = vpack.c.b16 %v927, %v919
        %v1136 = vpack.c.b16 %v928, %v920
        %v1137 = vpack.c.b16 %v929, %v921
        %v1138 = vpack.c.b16 %v930, %v922
        %v1139 = vpack.c.b16 %v931, %v923
        %v1140 = vpack.c.b16 %v932, %v924
        %v1141 = vpack.c.b16 %v933, %v925
        %v1142 = vpack.c.b16 %v934, %v926
        %v1143 = vpack.c.b16 %v943, %v935
        %v1144 = vpack.c.b16 %v944, %v936
        %v1145 = vpack.c.b16 %v945, %v937
        %v1146 = vpack.c.b16 %v946, %v938
        %v1147 = vpack.c.b16 %v947, %v939
        %v1148 = vpack.c.b16 %v948, %v940
        %v1149 = vpack.c.b16 %v949, %v941
        %v1150 = vpack.c.b16 %v950, %v942
        %v1151 = vpack.c.b16 %v959, %v951
        %v1152 = vpack.c.b16 %v960, %v952
        %v1153 = vpack.c.b16 %v961, %v953
        %v1154 = vpack.c.b16 %v962, %v954
        %v1155 = vpack.c.b16 %v963, %v955
        %v1156 = vpack.c.b16 %v964, %v956
        %v1157 = vpack.c.b16 %v965, %v957
        %v1158 = vpack.c.b16 %v966, %v958
        %v1159 = vpack.c.b16 %v975, %v967
        %v1160 = vpack.c.b16 %v976, %v968
        %v1161 = vpack.c.b16 %v977, %v969
        %v1162 = vpack.c.b16 %v978, %v970
        %v1163 = vpack.c.b16 %v979, %v971
        %v1164 = vpack.c.b16 %v980, %v972
        %v1165 = vpack.c.b16 %v981, %v973
        %v1166 = vpack.c.b16 %v982, %v974
        %v1167 = vpack.c.b16 %v991, %v983
        %v1168 = vpack.c.b16 %v992, %v984
        %v1169 = vpack.c.b16 %v993, %v985
        %v1170 = vpack.c.b16 %v994, %v986
        %v1171 = vpack.c.b16 %v995, %v987
        %v1172 = vpack.c.b16 %v996, %v988
        %v1173 = vpack.c.b16 %v997, %v989
        %v1174 = vpack.c.b16 %v998, %v990
        %v1175 = vpack.c.b16 %v1007, %v999
        %v1176 = vpack.c.b16 %v1008, %v1000
        %v1177 = vpack.c.b16 %v1009, %v1001
        %v1178 = vpack.c.b16 %v1010, %v1002
        %v1179 = vpack.c.b16 %v1011, %v1003
        %v1180 = vpack.c.b16 %v1012, %v1004
        %v1181 = vpack.c.b16 %v1013, %v1005
        %v1182 = vpack.c.b16 %v1014, %v1006
        %v1183 = vpack.c.b16 %v1023, %v1015
        %v1184 = vpack.c.b16 %v1024, %v1016
        %v1185 = vpack.c.b16 %v1025, %v1017
        %v1186 = vpack.c.b16 %v1026, %v1018
        %v1187 = vpack.c.b16 %v1027, %v1019
        %v1188 = vpack.c.b16 %v1028, %v1020
        %v1189 = vpack.c.b16 %v1029, %v1021
        %v1190 = vpack.c.b16 %v1030, %v1022
        %v1191 = vpack.c.b16 %v1039, %v1031
        %v1192 = vpack.c.b16 %v1040, %v1032
        %v1193 = vpack.c.b16 %v1041, %v1033
        %v1194 = vpack.c.b16 %v1042, %v1034
        %v1195 = vpack.c.b16 %v1043, %v1035
        %v1196 = vpack.c.b16 %v1044, %v1036
        %v1197 = vpack.c.b16 %v1045, %v1037
        %v1198 = vpack.c.b16 %v1046, %v1038
        %v1199 = vpack.c.b16 %v1055, %v1047
        %v1200 = vpack.c.b16 %v1056, %v1048
        %v1201 = vpack.c.b16 %v1057, %v1049
        %v1202 = vpack.c.b16 %v1058, %v1050
        %v1203 = vpack.c.b16 %v1059, %v1051
        %v1204 = vpack.c.b16 %v1060, %v1052
        %v1205 = vpack.c.b16 %v1061, %v1053
        %v1206 = vpack.c.b16 %v1062, %v1054
        %v1207 = vpack.c.b16 %v1071, %v1063
        %v1208 = vpack.c.b16 %v1072, %v1064
        %v1209 = vpack.c.b16 %v1073, %v1065
        %v1210 = vpack.c.b16 %v1074, %v1066
        %v1211 = vpack.c.b16 %v1075, %v1067
        %v1212 = vpack.c.b16 %v1076, %v1068
        %v1213 = vpack.c.b16 %v1077, %v1069
        %v1214 = vpack.c.b16 %v1078, %v1070
        %v1215 = vpack.c.b16 %v1087, %v1079
        %v1216 = vpack.c.b16 %v1088, %v1080
        %v1217 = vpack.c.b16 %v1089, %v1081
        %v1218 = vpack.c.b16 %v1090, %v1082
        %v1219 = vpack.c.b16 %v1091, %v1083
        %v1220 = vpack.c.b16 %v1092, %v1084
        %v1221 = vpack.c.b16 %v1093, %v1085
        %v1222 = vpack.c.b16 %v1094, %v1086
        %1351 = vmatprep.subr.bf16.mxu0 %v1152
        %1352 = vmatpush1.bf16.msra.mxu0 %v1151
        %1353 = vmatprep.subr.bf16.mxu0 %v1144
        %1354 = vmatpush1.bf16.msra.mxu0 %v1143
        %1355 = vmatprep.subr.bf16.mxu0 %v1136
        %1356 = vmatpush1.bf16.msra.mxu0 %v1135
        %1357 = vmatprep.subr.bf16.mxu0 %v1128
        %1358 = vmatpush1.bf16.msra.mxu0 %v1127
        %1359 = vmatprep.subr.bf16.mxu0 %v1120
        %1360 = vmatpush1.bf16.msra.mxu0 %v1119
        %1361 = vmatprep.subr.bf16.mxu0 %v1112
        %1362 = vmatpush1.bf16.msra.mxu0 %v1111
        %1363 = vmatprep.subr.bf16.mxu0 %v1104
        %1364 = vmatpush1.bf16.msra.mxu0 %v1103
        %1365 = vmatprep.subr.bf16.mxu0 %v1096
        %1366 = vmatpush1.bf16.msra.mxu0 %v1095
        %1367 = vmatprep.subr.bf16.mxu0 %v1216
        %1368 = vmatpush2.bf16.msra.mxu0 %v1215
        %1369 = vmatprep.subr.bf16.mxu0 %v1208
        %1370 = vmatpush2.bf16.msra.mxu0 %v1207
        %1371 = vmatprep.subr.bf16.mxu0 %v1200
        %1372 = vmatpush2.bf16.msra.mxu0 %v1199
        %1373 = vmatprep.subr.bf16.mxu0 %v1192
        %1374 = vmatpush2.bf16.msra.mxu0 %v1191
        %1375 = vmatprep.subr.bf16.mxu0 %v1184
        %1376 = vmatpush2.bf16.msra.mxu0 %v1183
        %1377 = vmatprep.subr.bf16.mxu0 %v1176
        %1378 = vmatpush2.bf16.msra.mxu0 %v1175
        %1379 = vmatprep.subr.bf16.mxu0 %v1168
        %1380 = vmatpush2.bf16.msra.mxu0 %v1167
        %1381 = vmatprep.subr.bf16.mxu0 %v1160
        %1382 = vmatpush2.bf16.msra.mxu0 %v1159
        %1383 = vmatprep.mubr.bf16.mxu0 %v648
        %1384 = vmatmul.mubr.bf16.gmra.mxu0 %v647
        %v1385 = vpop.f32.mrf.mxu0
        %v1386 = vadd.f32 %v514, %v1385
        %v1387 = vpop.f32.mrf.mxu0
        %v1388 = vadd.f32 %v518, %v1387
        %v1389 = vpop.f32.mrf.mxu0
        %v1390 = vadd.f32 %v514, %v1389
        %v1391 = vpop.f32.mrf.mxu0
        %v1392 = vadd.f32 %v518, %v1391
        %1393 = vmatprep.mubr.bf16.mxu0 %v650
        %1394 = vmatmul.mubr.bf16.gmra.mxu0 %v649
        %v1395 = vpop.f32.mrf.mxu0
        %v1396 = vadd.f32 %v514, %v1395
        %v1397 = vpop.f32.mrf.mxu0
        %v1398 = vadd.f32 %v518, %v1397
        %v1399 = vpop.f32.mrf.mxu0
        %v1400 = vadd.f32 %v514, %v1399
        %v1401 = vpop.f32.mrf.mxu0
        %v1402 = vadd.f32 %v518, %v1401
        %1403 = vmatprep.mubr.bf16.mxu0 %v652
        %1404 = vmatmul.mubr.bf16.gmra.mxu0 %v651
        %v1405 = vpop.f32.mrf.mxu0
        %v1406 = vadd.f32 %v514, %v1405
        %v1407 = vpop.f32.mrf.mxu0
        %v1408 = vadd.f32 %v518, %v1407
        %v1409 = vpop.f32.mrf.mxu0
        %v1410 = vadd.f32 %v514, %v1409
        %v1411 = vpop.f32.mrf.mxu0
        %v1412 = vadd.f32 %v518, %v1411
        %1413 = vmatprep.mubr.bf16.mxu0 %v654
        %1414 = vmatmul.mubr.bf16.gmra.mxu0 %v653
        %v1415 = vpop.f32.mrf.mxu0
        %v1416 = vadd.f32 %v514, %v1415
        %v1417 = vpop.f32.mrf.mxu0
        %v1418 = vadd.f32 %v518, %v1417
        %v1419 = vpop.f32.mrf.mxu0
        %v1420 = vadd.f32 %v514, %v1419
        %v1421 = vpop.f32.mrf.mxu0
        %v1422 = vadd.f32 %v518, %v1421
        %1423 = vmatprep.mubr.bf16.mxu0 %v656
        %1424 = vmatmul.mubr.bf16.gmra.mxu0 %v655
        %v1425 = vpop.f32.mrf.mxu0
        %v1426 = vadd.f32 %v514, %v1425
        %v1427 = vpop.f32.mrf.mxu0
        %v1428 = vadd.f32 %v518, %v1427
        %v1429 = vpop.f32.mrf.mxu0
        %v1430 = vadd.f32 %v514, %v1429
        %v1431 = vpop.f32.mrf.mxu0
        %v1432 = vadd.f32 %v518, %v1431
        %1433 = vmatprep.mubr.bf16.mxu0 %v658
        %1434 = vmatmul.mubr.bf16.gmra.mxu0 %v657
        %v1435 = vpop.f32.mrf.mxu0
        %v1436 = vadd.f32 %v514, %v1435
        %v1437 = vpop.f32.mrf.mxu0
        %v1438 = vadd.f32 %v518, %v1437
        %v1439 = vpop.f32.mrf.mxu0
        %v1440 = vadd.f32 %v514, %v1439
        %v1441 = vpop.f32.mrf.mxu0
        %v1442 = vadd.f32 %v518, %v1441
        %1443 = vmatprep.mubr.bf16.mxu0 %v660
        %1444 = vmatmul.mubr.bf16.gmra.mxu0 %v659
        %v1445 = vpop.f32.mrf.mxu0
        %v1446 = vadd.f32 %v514, %v1445
        %v1447 = vpop.f32.mrf.mxu0
        %v1448 = vadd.f32 %v518, %v1447
        %v1449 = vpop.f32.mrf.mxu0
        %v1450 = vadd.f32 %v514, %v1449
        %v1451 = vpop.f32.mrf.mxu0
        %v1452 = vadd.f32 %v518, %v1451
        %1453 = vmatprep.mubr.bf16.mxu0 %v662
        %1454 = vmatmul.mubr.bf16.gmra.mxu0 %v661
        %v1455 = vpop.f32.mrf.mxu0
        %v1456 = vadd.f32 %v514, %v1455
        %v1457 = vpop.f32.mrf.mxu0
        %v1458 = vadd.f32 %v518, %v1457
        %v1459 = vpop.f32.mrf.mxu0
        %v1460 = vadd.f32 %v514, %v1459
        %v1461 = vpop.f32.mrf.mxu0
        %v1462 = vadd.f32 %v518, %v1461
        %1463 = vmatprep.mubr.bf16.mxu0 %v664
        %1464 = vmatmul.mubr.bf16.gmra.mxu0 %v663
        %v1465 = vpop.f32.mrf.mxu0
        %v1466 = vadd.f32 %v514, %v1465
        %v1467 = vpop.f32.mrf.mxu0
        %v1468 = vadd.f32 %v518, %v1467
        %v1469 = vpop.f32.mrf.mxu0
        %v1470 = vadd.f32 %v514, %v1469
        %v1471 = vpop.f32.mrf.mxu0
        %v1472 = vadd.f32 %v518, %v1471
        %1473 = vmatprep.mubr.bf16.mxu0 %v666
        %1474 = vmatmul.mubr.bf16.gmra.mxu0 %v665
        %v1475 = vpop.f32.mrf.mxu0
        %v1476 = vadd.f32 %v514, %v1475
        %v1477 = vpop.f32.mrf.mxu0
        %v1478 = vadd.f32 %v518, %v1477
        %v1479 = vpop.f32.mrf.mxu0
        %v1480 = vadd.f32 %v514, %v1479
        %v1481 = vpop.f32.mrf.mxu0
        %v1482 = vadd.f32 %v518, %v1481
        %1483 = vmatprep.mubr.bf16.mxu0 %v668
        %1484 = vmatmul.mubr.bf16.gmra.mxu0 %v667
        %v1485 = vpop.f32.mrf.mxu0
        %v1486 = vadd.f32 %v514, %v1485
        %v1487 = vpop.f32.mrf.mxu0
        %v1488 = vadd.f32 %v518, %v1487
        %v1489 = vpop.f32.mrf.mxu0
        %v1490 = vadd.f32 %v514, %v1489
        %v1491 = vpop.f32.mrf.mxu0
        %v1492 = vadd.f32 %v518, %v1491
        %1493 = vmatprep.mubr.bf16.mxu0 %v670
        %1494 = vmatmul.mubr.bf16.gmra.mxu0 %v669
        %v1495 = vpop.f32.mrf.mxu0
        %v1496 = vadd.f32 %v514, %v1495
        %v1497 = vpop.f32.mrf.mxu0
        %v1498 = vadd.f32 %v518, %v1497
        %v1499 = vpop.f32.mrf.mxu0
        %v1500 = vadd.f32 %v514, %v1499
        %v1501 = vpop.f32.mrf.mxu0
        %v1502 = vadd.f32 %v518, %v1501
        %1503 = vmatprep.mubr.bf16.mxu0 %v672
        %1504 = vmatmul.mubr.bf16.gmra.mxu0 %v671
        %v1505 = vpop.f32.mrf.mxu0
        %v1506 = vadd.f32 %v514, %v1505
        %v1507 = vpop.f32.mrf.mxu0
        %v1508 = vadd.f32 %v518, %v1507
        %v1509 = vpop.f32.mrf.mxu0
        %v1510 = vadd.f32 %v514, %v1509
        %v1511 = vpop.f32.mrf.mxu0
        %v1512 = vadd.f32 %v518, %v1511
        %1513 = vmatprep.mubr.bf16.mxu0 %v674
        %1514 = vmatmul.mubr.bf16.gmra.mxu0 %v673
        %v1515 = vpop.f32.mrf.mxu0
        %v1516 = vadd.f32 %v514, %v1515
        %v1517 = vpop.f32.mrf.mxu0
        %v1518 = vadd.f32 %v518, %v1517
        %v1519 = vpop.f32.mrf.mxu0
        %v1520 = vadd.f32 %v514, %v1519
        %v1521 = vpop.f32.mrf.mxu0
        %v1522 = vadd.f32 %v518, %v1521
        %1523 = vmatprep.mubr.bf16.mxu0 %v676
        %1524 = vmatmul.mubr.bf16.gmra.mxu0 %v675
        %v1525 = vpop.f32.mrf.mxu0
        %v1526 = vadd.f32 %v514, %v1525
        %v1527 = vpop.f32.mrf.mxu0
        %v1528 = vadd.f32 %v518, %v1527
        %v1529 = vpop.f32.mrf.mxu0
        %v1530 = vadd.f32 %v514, %v1529
        %v1531 = vpop.f32.mrf.mxu0
        %v1532 = vadd.f32 %v518, %v1531
        %1533 = vmatprep.mubr.bf16.mxu0 %v678
        %1534 = vmatmul.mubr.bf16.gmra.mxu0 %v677
        %v1535 = vpop.f32.mrf.mxu0
        %v1536 = vadd.f32 %v514, %v1535
        %v1537 = vpop.f32.mrf.mxu0
        %v1538 = vadd.f32 %v518, %v1537
        %v1539 = vpop.f32.mrf.mxu0
        %v1540 = vadd.f32 %v514, %v1539
        %v1541 = vpop.f32.mrf.mxu0
        %v1542 = vadd.f32 %v518, %v1541
        %1543 = vdwg.mxu0
        %1544 = vmatprep.subr.bf16.mxu0 %v1154
        %1545 = vmatpush1.bf16.msra.mxu0 %v1153
        %1546 = vmatprep.subr.bf16.mxu0 %v1146
        %1547 = vmatpush1.bf16.msra.mxu0 %v1145
        %1548 = vmatprep.subr.bf16.mxu0 %v1138
        %1549 = vmatpush1.bf16.msra.mxu0 %v1137
        %1550 = vmatprep.subr.bf16.mxu0 %v1130
        %1551 = vmatpush1.bf16.msra.mxu0 %v1129
        %1552 = vmatprep.subr.bf16.mxu0 %v1122
        %1553 = vmatpush1.bf16.msra.mxu0 %v1121
        %1554 = vmatprep.subr.bf16.mxu0 %v1114
        %1555 = vmatpush1.bf16.msra.mxu0 %v1113
        %1556 = vmatprep.subr.bf16.mxu0 %v1106
        %1557 = vmatpush1.bf16.msra.mxu0 %v1105
        %1558 = vmatprep.subr.bf16.mxu0 %v1098
        %1559 = vmatpush1.bf16.msra.mxu0 %v1097
        %1560 = vmatprep.subr.bf16.mxu0 %v1218
        %1561 = vmatpush2.bf16.msra.mxu0 %v1217
        %1562 = vmatprep.subr.bf16.mxu0 %v1210
        %1563 = vmatpush2.bf16.msra.mxu0 %v1209
        %1564 = vmatprep.subr.bf16.mxu0 %v1202
        %1565 = vmatpush2.bf16.msra.mxu0 %v1201
        %1566 = vmatprep.subr.bf16.mxu0 %v1194
        %1567 = vmatpush2.bf16.msra.mxu0 %v1193
        %1568 = vmatprep.subr.bf16.mxu0 %v1186
        %1569 = vmatpush2.bf16.msra.mxu0 %v1185
        %1570 = vmatprep.subr.bf16.mxu0 %v1178
        %1571 = vmatpush2.bf16.msra.mxu0 %v1177
        %1572 = vmatprep.subr.bf16.mxu0 %v1170
        %1573 = vmatpush2.bf16.msra.mxu0 %v1169
        %1574 = vmatprep.subr.bf16.mxu0 %v1162
        %1575 = vmatpush2.bf16.msra.mxu0 %v1161
        %1576 = vmatprep.mubr.bf16.mxu0 %v648
        %1577 = vmatmul.mubr.bf16.gmra.mxu0 %v647
        %v1578 = vpop.f32.mrf.mxu0
        %v1579 = vadd.f32 %v522, %v1578
        %v1580 = vpop.f32.mrf.mxu0
        %v1581 = vadd.f32 %v526, %v1580
        %v1582 = vpop.f32.mrf.mxu0
        %v1583 = vadd.f32 %v522, %v1582
        %v1584 = vpop.f32.mrf.mxu0
        %v1585 = vadd.f32 %v526, %v1584
        %1586 = vmatprep.mubr.bf16.mxu0 %v650
        %1587 = vmatmul.mubr.bf16.gmra.mxu0 %v649
        %v1588 = vpop.f32.mrf.mxu0
        %v1589 = vadd.f32 %v522, %v1588
        %v1590 = vpop.f32.mrf.mxu0
        %v1591 = vadd.f32 %v526, %v1590
        %v1592 = vpop.f32.mrf.mxu0
        %v1593 = vadd.f32 %v522, %v1592
        %v1594 = vpop.f32.mrf.mxu0
        %v1595 = vadd.f32 %v526, %v1594
        %1596 = vmatprep.mubr.bf16.mxu0 %v652
        %1597 = vmatmul.mubr.bf16.gmra.mxu0 %v651
        %v1598 = vpop.f32.mrf.mxu0
        %v1599 = vadd.f32 %v522, %v1598
        %v1600 = vpop.f32.mrf.mxu0
        %v1601 = vadd.f32 %v526, %v1600
        %v1602 = vpop.f32.mrf.mxu0
        %v1603 = vadd.f32 %v522, %v1602
        %v1604 = vpop.f32.mrf.mxu0
        %v1605 = vadd.f32 %v526, %v1604
        %1606 = vmatprep.mubr.bf16.mxu0 %v654
        %1607 = vmatmul.mubr.bf16.gmra.mxu0 %v653
        %v1608 = vpop.f32.mrf.mxu0
        %v1609 = vadd.f32 %v522, %v1608
        %v1610 = vpop.f32.mrf.mxu0
        %v1611 = vadd.f32 %v526, %v1610
        %v1612 = vpop.f32.mrf.mxu0
        %v1613 = vadd.f32 %v522, %v1612
        %v1614 = vpop.f32.mrf.mxu0
        %v1615 = vadd.f32 %v526, %v1614
        %1616 = vmatprep.mubr.bf16.mxu0 %v656
        %1617 = vmatmul.mubr.bf16.gmra.mxu0 %v655
        %v1618 = vpop.f32.mrf.mxu0
        %v1619 = vadd.f32 %v522, %v1618
        %v1620 = vpop.f32.mrf.mxu0
        %v1621 = vadd.f32 %v526, %v1620
        %v1622 = vpop.f32.mrf.mxu0
        %v1623 = vadd.f32 %v522, %v1622
        %v1624 = vpop.f32.mrf.mxu0
        %v1625 = vadd.f32 %v526, %v1624
        %1626 = vmatprep.mubr.bf16.mxu0 %v658
        %1627 = vmatmul.mubr.bf16.gmra.mxu0 %v657
        %v1628 = vpop.f32.mrf.mxu0
        %v1629 = vadd.f32 %v522, %v1628
        %v1630 = vpop.f32.mrf.mxu0
        %v1631 = vadd.f32 %v526, %v1630
        %v1632 = vpop.f32.mrf.mxu0
        %v1633 = vadd.f32 %v522, %v1632
        %v1634 = vpop.f32.mrf.mxu0
        %v1635 = vadd.f32 %v526, %v1634
        %1636 = vmatprep.mubr.bf16.mxu0 %v660
        %1637 = vmatmul.mubr.bf16.gmra.mxu0 %v659
        %v1638 = vpop.f32.mrf.mxu0
        %v1639 = vadd.f32 %v522, %v1638
        %v1640 = vpop.f32.mrf.mxu0
        %v1641 = vadd.f32 %v526, %v1640
        %v1642 = vpop.f32.mrf.mxu0
        %v1643 = vadd.f32 %v522, %v1642
        %v1644 = vpop.f32.mrf.mxu0
        %v1645 = vadd.f32 %v526, %v1644
        %1646 = vmatprep.mubr.bf16.mxu0 %v662
        %1647 = vmatmul.mubr.bf16.gmra.mxu0 %v661
        %v1648 = vpop.f32.mrf.mxu0
        %v1649 = vadd.f32 %v522, %v1648
        %v1650 = vpop.f32.mrf.mxu0
        %v1651 = vadd.f32 %v526, %v1650
        %v1652 = vpop.f32.mrf.mxu0
        %v1653 = vadd.f32 %v522, %v1652
        %v1654 = vpop.f32.mrf.mxu0
        %v1655 = vadd.f32 %v526, %v1654
        %1656 = vmatprep.mubr.bf16.mxu0 %v664
        %1657 = vmatmul.mubr.bf16.gmra.mxu0 %v663
        %v1658 = vpop.f32.mrf.mxu0
        %v1659 = vadd.f32 %v522, %v1658
        %v1660 = vpop.f32.mrf.mxu0
        %v1661 = vadd.f32 %v526, %v1660
        %v1662 = vpop.f32.mrf.mxu0
        %v1663 = vadd.f32 %v522, %v1662
        %v1664 = vpop.f32.mrf.mxu0
        %v1665 = vadd.f32 %v526, %v1664
        %1666 = vmatprep.mubr.bf16.mxu0 %v666
        %1667 = vmatmul.mubr.bf16.gmra.mxu0 %v665
        %v1668 = vpop.f32.mrf.mxu0
        %v1669 = vadd.f32 %v522, %v1668
        %v1670 = vpop.f32.mrf.mxu0
        %v1671 = vadd.f32 %v526, %v1670
        %v1672 = vpop.f32.mrf.mxu0
        %v1673 = vadd.f32 %v522, %v1672
        %v1674 = vpop.f32.mrf.mxu0
        %v1675 = vadd.f32 %v526, %v1674
        %1676 = vmatprep.mubr.bf16.mxu0 %v668
        %1677 = vmatmul.mubr.bf16.gmra.mxu0 %v667
        %v1678 = vpop.f32.mrf.mxu0
        %v1679 = vadd.f32 %v522, %v1678
        %v1680 = vpop.f32.mrf.mxu0
        %v1681 = vadd.f32 %v526, %v1680
        %v1682 = vpop.f32.mrf.mxu0
        %v1683 = vadd.f32 %v522, %v1682
        %v1684 = vpop.f32.mrf.mxu0
        %v1685 = vadd.f32 %v526, %v1684
        %1686 = vmatprep.mubr.bf16.mxu0 %v670
        %1687 = vmatmul.mubr.bf16.gmra.mxu0 %v669
        %v1688 = vpop.f32.mrf.mxu0
        %v1689 = vadd.f32 %v522, %v1688
        %v1690 = vpop.f32.mrf.mxu0
        %v1691 = vadd.f32 %v526, %v1690
        %v1692 = vpop.f32.mrf.mxu0
        %v1693 = vadd.f32 %v522, %v1692
        %v1694 = vpop.f32.mrf.mxu0
        %v1695 = vadd.f32 %v526, %v1694
        %1696 = vmatprep.mubr.bf16.mxu0 %v672
        %1697 = vmatmul.mubr.bf16.gmra.mxu0 %v671
        %v1698 = vpop.f32.mrf.mxu0
        %v1699 = vadd.f32 %v522, %v1698
        %v1700 = vpop.f32.mrf.mxu0
        %v1701 = vadd.f32 %v526, %v1700
        %v1702 = vpop.f32.mrf.mxu0
        %v1703 = vadd.f32 %v522, %v1702
        %v1704 = vpop.f32.mrf.mxu0
        %v1705 = vadd.f32 %v526, %v1704
        %1706 = vmatprep.mubr.bf16.mxu0 %v674
        %1707 = vmatmul.mubr.bf16.gmra.mxu0 %v673
        %v1708 = vpop.f32.mrf.mxu0
        %v1709 = vadd.f32 %v522, %v1708
        %v1710 = vpop.f32.mrf.mxu0
        %v1711 = vadd.f32 %v526, %v1710
        %v1712 = vpop.f32.mrf.mxu0
        %v1713 = vadd.f32 %v522, %v1712
        %v1714 = vpop.f32.mrf.mxu0
        %v1715 = vadd.f32 %v526, %v1714
        %1716 = vmatprep.mubr.bf16.mxu0 %v676
        %1717 = vmatmul.mubr.bf16.gmra.mxu0 %v675
        %v1718 = vpop.f32.mrf.mxu0
        %v1719 = vadd.f32 %v522, %v1718
        %v1720 = vpop.f32.mrf.mxu0
        %v1721 = vadd.f32 %v526, %v1720
        %v1722 = vpop.f32.mrf.mxu0
        %v1723 = vadd.f32 %v522, %v1722
        %v1724 = vpop.f32.mrf.mxu0
        %v1725 = vadd.f32 %v526, %v1724
        %1726 = vmatprep.mubr.bf16.mxu0 %v678
        %1727 = vmatmul.mubr.bf16.gmra.mxu0 %v677
        %v1728 = vpop.f32.mrf.mxu0
        %v1729 = vadd.f32 %v522, %v1728
        %v1730 = vpop.f32.mrf.mxu0
        %v1731 = vadd.f32 %v526, %v1730
        %v1732 = vpop.f32.mrf.mxu0
        %v1733 = vadd.f32 %v522, %v1732
        %v1734 = vpop.f32.mrf.mxu0
        %v1735 = vadd.f32 %v526, %v1734
        %1736 = vdwg.mxu0
        %1737 = vmatprep.subr.bf16.mxu0 %v1156
        %1738 = vmatpush1.bf16.msra.mxu0 %v1155
        %1739 = vmatprep.subr.bf16.mxu0 %v1148
        %1740 = vmatpush1.bf16.msra.mxu0 %v1147
        %1741 = vmatprep.subr.bf16.mxu0 %v1140
        %1742 = vmatpush1.bf16.msra.mxu0 %v1139
        %1743 = vmatprep.subr.bf16.mxu0 %v1132
        %1744 = vmatpush1.bf16.msra.mxu0 %v1131
        %1745 = vmatprep.subr.bf16.mxu0 %v1124
        %1746 = vmatpush1.bf16.msra.mxu0 %v1123
        %1747 = vmatprep.subr.bf16.mxu0 %v1116
        %1748 = vmatpush1.bf16.msra.mxu0 %v1115
        %1749 = vmatprep.subr.bf16.mxu0 %v1108
        %1750 = vmatpush1.bf16.msra.mxu0 %v1107
        %1751 = vmatprep.subr.bf16.mxu0 %v1100
        %1752 = vmatpush1.bf16.msra.mxu0 %v1099
        %1753 = vmatprep.subr.bf16.mxu0 %v1220
        %1754 = vmatpush2.bf16.msra.mxu0 %v1219
        %1755 = vmatprep.subr.bf16.mxu0 %v1212
        %1756 = vmatpush2.bf16.msra.mxu0 %v1211
        %1757 = vmatprep.subr.bf16.mxu0 %v1204
        %1758 = vmatpush2.bf16.msra.mxu0 %v1203
        %1759 = vmatprep.subr.bf16.mxu0 %v1196
        %1760 = vmatpush2.bf16.msra.mxu0 %v1195
        %1761 = vmatprep.subr.bf16.mxu0 %v1188
        %1762 = vmatpush2.bf16.msra.mxu0 %v1187
        %1763 = vmatprep.subr.bf16.mxu0 %v1180
        %1764 = vmatpush2.bf16.msra.mxu0 %v1179
        %1765 = vmatprep.subr.bf16.mxu0 %v1172
        %1766 = vmatpush2.bf16.msra.mxu0 %v1171
        %1767 = vmatprep.subr.bf16.mxu0 %v1164
        %1768 = vmatpush2.bf16.msra.mxu0 %v1163
        %1769 = vmatprep.mubr.bf16.mxu0 %v648
        %1770 = vmatmul.mubr.bf16.gmra.mxu0 %v647
        %v1771 = vpop.f32.mrf.mxu0
        %v1772 = vadd.f32 %v530, %v1771
        %v1773 = vpop.f32.mrf.mxu0
        %v1774 = vadd.f32 %v534, %v1773
        %v1775 = vpop.f32.mrf.mxu0
        %v1776 = vadd.f32 %v530, %v1775
        %v1777 = vpop.f32.mrf.mxu0
        %v1778 = vadd.f32 %v534, %v1777
        %1779 = vmatprep.mubr.bf16.mxu0 %v650
        %1780 = vmatmul.mubr.bf16.gmra.mxu0 %v649
        %v1781 = vpop.f32.mrf.mxu0
        %v1782 = vadd.f32 %v530, %v1781
        %v1783 = vpop.f32.mrf.mxu0
        %v1784 = vadd.f32 %v534, %v1783
        %v1785 = vpop.f32.mrf.mxu0
        %v1786 = vadd.f32 %v530, %v1785
        %v1787 = vpop.f32.mrf.mxu0
        %v1788 = vadd.f32 %v534, %v1787
        %1789 = vmatprep.mubr.bf16.mxu0 %v652
        %1790 = vmatmul.mubr.bf16.gmra.mxu0 %v651
        %v1791 = vpop.f32.mrf.mxu0
        %v1792 = vadd.f32 %v530, %v1791
        %v1793 = vpop.f32.mrf.mxu0
        %v1794 = vadd.f32 %v534, %v1793
        %v1795 = vpop.f32.mrf.mxu0
        %v1796 = vadd.f32 %v530, %v1795
        %v1797 = vpop.f32.mrf.mxu0
        %v1798 = vadd.f32 %v534, %v1797
        %1799 = vmatprep.mubr.bf16.mxu0 %v654
        %1800 = vmatmul.mubr.bf16.gmra.mxu0 %v653
        %v1801 = vpop.f32.mrf.mxu0
        %v1802 = vadd.f32 %v530, %v1801
        %v1803 = vpop.f32.mrf.mxu0
        %v1804 = vadd.f32 %v534, %v1803
        %v1805 = vpop.f32.mrf.mxu0
        %v1806 = vadd.f32 %v530, %v1805
        %v1807 = vpop.f32.mrf.mxu0
        %v1808 = vadd.f32 %v534, %v1807
        %1809 = vmatprep.mubr.bf16.mxu0 %v656
        %1810 = vmatmul.mubr.bf16.gmra.mxu0 %v655
        %v1811 = vpop.f32.mrf.mxu0
        %v1812 = vadd.f32 %v530, %v1811
        %v1813 = vpop.f32.mrf.mxu0
        %v1814 = vadd.f32 %v534, %v1813
        %v1815 = vpop.f32.mrf.mxu0
        %v1816 = vadd.f32 %v530, %v1815
        %v1817 = vpop.f32.mrf.mxu0
        %v1818 = vadd.f32 %v534, %v1817
        %1819 = vmatprep.mubr.bf16.mxu0 %v658
        %1820 = vmatmul.mubr.bf16.gmra.mxu0 %v657
        %v1821 = vpop.f32.mrf.mxu0
        %v1822 = vadd.f32 %v530, %v1821
        %v1823 = vpop.f32.mrf.mxu0
        %v1824 = vadd.f32 %v534, %v1823
        %v1825 = vpop.f32.mrf.mxu0
        %v1826 = vadd.f32 %v530, %v1825
        %v1827 = vpop.f32.mrf.mxu0
        %v1828 = vadd.f32 %v534, %v1827
        %1829 = vmatprep.mubr.bf16.mxu0 %v660
        %1830 = vmatmul.mubr.bf16.gmra.mxu0 %v659
        %v1831 = vpop.f32.mrf.mxu0
        %v1832 = vadd.f32 %v530, %v1831
        %v1833 = vpop.f32.mrf.mxu0
        %v1834 = vadd.f32 %v534, %v1833
        %v1835 = vpop.f32.mrf.mxu0
        %v1836 = vadd.f32 %v530, %v1835
        %v1837 = vpop.f32.mrf.mxu0
        %v1838 = vadd.f32 %v534, %v1837
        %1839 = vmatprep.mubr.bf16.mxu0 %v662
        %1840 = vmatmul.mubr.bf16.gmra.mxu0 %v661
        %v1841 = vpop.f32.mrf.mxu0
        %v1842 = vadd.f32 %v530, %v1841
        %v1843 = vpop.f32.mrf.mxu0
        %v1844 = vadd.f32 %v534, %v1843
        %v1845 = vpop.f32.mrf.mxu0
        %v1846 = vadd.f32 %v530, %v1845
        %v1847 = vpop.f32.mrf.mxu0
        %v1848 = vadd.f32 %v534, %v1847
        %1849 = vmatprep.mubr.bf16.mxu0 %v664
        %1850 = vmatmul.mubr.bf16.gmra.mxu0 %v663
        %v1851 = vpop.f32.mrf.mxu0
        %v1852 = vadd.f32 %v530, %v1851
        %v1853 = vpop.f32.mrf.mxu0
        %v1854 = vadd.f32 %v534, %v1853
        %v1855 = vpop.f32.mrf.mxu0
        %v1856 = vadd.f32 %v530, %v1855
        %v1857 = vpop.f32.mrf.mxu0
        %v1858 = vadd.f32 %v534, %v1857
        %1859 = vmatprep.mubr.bf16.mxu0 %v666
        %1860 = vmatmul.mubr.bf16.gmra.mxu0 %v665
        %v1861 = vpop.f32.mrf.mxu0
        %v1862 = vadd.f32 %v530, %v1861
        %v1863 = vpop.f32.mrf.mxu0
        %v1864 = vadd.f32 %v534, %v1863
        %v1865 = vpop.f32.mrf.mxu0
        %v1866 = vadd.f32 %v530, %v1865
        %v1867 = vpop.f32.mrf.mxu0
        %v1868 = vadd.f32 %v534, %v1867
        %1869 = vmatprep.mubr.bf16.mxu0 %v668
        %1870 = vmatmul.mubr.bf16.gmra.mxu0 %v667
        %v1871 = vpop.f32.mrf.mxu0
        %v1872 = vadd.f32 %v530, %v1871
        %v1873 = vpop.f32.mrf.mxu0
        %v1874 = vadd.f32 %v534, %v1873
        %v1875 = vpop.f32.mrf.mxu0
        %v1876 = vadd.f32 %v530, %v1875
        %v1877 = vpop.f32.mrf.mxu0
        %v1878 = vadd.f32 %v534, %v1877
        %1879 = vmatprep.mubr.bf16.mxu0 %v670
        %1880 = vmatmul.mubr.bf16.gmra.mxu0 %v669
        %v1881 = vpop.f32.mrf.mxu0
        %v1882 = vadd.f32 %v530, %v1881
        %v1883 = vpop.f32.mrf.mxu0
        %v1884 = vadd.f32 %v534, %v1883
        %v1885 = vpop.f32.mrf.mxu0
        %v1886 = vadd.f32 %v530, %v1885
        %v1887 = vpop.f32.mrf.mxu0
        %v1888 = vadd.f32 %v534, %v1887
        %1889 = vmatprep.mubr.bf16.mxu0 %v672
        %1890 = vmatmul.mubr.bf16.gmra.mxu0 %v671
        %v1891 = vpop.f32.mrf.mxu0
        %v1892 = vadd.f32 %v530, %v1891
        %v1893 = vpop.f32.mrf.mxu0
        %v1894 = vadd.f32 %v534, %v1893
        %v1895 = vpop.f32.mrf.mxu0
        %v1896 = vadd.f32 %v530, %v1895
        %v1897 = vpop.f32.mrf.mxu0
        %v1898 = vadd.f32 %v534, %v1897
        %1899 = vmatprep.mubr.bf16.mxu0 %v674
        %1900 = vmatmul.mubr.bf16.gmra.mxu0 %v673
        %v1901 = vpop.f32.mrf.mxu0
        %v1902 = vadd.f32 %v530, %v1901
        %v1903 = vpop.f32.mrf.mxu0
        %v1904 = vadd.f32 %v534, %v1903
        %v1905 = vpop.f32.mrf.mxu0
        %v1906 = vadd.f32 %v530, %v1905
        %v1907 = vpop.f32.mrf.mxu0
        %v1908 = vadd.f32 %v534, %v1907
        %1909 = vmatprep.mubr.bf16.mxu0 %v676
        %1910 = vmatmul.mubr.bf16.gmra.mxu0 %v675
        %v1911 = vpop.f32.mrf.mxu0
        %v1912 = vadd.f32 %v530, %v1911
        %v1913 = vpop.f32.mrf.mxu0
        %v1914 = vadd.f32 %v534, %v1913
        %v1915 = vpop.f32.mrf.mxu0
        %v1916 = vadd.f32 %v530, %v1915
        %v1917 = vpop.f32.mrf.mxu0
        %v1918 = vadd.f32 %v534, %v1917
        %1919 = vmatprep.mubr.bf16.mxu0 %v678
        %1920 = vmatmul.mubr.bf16.gmra.mxu0 %v677
        %v1921 = vpop.f32.mrf.mxu0
        %v1922 = vadd.f32 %v530, %v1921
        %v1923 = vpop.f32.mrf.mxu0
        %v1924 = vadd.f32 %v534, %v1923
        %v1925 = vpop.f32.mrf.mxu0
        %v1926 = vadd.f32 %v530, %v1925
        %v1927 = vpop.f32.mrf.mxu0
        %v1928 = vadd.f32 %v534, %v1927
        %1929 = vdwg.mxu0
        %1930 = vmatprep.subr.bf16.mxu0 %v1158
        %1931 = vmatpush1.bf16.msra.mxu0 %v1157
        %1932 = vmatprep.subr.bf16.mxu0 %v1150
        %1933 = vmatpush1.bf16.msra.mxu0 %v1149
        %1934 = vmatprep.subr.bf16.mxu0 %v1142
        %1935 = vmatpush1.bf16.msra.mxu0 %v1141
        %1936 = vmatprep.subr.bf16.mxu0 %v1134
        %1937 = vmatpush1.bf16.msra.mxu0 %v1133
        %1938 = vmatprep.subr.bf16.mxu0 %v1126
        %1939 = vmatpush1.bf16.msra.mxu0 %v1125
        %1940 = vmatprep.subr.bf16.mxu0 %v1118
        %1941 = vmatpush1.bf16.msra.mxu0 %v1117
        %1942 = vmatprep.subr.bf16.mxu0 %v1110
        %1943 = vmatpush1.bf16.msra.mxu0 %v1109
        %1944 = vmatprep.subr.bf16.mxu0 %v1102
        %1945 = vmatpush1.bf16.msra.mxu0 %v1101
        %1946 = vmatprep.subr.bf16.mxu0 %v1222
        %1947 = vmatpush2.bf16.msra.mxu0 %v1221
        %1948 = vmatprep.subr.bf16.mxu0 %v1214
        %1949 = vmatpush2.bf16.msra.mxu0 %v1213
        %1950 = vmatprep.subr.bf16.mxu0 %v1206
        %1951 = vmatpush2.bf16.msra.mxu0 %v1205
        %1952 = vmatprep.subr.bf16.mxu0 %v1198
        %1953 = vmatpush2.bf16.msra.mxu0 %v1197
        %1954 = vmatprep.subr.bf16.mxu0 %v1190
        %1955 = vmatpush2.bf16.msra.mxu0 %v1189
        %1956 = vmatprep.subr.bf16.mxu0 %v1182
        %1957 = vmatpush2.bf16.msra.mxu0 %v1181
        %1958 = vmatprep.subr.bf16.mxu0 %v1174
        %1959 = vmatpush2.bf16.msra.mxu0 %v1173
        %1960 = vmatprep.subr.bf16.mxu0 %v1166
        %1961 = vmatpush2.bf16.msra.mxu0 %v1165
        %1962 = vmatprep.mubr.bf16.mxu0 %v648
        %1963 = vmatmul.mubr.bf16.gmra.mxu0 %v647
        %v1964 = vpop.f32.mrf.mxu0
        %v1965 = vadd.f32 %v538, %v1964
        %v1966 = vpop.f32.mrf.mxu0
        %v1967 = vadd.f32 %v542, %v1966
        %v1968 = vpop.f32.mrf.mxu0
        %v1969 = vadd.f32 %v538, %v1968
        %v1970 = vpop.f32.mrf.mxu0
        %v1971 = vadd.f32 %v542, %v1970
        %1972 = vmatprep.mubr.bf16.mxu0 %v650
        %1973 = vmatmul.mubr.bf16.gmra.mxu0 %v649
        %v1974 = vpop.f32.mrf.mxu0
        %v1975 = vadd.f32 %v538, %v1974
        %v1976 = vpop.f32.mrf.mxu0
        %v1977 = vadd.f32 %v542, %v1976
        %v1978 = vpop.f32.mrf.mxu0
        %v1979 = vadd.f32 %v538, %v1978
        %v1980 = vpop.f32.mrf.mxu0
        %v1981 = vadd.f32 %v542, %v1980
        %1982 = vmatprep.mubr.bf16.mxu0 %v652
        %1983 = vmatmul.mubr.bf16.gmra.mxu0 %v651
        %v1984 = vpop.f32.mrf.mxu0
        %v1985 = vadd.f32 %v538, %v1984
        %v1986 = vpop.f32.mrf.mxu0
        %v1987 = vadd.f32 %v542, %v1986
        %v1988 = vpop.f32.mrf.mxu0
        %v1989 = vadd.f32 %v538, %v1988
        %v1990 = vpop.f32.mrf.mxu0
        %v1991 = vadd.f32 %v542, %v1990
        %1992 = vmatprep.mubr.bf16.mxu0 %v654
        %1993 = vmatmul.mubr.bf16.gmra.mxu0 %v653
        %v1994 = vpop.f32.mrf.mxu0
        %v1995 = vadd.f32 %v538, %v1994
        %v1996 = vpop.f32.mrf.mxu0
        %v1997 = vadd.f32 %v542, %v1996
        %v1998 = vpop.f32.mrf.mxu0
        %v1999 = vadd.f32 %v538, %v1998
        %v2000 = vpop.f32.mrf.mxu0
        %v2001 = vadd.f32 %v542, %v2000
        %2002 = vmatprep.mubr.bf16.mxu0 %v656
        %2003 = vmatmul.mubr.bf16.gmra.mxu0 %v655
        %v2004 = vpop.f32.mrf.mxu0
        %v2005 = vadd.f32 %v538, %v2004
        %v2006 = vpop.f32.mrf.mxu0
        %v2007 = vadd.f32 %v542, %v2006
        %v2008 = vpop.f32.mrf.mxu0
        %v2009 = vadd.f32 %v538, %v2008
        %v2010 = vpop.f32.mrf.mxu0
        %v2011 = vadd.f32 %v542, %v2010
        %2012 = vmatprep.mubr.bf16.mxu0 %v658
        %2013 = vmatmul.mubr.bf16.gmra.mxu0 %v657
        %v2014 = vpop.f32.mrf.mxu0
        %v2015 = vadd.f32 %v538, %v2014
        %v2016 = vpop.f32.mrf.mxu0
        %v2017 = vadd.f32 %v542, %v2016
        %v2018 = vpop.f32.mrf.mxu0
        %v2019 = vadd.f32 %v538, %v2018
        %v2020 = vpop.f32.mrf.mxu0
        %v2021 = vadd.f32 %v542, %v2020
        %2022 = vmatprep.mubr.bf16.mxu0 %v660
        %2023 = vmatmul.mubr.bf16.gmra.mxu0 %v659
        %v2024 = vpop.f32.mrf.mxu0
        %v2025 = vadd.f32 %v538, %v2024
        %v2026 = vpop.f32.mrf.mxu0
        %v2027 = vadd.f32 %v542, %v2026
        %v2028 = vpop.f32.mrf.mxu0
        %v2029 = vadd.f32 %v538, %v2028
        %v2030 = vpop.f32.mrf.mxu0
        %v2031 = vadd.f32 %v542, %v2030
        %2032 = vmatprep.mubr.bf16.mxu0 %v662
        %2033 = vmatmul.mubr.bf16.gmra.mxu0 %v661
        %v2034 = vpop.f32.mrf.mxu0
        %v2035 = vadd.f32 %v538, %v2034
        %v2036 = vpop.f32.mrf.mxu0
        %v2037 = vadd.f32 %v542, %v2036
        %v2038 = vpop.f32.mrf.mxu0
        %v2039 = vadd.f32 %v538, %v2038
        %v2040 = vpop.f32.mrf.mxu0
        %v2041 = vadd.f32 %v542, %v2040
        %2042 = vmatprep.mubr.bf16.mxu0 %v664
        %2043 = vmatmul.mubr.bf16.gmra.mxu0 %v663
        %v2044 = vpop.f32.mrf.mxu0
        %v2045 = vadd.f32 %v538, %v2044
        %v2046 = vpop.f32.mrf.mxu0
        %v2047 = vadd.f32 %v542, %v2046
        %v2048 = vpop.f32.mrf.mxu0
        %v2049 = vadd.f32 %v538, %v2048
        %v2050 = vpop.f32.mrf.mxu0
        %v2051 = vadd.f32 %v542, %v2050
        %2052 = vmatprep.mubr.bf16.mxu0 %v666
        %2053 = vmatmul.mubr.bf16.gmra.mxu0 %v665
        %v2054 = vpop.f32.mrf.mxu0
        %v2055 = vadd.f32 %v538, %v2054
        %v2056 = vpop.f32.mrf.mxu0
        %v2057 = vadd.f32 %v542, %v2056
        %v2058 = vpop.f32.mrf.mxu0
        %v2059 = vadd.f32 %v538, %v2058
        %v2060 = vpop.f32.mrf.mxu0
        %v2061 = vadd.f32 %v542, %v2060
        %2062 = vmatprep.mubr.bf16.mxu0 %v668
        %2063 = vmatmul.mubr.bf16.gmra.mxu0 %v667
        %v2064 = vpop.f32.mrf.mxu0
        %v2065 = vadd.f32 %v538, %v2064
        %v2066 = vpop.f32.mrf.mxu0
        %v2067 = vadd.f32 %v542, %v2066
        %v2068 = vpop.f32.mrf.mxu0
        %v2069 = vadd.f32 %v538, %v2068
        %v2070 = vpop.f32.mrf.mxu0
        %v2071 = vadd.f32 %v542, %v2070
        %2072 = vmatprep.mubr.bf16.mxu0 %v670
        %2073 = vmatmul.mubr.bf16.gmra.mxu0 %v669
        %v2074 = vpop.f32.mrf.mxu0
        %v2075 = vadd.f32 %v538, %v2074
        %v2076 = vpop.f32.mrf.mxu0
        %v2077 = vadd.f32 %v542, %v2076
        %v2078 = vpop.f32.mrf.mxu0
        %v2079 = vadd.f32 %v538, %v2078
        %v2080 = vpop.f32.mrf.mxu0
        %v2081 = vadd.f32 %v542, %v2080
        %2082 = vmatprep.mubr.bf16.mxu0 %v672
        %2083 = vmatmul.mubr.bf16.gmra.mxu0 %v671
        %v2084 = vpop.f32.mrf.mxu0
        %v2085 = vadd.f32 %v538, %v2084
        %v2086 = vpop.f32.mrf.mxu0
        %v2087 = vadd.f32 %v542, %v2086
        %v2088 = vpop.f32.mrf.mxu0
        %v2089 = vadd.f32 %v538, %v2088
        %v2090 = vpop.f32.mrf.mxu0
        %v2091 = vadd.f32 %v542, %v2090
        %2092 = vmatprep.mubr.bf16.mxu0 %v674
        %2093 = vmatmul.mubr.bf16.gmra.mxu0 %v673
        %v2094 = vpop.f32.mrf.mxu0
        %v2095 = vadd.f32 %v538, %v2094
        %v2096 = vpop.f32.mrf.mxu0
        %v2097 = vadd.f32 %v542, %v2096
        %v2098 = vpop.f32.mrf.mxu0
        %v2099 = vadd.f32 %v538, %v2098
        %v2100 = vpop.f32.mrf.mxu0
        %v2101 = vadd.f32 %v542, %v2100
        %2102 = vmatprep.mubr.bf16.mxu0 %v676
        %2103 = vmatmul.mubr.bf16.gmra.mxu0 %v675
        %v2104 = vpop.f32.mrf.mxu0
        %v2105 = vadd.f32 %v538, %v2104
        %v2106 = vpop.f32.mrf.mxu0
        %v2107 = vadd.f32 %v542, %v2106
        %v2108 = vpop.f32.mrf.mxu0
        %v2109 = vadd.f32 %v538, %v2108
        %v2110 = vpop.f32.mrf.mxu0
        %v2111 = vadd.f32 %v542, %v2110
        %2112 = vmatprep.mubr.bf16.mxu0 %v678
        %2113 = vmatmul.mubr.bf16.gmra.mxu0 %v677
        %v2114 = vpop.f32.mrf.mxu0
        %v2115 = vadd.f32 %v538, %v2114
        %v2116 = vpop.f32.mrf.mxu0
        %v2117 = vadd.f32 %v542, %v2116
        %v2118 = vpop.f32.mrf.mxu0
        %v2119 = vadd.f32 %v538, %v2118
        %v2120 = vpop.f32.mrf.mxu0
        %v2121 = vadd.f32 %v542, %v2120
        %2122 = vdwg.mxu0
        %v2123 = vmax.f32 %v1386, 0.0
        %v2124 = vmax.f32 %v1388, 0.0
        %v2125 = vmax.f32 %v1579, 0.0
        %v2126 = vmax.f32 %v1581, 0.0
        %v2127 = vmax.f32 %v1772, 0.0
        %v2128 = vmax.f32 %v1774, 0.0
        %v2129 = vmax.f32 %v1965, 0.0
        %v2130 = vmax.f32 %v1967, 0.0
        %v2131 = vmax.f32 %v1390, 0.0
        %v2132 = vmax.f32 %v1392, 0.0
        %v2133 = vmax.f32 %v1583, 0.0
        %v2134 = vmax.f32 %v1585, 0.0
        %v2135 = vmax.f32 %v1776, 0.0
        %v2136 = vmax.f32 %v1778, 0.0
        %v2137 = vmax.f32 %v1969, 0.0
        %v2138 = vmax.f32 %v1971, 0.0
        %v2139 = vmax.f32 %v1396, 0.0
        %v2140 = vmax.f32 %v1398, 0.0
        %v2141 = vmax.f32 %v1589, 0.0
        %v2142 = vmax.f32 %v1591, 0.0
        %v2143 = vmax.f32 %v1782, 0.0
        %v2144 = vmax.f32 %v1784, 0.0
        %v2145 = vmax.f32 %v1975, 0.0
        %v2146 = vmax.f32 %v1977, 0.0
        %v2147 = vmax.f32 %v1400, 0.0
        %v2148 = vmax.f32 %v1402, 0.0
        %v2149 = vmax.f32 %v1593, 0.0
        %v2150 = vmax.f32 %v1595, 0.0
        %v2151 = vmax.f32 %v1786, 0.0
        %v2152 = vmax.f32 %v1788, 0.0
        %v2153 = vmax.f32 %v1979, 0.0
        %v2154 = vmax.f32 %v1981, 0.0
        %v2155 = vmax.f32 %v1406, 0.0
        %v2156 = vmax.f32 %v1408, 0.0
        %v2157 = vmax.f32 %v1599, 0.0
        %v2158 = vmax.f32 %v1601, 0.0
        %v2159 = vmax.f32 %v1792, 0.0
        %v2160 = vmax.f32 %v1794, 0.0
        %v2161 = vmax.f32 %v1985, 0.0
        %v2162 = vmax.f32 %v1987, 0.0
        %v2163 = vmax.f32 %v1410, 0.0
        %v2164 = vmax.f32 %v1412, 0.0
        %v2165 = vmax.f32 %v1603, 0.0
        %v2166 = vmax.f32 %v1605, 0.0
        %v2167 = vmax.f32 %v1796, 0.0
        %v2168 = vmax.f32 %v1798, 0.0
        %v2169 = vmax.f32 %v1989, 0.0
        %v2170 = vmax.f32 %v1991, 0.0
        %v2171 = vmax.f32 %v1416, 0.0
        %v2172 = vmax.f32 %v1418, 0.0
        %v2173 = vmax.f32 %v1609, 0.0
        %v2174 = vmax.f32 %v1611, 0.0
        %v2175 = vmax.f32 %v1802, 0.0
        %v2176 = vmax.f32 %v1804, 0.0
        %v2177 = vmax.f32 %v1995, 0.0
        %v2178 = vmax.f32 %v1997, 0.0
        %v2179 = vmax.f32 %v1420, 0.0
        %v2180 = vmax.f32 %v1422, 0.0
        %v2181 = vmax.f32 %v1613, 0.0
        %v2182 = vmax.f32 %v1615, 0.0
        %v2183 = vmax.f32 %v1806, 0.0
        %v2184 = vmax.f32 %v1808, 0.0
        %v2185 = vmax.f32 %v1999, 0.0
        %v2186 = vmax.f32 %v2001, 0.0
        %v2187 = vmax.f32 %v1426, 0.0
        %v2188 = vmax.f32 %v1428, 0.0
        %v2189 = vmax.f32 %v1619, 0.0
        %v2190 = vmax.f32 %v1621, 0.0
        %v2191 = vmax.f32 %v1812, 0.0
        %v2192 = vmax.f32 %v1814, 0.0
        %v2193 = vmax.f32 %v2005, 0.0
        %v2194 = vmax.f32 %v2007, 0.0
        %v2195 = vmax.f32 %v1430, 0.0
        %v2196 = vmax.f32 %v1432, 0.0
        %v2197 = vmax.f32 %v1623, 0.0
        %v2198 = vmax.f32 %v1625, 0.0
        %v2199 = vmax.f32 %v1816, 0.0
        %v2200 = vmax.f32 %v1818, 0.0
        %v2201 = vmax.f32 %v2009, 0.0
        %v2202 = vmax.f32 %v2011, 0.0
        %v2203 = vmax.f32 %v1436, 0.0
        %v2204 = vmax.f32 %v1438, 0.0
        %v2205 = vmax.f32 %v1629, 0.0
        %v2206 = vmax.f32 %v1631, 0.0
        %v2207 = vmax.f32 %v1822, 0.0
        %v2208 = vmax.f32 %v1824, 0.0
        %v2209 = vmax.f32 %v2015, 0.0
        %v2210 = vmax.f32 %v2017, 0.0
        %v2211 = vmax.f32 %v1440, 0.0
        %v2212 = vmax.f32 %v1442, 0.0
        %v2213 = vmax.f32 %v1633, 0.0
        %v2214 = vmax.f32 %v1635, 0.0
        %v2215 = vmax.f32 %v1826, 0.0
        %v2216 = vmax.f32 %v1828, 0.0
        %v2217 = vmax.f32 %v2019, 0.0
        %v2218 = vmax.f32 %v2021, 0.0
        %v2219 = vmax.f32 %v1446, 0.0
        %v2220 = vmax.f32 %v1448, 0.0
        %v2221 = vmax.f32 %v1639, 0.0
        %v2222 = vmax.f32 %v1641, 0.0
        %v2223 = vmax.f32 %v1832, 0.0
        %v2224 = vmax.f32 %v1834, 0.0
        %v2225 = vmax.f32 %v2025, 0.0
        %v2226 = vmax.f32 %v2027, 0.0
        %v2227 = vmax.f32 %v1450, 0.0
        %v2228 = vmax.f32 %v1452, 0.0
        %v2229 = vmax.f32 %v1643, 0.0
        %v2230 = vmax.f32 %v1645, 0.0
        %v2231 = vmax.f32 %v1836, 0.0
        %v2232 = vmax.f32 %v1838, 0.0
        %v2233 = vmax.f32 %v2029, 0.0
        %v2234 = vmax.f32 %v2031, 0.0
        %v2235 = vmax.f32 %v1456, 0.0
        %v2236 = vmax.f32 %v1458, 0.0
        %v2237 = vmax.f32 %v1649, 0.0
        %v2238 = vmax.f32 %v1651, 0.0
        %v2239 = vmax.f32 %v1842, 0.0
        %v2240 = vmax.f32 %v1844, 0.0
        %v2241 = vmax.f32 %v2035, 0.0
        %v2242 = vmax.f32 %v2037, 0.0
        %v2243 = vmax.f32 %v1460, 0.0
        %v2244 = vmax.f32 %v1462, 0.0
        %v2245 = vmax.f32 %v1653, 0.0
        %v2246 = vmax.f32 %v1655, 0.0
        %v2247 = vmax.f32 %v1846, 0.0
        %v2248 = vmax.f32 %v1848, 0.0
        %v2249 = vmax.f32 %v2039, 0.0
        %v2250 = vmax.f32 %v2041, 0.0
        %v2251 = vmax.f32 %v1466, 0.0
        %v2252 = vmax.f32 %v1468, 0.0
        %v2253 = vmax.f32 %v1659, 0.0
        %v2254 = vmax.f32 %v1661, 0.0
        %v2255 = vmax.f32 %v1852, 0.0
        %v2256 = vmax.f32 %v1854, 0.0
        %v2257 = vmax.f32 %v2045, 0.0
        %v2258 = vmax.f32 %v2047, 0.0
        %v2259 = vmax.f32 %v1470, 0.0
        %v2260 = vmax.f32 %v1472, 0.0
        %v2261 = vmax.f32 %v1663, 0.0
        %v2262 = vmax.f32 %v1665, 0.0
        %v2263 = vmax.f32 %v1856, 0.0
        %v2264 = vmax.f32 %v1858, 0.0
        %v2265 = vmax.f32 %v2049, 0.0
        %v2266 = vmax.f32 %v2051, 0.0
        %v2267 = vmax.f32 %v1476, 0.0
        %v2268 = vmax.f32 %v1478, 0.0
        %v2269 = vmax.f32 %v1669, 0.0
        %v2270 = vmax.f32 %v1671, 0.0
        %v2271 = vmax.f32 %v1862, 0.0
        %v2272 = vmax.f32 %v1864, 0.0
        %v2273 = vmax.f32 %v2055, 0.0
        %v2274 = vmax.f32 %v2057, 0.0
        %v2275 = vmax.f32 %v1480, 0.0
        %v2276 = vmax.f32 %v1482, 0.0
        %v2277 = vmax.f32 %v1673, 0.0
        %v2278 = vmax.f32 %v1675, 0.0
        %v2279 = vmax.f32 %v1866, 0.0
        %v2280 = vmax.f32 %v1868, 0.0
        %v2281 = vmax.f32 %v2059, 0.0
        %v2282 = vmax.f32 %v2061, 0.0
        %v2283 = vmax.f32 %v1486, 0.0
        %v2284 = vmax.f32 %v1488, 0.0
        %v2285 = vmax.f32 %v1679, 0.0
        %v2286 = vmax.f32 %v1681, 0.0
        %v2287 = vmax.f32 %v1872, 0.0
        %v2288 = vmax.f32 %v1874, 0.0
        %v2289 = vmax.f32 %v2065, 0.0
        %v2290 = vmax.f32 %v2067, 0.0
        %v2291 = vmax.f32 %v1490, 0.0
        %v2292 = vmax.f32 %v1492, 0.0
        %v2293 = vmax.f32 %v1683, 0.0
        %v2294 = vmax.f32 %v1685, 0.0
        %v2295 = vmax.f32 %v1876, 0.0
        %v2296 = vmax.f32 %v1878, 0.0
        %v2297 = vmax.f32 %v2069, 0.0
        %v2298 = vmax.f32 %v2071, 0.0
        %v2299 = vmax.f32 %v1496, 0.0
        %v2300 = vmax.f32 %v1498, 0.0
        %v2301 = vmax.f32 %v1689, 0.0
        %v2302 = vmax.f32 %v1691, 0.0
        %v2303 = vmax.f32 %v1882, 0.0
        %v2304 = vmax.f32 %v1884, 0.0
        %v2305 = vmax.f32 %v2075, 0.0
        %v2306 = vmax.f32 %v2077, 0.0
        %v2307 = vmax.f32 %v1500, 0.0
        %v2308 = vmax.f32 %v1502, 0.0
        %v2309 = vmax.f32 %v1693, 0.0
        %v2310 = vmax.f32 %v1695, 0.0
        %v2311 = vmax.f32 %v1886, 0.0
        %v2312 = vmax.f32 %v1888, 0.0
        %v2313 = vmax.f32 %v2079, 0.0
        %v2314 = vmax.f32 %v2081, 0.0
        %v2315 = vmax.f32 %v1506, 0.0
        %v2316 = vmax.f32 %v1508, 0.0
        %v2317 = vmax.f32 %v1699, 0.0
        %v2318 = vmax.f32 %v1701, 0.0
        %v2319 = vmax.f32 %v1892, 0.0
        %v2320 = vmax.f32 %v1894, 0.0
        %v2321 = vmax.f32 %v2085, 0.0
        %v2322 = vmax.f32 %v2087, 0.0
        %v2323 = vmax.f32 %v1510, 0.0
        %v2324 = vmax.f32 %v1512, 0.0
        %v2325 = vmax.f32 %v1703, 0.0
        %v2326 = vmax.f32 %v1705, 0.0
        %v2327 = vmax.f32 %v1896, 0.0
        %v2328 = vmax.f32 %v1898, 0.0
        %v2329 = vmax.f32 %v2089, 0.0
        %v2330 = vmax.f32 %v2091, 0.0
        %v2331 = vmax.f32 %v1516, 0.0
        %v2332 = vmax.f32 %v1518, 0.0
        %v2333 = vmax.f32 %v1709, 0.0
        %v2334 = vmax.f32 %v1711, 0.0
        %v2335 = vmax.f32 %v1902, 0.0
        %v2336 = vmax.f32 %v1904, 0.0
        %v2337 = vmax.f32 %v2095, 0.0
        %v2338 = vmax.f32 %v2097, 0.0
        %v2339 = vmax.f32 %v1520, 0.0
        %v2340 = vmax.f32 %v1522, 0.0
        %v2341 = vmax.f32 %v1713, 0.0
        %v2342 = vmax.f32 %v1715, 0.0
        %v2343 = vmax.f32 %v1906, 0.0
        %v2344 = vmax.f32 %v1908, 0.0
        %v2345 = vmax.f32 %v2099, 0.0
        %v2346 = vmax.f32 %v2101, 0.0
        %v2347 = vmax.f32 %v1526, 0.0
        %v2348 = vmax.f32 %v1528, 0.0
        %v2349 = vmax.f32 %v1719, 0.0
        %v2350 = vmax.f32 %v1721, 0.0
        %v2351 = vmax.f32 %v1912, 0.0
        %v2352 = vmax.f32 %v1914, 0.0
        %v2353 = vmax.f32 %v2105, 0.0
        %v2354 = vmax.f32 %v2107, 0.0
        %v2355 = vmax.f32 %v1530, 0.0
        %v2356 = vmax.f32 %v1532, 0.0
        %v2357 = vmax.f32 %v1723, 0.0
        %v2358 = vmax.f32 %v1725, 0.0
        %v2359 = vmax.f32 %v1916, 0.0
        %v2360 = vmax.f32 %v1918, 0.0
        %v2361 = vmax.f32 %v2109, 0.0
        %v2362 = vmax.f32 %v2111, 0.0
        %v2363 = vmax.f32 %v1536, 0.0
        %v2364 = vmax.f32 %v1538, 0.0
        %v2365 = vmax.f32 %v1729, 0.0
        %v2366 = vmax.f32 %v1731, 0.0
        %v2367 = vmax.f32 %v1922, 0.0
        %v2368 = vmax.f32 %v1924, 0.0
        %v2369 = vmax.f32 %v2115, 0.0
        %v2370 = vmax.f32 %v2117, 0.0
        %v2371 = vmax.f32 %v1540, 0.0
        %v2372 = vmax.f32 %v1542, 0.0
        %v2373 = vmax.f32 %v1733, 0.0
        %v2374 = vmax.f32 %v1735, 0.0
        %v2375 = vmax.f32 %v1926, 0.0
        %v2376 = vmax.f32 %v1928, 0.0
        %v2377 = vmax.f32 %v2119, 0.0
        %v2378 = vmax.f32 %v2121, 0.0
        %v2379 = vpack.c.bf16 %v2131, %v2123
        %v2380 = vpack.c.bf16 %v2132, %v2124
        %v2381 = vpack.c.bf16 %v2133, %v2125
        %v2382 = vpack.c.bf16 %v2134, %v2126
        %v2383 = vpack.c.bf16 %v2135, %v2127
        %v2384 = vpack.c.bf16 %v2136, %v2128
        %v2385 = vpack.c.bf16 %v2137, %v2129
        %v2386 = vpack.c.bf16 %v2138, %v2130
        %v2387 = vpack.c.bf16 %v2147, %v2139
        %v2388 = vpack.c.bf16 %v2148, %v2140
        %v2389 = vpack.c.bf16 %v2149, %v2141
        %v2390 = vpack.c.bf16 %v2150, %v2142
        %v2391 = vpack.c.bf16 %v2151, %v2143
        %v2392 = vpack.c.bf16 %v2152, %v2144
        %v2393 = vpack.c.bf16 %v2153, %v2145
        %v2394 = vpack.c.bf16 %v2154, %v2146
        %v2395 = vpack.c.bf16 %v2163, %v2155
        %v2396 = vpack.c.bf16 %v2164, %v2156
        %v2397 = vpack.c.bf16 %v2165, %v2157
        %v2398 = vpack.c.bf16 %v2166, %v2158
        %v2399 = vpack.c.bf16 %v2167, %v2159
        %v2400 = vpack.c.bf16 %v2168, %v2160
        %v2401 = vpack.c.bf16 %v2169, %v2161
        %v2402 = vpack.c.bf16 %v2170, %v2162
        %v2403 = vpack.c.bf16 %v2179, %v2171
        %v2404 = vpack.c.bf16 %v2180, %v2172
        %v2405 = vpack.c.bf16 %v2181, %v2173
        %v2406 = vpack.c.bf16 %v2182, %v2174
        %v2407 = vpack.c.bf16 %v2183, %v2175
        %v2408 = vpack.c.bf16 %v2184, %v2176
        %v2409 = vpack.c.bf16 %v2185, %v2177
        %v2410 = vpack.c.bf16 %v2186, %v2178
        %v2411 = vpack.c.bf16 %v2195, %v2187
        %v2412 = vpack.c.bf16 %v2196, %v2188
        %v2413 = vpack.c.bf16 %v2197, %v2189
        %v2414 = vpack.c.bf16 %v2198, %v2190
        %v2415 = vpack.c.bf16 %v2199, %v2191
        %v2416 = vpack.c.bf16 %v2200, %v2192
        %v2417 = vpack.c.bf16 %v2201, %v2193
        %v2418 = vpack.c.bf16 %v2202, %v2194
        %v2419 = vpack.c.bf16 %v2211, %v2203
        %v2420 = vpack.c.bf16 %v2212, %v2204
        %v2421 = vpack.c.bf16 %v2213, %v2205
        %v2422 = vpack.c.bf16 %v2214, %v2206
        %v2423 = vpack.c.bf16 %v2215, %v2207
        %v2424 = vpack.c.bf16 %v2216, %v2208
        %v2425 = vpack.c.bf16 %v2217, %v2209
        %v2426 = vpack.c.bf16 %v2218, %v2210
        %v2427 = vpack.c.bf16 %v2227, %v2219
        %v2428 = vpack.c.bf16 %v2228, %v2220
        %v2429 = vpack.c.bf16 %v2229, %v2221
        %v2430 = vpack.c.bf16 %v2230, %v2222
        %v2431 = vpack.c.bf16 %v2231, %v2223
        %v2432 = vpack.c.bf16 %v2232, %v2224
        %v2433 = vpack.c.bf16 %v2233, %v2225
        %v2434 = vpack.c.bf16 %v2234, %v2226
        %v2435 = vpack.c.bf16 %v2243, %v2235
        %v2436 = vpack.c.bf16 %v2244, %v2236
        %v2437 = vpack.c.bf16 %v2245, %v2237
        %v2438 = vpack.c.bf16 %v2246, %v2238
        %v2439 = vpack.c.bf16 %v2247, %v2239
        %v2440 = vpack.c.bf16 %v2248, %v2240
        %v2441 = vpack.c.bf16 %v2249, %v2241
        %v2442 = vpack.c.bf16 %v2250, %v2242
        %v2443 = vpack.c.bf16 %v2259, %v2251
        %v2444 = vpack.c.bf16 %v2260, %v2252
        %v2445 = vpack.c.bf16 %v2261, %v2253
        %v2446 = vpack.c.bf16 %v2262, %v2254
        %v2447 = vpack.c.bf16 %v2263, %v2255
        %v2448 = vpack.c.bf16 %v2264, %v2256
        %v2449 = vpack.c.bf16 %v2265, %v2257
        %v2450 = vpack.c.bf16 %v2266, %v2258
        %v2451 = vpack.c.bf16 %v2275, %v2267
        %v2452 = vpack.c.bf16 %v2276, %v2268
        %v2453 = vpack.c.bf16 %v2277, %v2269
        %v2454 = vpack.c.bf16 %v2278, %v2270
        %v2455 = vpack.c.bf16 %v2279, %v2271
        %v2456 = vpack.c.bf16 %v2280, %v2272
        %v2457 = vpack.c.bf16 %v2281, %v2273
        %v2458 = vpack.c.bf16 %v2282, %v2274
        %v2459 = vpack.c.bf16 %v2291, %v2283
        %v2460 = vpack.c.bf16 %v2292, %v2284
        %v2461 = vpack.c.bf16 %v2293, %v2285
        %v2462 = vpack.c.bf16 %v2294, %v2286
        %v2463 = vpack.c.bf16 %v2295, %v2287
        %v2464 = vpack.c.bf16 %v2296, %v2288
        %v2465 = vpack.c.bf16 %v2297, %v2289
        %v2466 = vpack.c.bf16 %v2298, %v2290
        %v2467 = vpack.c.bf16 %v2307, %v2299
        %v2468 = vpack.c.bf16 %v2308, %v2300
        %v2469 = vpack.c.bf16 %v2309, %v2301
        %v2470 = vpack.c.bf16 %v2310, %v2302
        %v2471 = vpack.c.bf16 %v2311, %v2303
        %v2472 = vpack.c.bf16 %v2312, %v2304
        %v2473 = vpack.c.bf16 %v2313, %v2305
        %v2474 = vpack.c.bf16 %v2314, %v2306
        %v2475 = vpack.c.bf16 %v2323, %v2315
        %v2476 = vpack.c.bf16 %v2324, %v2316
        %v2477 = vpack.c.bf16 %v2325, %v2317
        %v2478 = vpack.c.bf16 %v2326, %v2318
        %v2479 = vpack.c.bf16 %v2327, %v2319
        %v2480 = vpack.c.bf16 %v2328, %v2320
        %v2481 = vpack.c.bf16 %v2329, %v2321
        %v2482 = vpack.c.bf16 %v2330, %v2322
        %v2483 = vpack.c.bf16 %v2339, %v2331
        %v2484 = vpack.c.bf16 %v2340, %v2332
        %v2485 = vpack.c.bf16 %v2341, %v2333
        %v2486 = vpack.c.bf16 %v2342, %v2334
        %v2487 = vpack.c.bf16 %v2343, %v2335
        %v2488 = vpack.c.bf16 %v2344, %v2336
        %v2489 = vpack.c.bf16 %v2345, %v2337
        %v2490 = vpack.c.bf16 %v2346, %v2338
        %v2491 = vpack.c.bf16 %v2355, %v2347
        %v2492 = vpack.c.bf16 %v2356, %v2348
        %v2493 = vpack.c.bf16 %v2357, %v2349
        %v2494 = vpack.c.bf16 %v2358, %v2350
        %v2495 = vpack.c.bf16 %v2359, %v2351
        %v2496 = vpack.c.bf16 %v2360, %v2352
        %v2497 = vpack.c.bf16 %v2361, %v2353
        %v2498 = vpack.c.bf16 %v2362, %v2354
        %v2499 = vpack.c.bf16 %v2371, %v2363
        %v2500 = vpack.c.bf16 %v2372, %v2364
        %v2501 = vpack.c.bf16 %v2373, %v2365
        %v2502 = vpack.c.bf16 %v2374, %v2366
        %v2503 = vpack.c.bf16 %v2375, %v2367
        %v2504 = vpack.c.bf16 %v2376, %v2368
        %v2505 = vpack.c.bf16 %v2377, %v2369
        %v2506 = vpack.c.bf16 %v2378, %v2370
        %v2507 = vld [vmem:[%s3] sm:$0xf]
        %v2508 = vld [vmem:[%s3 + $0x4] sm:$0xf]
        %v2509 = vld [vmem:[%s3 + $0x8] sm:$0xf]
        %v2510 = vld [vmem:[%s3 + $0xc] sm:$0xf]
        %v2511 = vld [vmem:[%s3 + $0x10] sm:$0xf]
        %v2512 = vld [vmem:[%s3 + $0x14] sm:$0xf]
        %v2513 = vld [vmem:[%s3 + $0x18] sm:$0xf]
        %v2514 = vld [vmem:[%s3 + $0x1c] sm:$0xf]
        %v2515 = vld [vmem:[%s3 + $0x20] sm:$0xf]
        %v2516 = vld [vmem:[%s3 + $0x24] sm:$0xf]
        %v2517 = vld [vmem:[%s3 + $0x28] sm:$0xf]
        %v2518 = vld [vmem:[%s3 + $0x2c] sm:$0xf]
        %v2519 = vld [vmem:[%s3 + $0x30] sm:$0xf]
        %v2520 = vld [vmem:[%s3 + $0x34] sm:$0xf]
        %v2521 = vld [vmem:[%s3 + $0x38] sm:$0xf]
        %v2522 = vld [vmem:[%s3 + $0x3c] sm:$0xf]
        %v2523 = vld [vmem:[%s3 + $0x40] sm:$0xf]
        %v2524 = vld [vmem:[%s3 + $0x44] sm:$0xf]
        %v2525 = vld [vmem:[%s3 + $0x48] sm:$0xf]
        %v2526 = vld [vmem:[%s3 + $0x4c] sm:$0xf]
        %v2527 = vld [vmem:[%s3 + $0x50] sm:$0xf]
        %v2528 = vld [vmem:[%s3 + $0x54] sm:$0xf]
        %v2529 = vld [vmem:[%s3 + $0x58] sm:$0xf]
        %v2530 = vld [vmem:[%s3 + $0x5c] sm:$0xf]
        %v2531 = vld [vmem:[%s3 + $0x60] sm:$0xf]
        %v2532 = vld [vmem:[%s3 + $0x64] sm:$0xf]
        %v2533 = vld [vmem:[%s3 + $0x68] sm:$0xf]
        %v2534 = vld [vmem:[%s3 + $0x6c] sm:$0xf]
        %v2535 = vld [vmem:[%s3 + $0x70] sm:$0xf]
        %v2536 = vld [vmem:[%s3 + $0x74] sm:$0xf]
        %v2537 = vld [vmem:[%s3 + $0x78] sm:$0xf]
        %v2538 = vld [vmem:[%s3 + $0x7c] sm:$0xf]
        %v2539 = vld [vmem:[%s3 + $0x80] sm:$0xf]
        %v2540 = vld [vmem:[%s3 + $0x84] sm:$0xf]
        %v2541 = vld [vmem:[%s3 + $0x88] sm:$0xf]
        %v2542 = vld [vmem:[%s3 + $0x8c] sm:$0xf]
        %v2543 = vld [vmem:[%s3 + $0x90] sm:$0xf]
        %v2544 = vld [vmem:[%s3 + $0x94] sm:$0xf]
        %v2545 = vld [vmem:[%s3 + $0x98] sm:$0xf]
        %v2546 = vld [vmem:[%s3 + $0x9c] sm:$0xf]
        %v2547 = vld [vmem:[%s3 + $0xa0] sm:$0xf]
        %v2548 = vld [vmem:[%s3 + $0xa4] sm:$0xf]
        %v2549 = vld [vmem:[%s3 + $0xa8] sm:$0xf]
        %v2550 = vld [vmem:[%s3 + $0xac] sm:$0xf]
        %v2551 = vld [vmem:[%s3 + $0xb0] sm:$0xf]
        %v2552 = vld [vmem:[%s3 + $0xb4] sm:$0xf]
        %v2553 = vld [vmem:[%s3 + $0xb8] sm:$0xf]
        %v2554 = vld [vmem:[%s3 + $0xbc] sm:$0xf]
        %v2555 = vld [vmem:[%s3 + $0xc0] sm:$0xf]
        %v2556 = vld [vmem:[%s3 + $0xc4] sm:$0xf]
        %v2557 = vld [vmem:[%s3 + $0xc8] sm:$0xf]
        %v2558 = vld [vmem:[%s3 + $0xcc] sm:$0xf]
        %v2559 = vld [vmem:[%s3 + $0xd0] sm:$0xf]
        %v2560 = vld [vmem:[%s3 + $0xd4] sm:$0xf]
        %v2561 = vld [vmem:[%s3 + $0xd8] sm:$0xf]
        %v2562 = vld [vmem:[%s3 + $0xdc] sm:$0xf]
        %v2563 = vld [vmem:[%s3 + $0xe0] sm:$0xf]
        %v2564 = vld [vmem:[%s3 + $0xe4] sm:$0xf]
        %v2565 = vld [vmem:[%s3 + $0xe8] sm:$0xf]
        %v2566 = vld [vmem:[%s3 + $0xec] sm:$0xf]
        %v2567 = vld [vmem:[%s3 + $0xf0] sm:$0xf]
        %v2568 = vld [vmem:[%s3 + $0xf4] sm:$0xf]
        %v2569 = vld [vmem:[%s3 + $0xf8] sm:$0xf]
        %v2570 = vld [vmem:[%s3 + $0xfc] sm:$0xf]
        %v2571 = vld [vmem:[%s3 + $0x100] sm:$0xf]
        %v2572 = vld [vmem:[%s3 + $0x104] sm:$0xf]
        %v2573 = vld [vmem:[%s3 + $0x108] sm:$0xf]
        %v2574 = vld [vmem:[%s3 + $0x10c] sm:$0xf]
        %v2575 = vld [vmem:[%s3 + $0x110] sm:$0xf]
        %v2576 = vld [vmem:[%s3 + $0x114] sm:$0xf]
        %v2577 = vld [vmem:[%s3 + $0x118] sm:$0xf]
        %v2578 = vld [vmem:[%s3 + $0x11c] sm:$0xf]
        %v2579 = vld [vmem:[%s3 + $0x120] sm:$0xf]
        %v2580 = vld [vmem:[%s3 + $0x124] sm:$0xf]
        %v2581 = vld [vmem:[%s3 + $0x128] sm:$0xf]
        %v2582 = vld [vmem:[%s3 + $0x12c] sm:$0xf]
        %v2583 = vld [vmem:[%s3 + $0x130] sm:$0xf]
        %v2584 = vld [vmem:[%s3 + $0x134] sm:$0xf]
        %v2585 = vld [vmem:[%s3 + $0x138] sm:$0xf]
        %v2586 = vld [vmem:[%s3 + $0x13c] sm:$0xf]
        %v2587 = vld [vmem:[%s3 + $0x140] sm:$0xf]
        %v2588 = vld [vmem:[%s3 + $0x144] sm:$0xf]
        %v2589 = vld [vmem:[%s3 + $0x148] sm:$0xf]
        %v2590 = vld [vmem:[%s3 + $0x14c] sm:$0xf]
        %v2591 = vld [vmem:[%s3 + $0x150] sm:$0xf]
        %v2592 = vld [vmem:[%s3 + $0x154] sm:$0xf]
        %v2593 = vld [vmem:[%s3 + $0x158] sm:$0xf]
        %v2594 = vld [vmem:[%s3 + $0x15c] sm:$0xf]
        %v2595 = vld [vmem:[%s3 + $0x160] sm:$0xf]
        %v2596 = vld [vmem:[%s3 + $0x164] sm:$0xf]
        %v2597 = vld [vmem:[%s3 + $0x168] sm:$0xf]
        %v2598 = vld [vmem:[%s3 + $0x16c] sm:$0xf]
        %v2599 = vld [vmem:[%s3 + $0x170] sm:$0xf]
        %v2600 = vld [vmem:[%s3 + $0x174] sm:$0xf]
        %v2601 = vld [vmem:[%s3 + $0x178] sm:$0xf]
        %v2602 = vld [vmem:[%s3 + $0x17c] sm:$0xf]
        %v2603 = vld [vmem:[%s3 + $0x180] sm:$0xf]
        %v2604 = vld [vmem:[%s3 + $0x184] sm:$0xf]
        %v2605 = vld [vmem:[%s3 + $0x188] sm:$0xf]
        %v2606 = vld [vmem:[%s3 + $0x18c] sm:$0xf]
        %v2607 = vld [vmem:[%s3 + $0x190] sm:$0xf]
        %v2608 = vld [vmem:[%s3 + $0x194] sm:$0xf]
        %v2609 = vld [vmem:[%s3 + $0x198] sm:$0xf]
        %v2610 = vld [vmem:[%s3 + $0x19c] sm:$0xf]
        %v2611 = vld [vmem:[%s3 + $0x1a0] sm:$0xf]
        %v2612 = vld [vmem:[%s3 + $0x1a4] sm:$0xf]
        %v2613 = vld [vmem:[%s3 + $0x1a8] sm:$0xf]
        %v2614 = vld [vmem:[%s3 + $0x1ac] sm:$0xf]
        %v2615 = vld [vmem:[%s3 + $0x1b0] sm:$0xf]
        %v2616 = vld [vmem:[%s3 + $0x1b4] sm:$0xf]
        %v2617 = vld [vmem:[%s3 + $0x1b8] sm:$0xf]
        %v2618 = vld [vmem:[%s3 + $0x1bc] sm:$0xf]
        %v2619 = vld [vmem:[%s3 + $0x1c0] sm:$0xf]
        %v2620 = vld [vmem:[%s3 + $0x1c4] sm:$0xf]
        %v2621 = vld [vmem:[%s3 + $0x1c8] sm:$0xf]
        %v2622 = vld [vmem:[%s3 + $0x1cc] sm:$0xf]
        %v2623 = vld [vmem:[%s3 + $0x1d0] sm:$0xf]
        %v2624 = vld [vmem:[%s3 + $0x1d4] sm:$0xf]
        %v2625 = vld [vmem:[%s3 + $0x1d8] sm:$0xf]
        %v2626 = vld [vmem:[%s3 + $0x1dc] sm:$0xf]
        %v2627 = vld [vmem:[%s3 + $0x1e0] sm:$0xf]
        %v2628 = vld [vmem:[%s3 + $0x1e4] sm:$0xf]
        %v2629 = vld [vmem:[%s3 + $0x1e8] sm:$0xf]
        %v2630 = vld [vmem:[%s3 + $0x1ec] sm:$0xf]
        %v2631 = vld [vmem:[%s3 + $0x1f0] sm:$0xf]
        %v2632 = vld [vmem:[%s3 + $0x1f4] sm:$0xf]
        %v2633 = vld [vmem:[%s3 + $0x1f8] sm:$0xf]
        %v2634 = vld [vmem:[%s3 + $0x1fc] sm:$0xf]
        %v2635 = vld [vmem:[%s4] sm:$0x1]
        %v2637 = vlaneseq
        %v2638 = vshrl.u32 %v2637, 7
        %v2639 = vsub.s32 0, %v2638
        %v2640 = vrot.slane %v2635, %v2639
        %v2770 = vunpack.c.l.b16 %v2507
        %v2771 = vunpack.c.l.b16 %v2508
        %v2772 = vunpack.c.l.b16 %v2509
        %v2773 = vunpack.c.l.b16 %v2510
        %v2774 = vunpack.c.l.b16 %v2511
        %v2775 = vunpack.c.l.b16 %v2512
        %v2776 = vunpack.c.l.b16 %v2513
        %v2777 = vunpack.c.l.b16 %v2514
        %v2778 = vunpack.c.l.b16 %v2515
        %v2779 = vunpack.c.l.b16 %v2516
        %v2780 = vunpack.c.l.b16 %v2517
        %v2781 = vunpack.c.l.b16 %v2518
        %v2782 = vunpack.c.l.b16 %v2519
        %v2783 = vunpack.c.l.b16 %v2520
        %v2784 = vunpack.c.l.b16 %v2521
        %v2785 = vunpack.c.l.b16 %v2522
        %v2786 = vunpack.c.l.b16 %v2523
        %v2787 = vunpack.c.l.b16 %v2524
        %v2788 = vunpack.c.l.b16 %v2525
        %v2789 = vunpack.c.l.b16 %v2526
        %v2790 = vunpack.c.l.b16 %v2527
        %v2791 = vunpack.c.l.b16 %v2528
        %v2792 = vunpack.c.l.b16 %v2529
        %v2793 = vunpack.c.l.b16 %v2530
        %v2794 = vunpack.c.l.b16 %v2531
        %v2795 = vunpack.c.l.b16 %v2532
        %v2796 = vunpack.c.l.b16 %v2533
        %v2797 = vunpack.c.l.b16 %v2534
        %v2798 = vunpack.c.l.b16 %v2535
        %v2799 = vunpack.c.l.b16 %v2536
        %v2800 = vunpack.c.l.b16 %v2537
        %v2801 = vunpack.c.l.b16 %v2538
        %v2802 = vunpack.c.l.b16 %v2539
        %v2803 = vunpack.c.l.b16 %v2540
        %v2804 = vunpack.c.l.b16 %v2541
        %v2805 = vunpack.c.l.b16 %v2542
        %v2806 = vunpack.c.l.b16 %v2543
        %v2807 = vunpack.c.l.b16 %v2544
        %v2808 = vunpack.c.l.b16 %v2545
        %v2809 = vunpack.c.l.b16 %v2546
        %v2810 = vunpack.c.l.b16 %v2547
        %v2811 = vunpack.c.l.b16 %v2548
        %v2812 = vunpack.c.l.b16 %v2549
        %v2813 = vunpack.c.l.b16 %v2550
        %v2814 = vunpack.c.l.b16 %v2551
        %v2815 = vunpack.c.l.b16 %v2552
        %v2816 = vunpack.c.l.b16 %v2553
        %v2817 = vunpack.c.l.b16 %v2554
        %v2818 = vunpack.c.l.b16 %v2555
        %v2819 = vunpack.c.l.b16 %v2556
        %v2820 = vunpack.c.l.b16 %v2557
        %v2821 = vunpack.c.l.b16 %v2558
        %v2822 = vunpack.c.l.b16 %v2559
        %v2823 = vunpack.c.l.b16 %v2560
        %v2824 = vunpack.c.l.b16 %v2561
        %v2825 = vunpack.c.l.b16 %v2562
        %v2826 = vunpack.c.l.b16 %v2563
        %v2827 = vunpack.c.l.b16 %v2564
        %v2828 = vunpack.c.l.b16 %v2565
        %v2829 = vunpack.c.l.b16 %v2566
        %v2830 = vunpack.c.l.b16 %v2567
        %v2831 = vunpack.c.l.b16 %v2568
        %v2832 = vunpack.c.l.b16 %v2569
        %v2833 = vunpack.c.l.b16 %v2570
        %v2834 = vunpack.c.l.b16 %v2571
        %v2835 = vunpack.c.l.b16 %v2572
        %v2836 = vunpack.c.l.b16 %v2573
        %v2837 = vunpack.c.l.b16 %v2574
        %v2838 = vunpack.c.l.b16 %v2575
        %v2839 = vunpack.c.l.b16 %v2576
        %v2840 = vunpack.c.l.b16 %v2577
        %v2841 = vunpack.c.l.b16 %v2578
        %v2842 = vunpack.c.l.b16 %v2579
        %v2843 = vunpack.c.l.b16 %v2580
        %v2844 = vunpack.c.l.b16 %v2581
        %v2845 = vunpack.c.l.b16 %v2582
        %v2846 = vunpack.c.l.b16 %v2583
        %v2847 = vunpack.c.l.b16 %v2584
        %v2848 = vunpack.c.l.b16 %v2585
        %v2849 = vunpack.c.l.b16 %v2586
        %v2850 = vunpack.c.l.b16 %v2587
        %v2851 = vunpack.c.l.b16 %v2588
        %v2852 = vunpack.c.l.b16 %v2589
        %v2853 = vunpack.c.l.b16 %v2590
        %v2854 = vunpack.c.l.b16 %v2591
        %v2855 = vunpack.c.l.b16 %v2592
        %v2856 = vunpack.c.l.b16 %v2593
        %v2857 = vunpack.c.l.b16 %v2594
        %v2858 = vunpack.c.l.b16 %v2595
        %v2859 = vunpack.c.l.b16 %v2596
        %v2860 = vunpack.c.l.b16 %v2597
        %v2861 = vunpack.c.l.b16 %v2598
        %v2862 = vunpack.c.l.b16 %v2599
        %v2863 = vunpack.c.l.b16 %v2600
        %v2864 = vunpack.c.l.b16 %v2601
        %v2865 = vunpack.c.l.b16 %v2602
        %v2866 = vunpack.c.l.b16 %v2603
        %v2867 = vunpack.c.l.b16 %v2604
        %v2868 = vunpack.c.l.b16 %v2605
        %v2869 = vunpack.c.l.b16 %v2606
        %v2870 = vunpack.c.l.b16 %v2607
        %v2871 = vunpack.c.l.b16 %v2608
        %v2872 = vunpack.c.l.b16 %v2609
        %v2873 = vunpack.c.l.b16 %v2610
        %v2874 = vunpack.c.l.b16 %v2611
        %v2875 = vunpack.c.l.b16 %v2612
        %v2876 = vunpack.c.l.b16 %v2613
        %v2877 = vunpack.c.l.b16 %v2614
        %v2878 = vunpack.c.l.b16 %v2615
        %v2879 = vunpack.c.l.b16 %v2616
        %v2880 = vunpack.c.l.b16 %v2617
        %v2881 = vunpack.c.l.b16 %v2618
        %v2882 = vunpack.c.l.b16 %v2619
        %v2883 = vunpack.c.l.b16 %v2620
        %v2884 = vunpack.c.l.b16 %v2621
        %v2885 = vunpack.c.l.b16 %v2622
        %v2886 = vunpack.c.l.b16 %v2623
        %v2887 = vunpack.c.l.b16 %v2624
        %v2888 = vunpack.c.l.b16 %v2625
        %v2889 = vunpack.c.l.b16 %v2626
        %v2890 = vunpack.c.l.b16 %v2627
        %v2891 = vunpack.c.l.b16 %v2628
        %v2892 = vunpack.c.l.b16 %v2629
        %v2893 = vunpack.c.l.b16 %v2630
        %v2894 = vunpack.c.l.b16 %v2631
        %v2895 = vunpack.c.l.b16 %v2632
        %v2896 = vunpack.c.l.b16 %v2633
        %v2897 = vunpack.c.l.b16 %v2634
        %v2898 = vpack.c.b16 %v2771, %v2770
        %v2899 = vpack.c.b16 %v2773, %v2772
        %v2900 = vpack.c.b16 %v2775, %v2774
        %v2901 = vpack.c.b16 %v2777, %v2776
        %v2902 = vpack.c.b16 %v2779, %v2778
        %v2903 = vpack.c.b16 %v2781, %v2780
        %v2904 = vpack.c.b16 %v2783, %v2782
        %v2905 = vpack.c.b16 %v2785, %v2784
        %v2906 = vpack.c.b16 %v2787, %v2786
        %v2907 = vpack.c.b16 %v2789, %v2788
        %v2908 = vpack.c.b16 %v2791, %v2790
        %v2909 = vpack.c.b16 %v2793, %v2792
        %v2910 = vpack.c.b16 %v2795, %v2794
        %v2911 = vpack.c.b16 %v2797, %v2796
        %v2912 = vpack.c.b16 %v2799, %v2798
        %v2913 = vpack.c.b16 %v2801, %v2800
        %v2914 = vpack.c.b16 %v2803, %v2802
        %v2915 = vpack.c.b16 %v2805, %v2804
        %v2916 = vpack.c.b16 %v2807, %v2806
        %v2917 = vpack.c.b16 %v2809, %v2808
        %v2918 = vpack.c.b16 %v2811, %v2810
        %v2919 = vpack.c.b16 %v2813, %v2812
        %v2920 = vpack.c.b16 %v2815, %v2814
        %v2921 = vpack.c.b16 %v2817, %v2816
        %v2922 = vpack.c.b16 %v2819, %v2818
        %v2923 = vpack.c.b16 %v2821, %v2820
        %v2924 = vpack.c.b16 %v2823, %v2822
        %v2925 = vpack.c.b16 %v2825, %v2824
        %v2926 = vpack.c.b16 %v2827, %v2826
        %v2927 = vpack.c.b16 %v2829, %v2828
        %v2928 = vpack.c.b16 %v2831, %v2830
        %v2929 = vpack.c.b16 %v2833, %v2832
        %v2930 = vpack.c.b16 %v2835, %v2834
        %v2931 = vpack.c.b16 %v2837, %v2836
        %v2932 = vpack.c.b16 %v2839, %v2838
        %v2933 = vpack.c.b16 %v2841, %v2840
        %v2934 = vpack.c.b16 %v2843, %v2842
        %v2935 = vpack.c.b16 %v2845, %v2844
        %v2936 = vpack.c.b16 %v2847, %v2846
        %v2937 = vpack.c.b16 %v2849, %v2848
        %v2938 = vpack.c.b16 %v2851, %v2850
        %v2939 = vpack.c.b16 %v2853, %v2852
        %v2940 = vpack.c.b16 %v2855, %v2854
        %v2941 = vpack.c.b16 %v2857, %v2856
        %v2942 = vpack.c.b16 %v2859, %v2858
        %v2943 = vpack.c.b16 %v2861, %v2860
        %v2944 = vpack.c.b16 %v2863, %v2862
        %v2945 = vpack.c.b16 %v2865, %v2864
        %v2946 = vpack.c.b16 %v2867, %v2866
        %v2947 = vpack.c.b16 %v2869, %v2868
        %v2948 = vpack.c.b16 %v2871, %v2870
        %v2949 = vpack.c.b16 %v2873, %v2872
        %v2950 = vpack.c.b16 %v2875, %v2874
        %v2951 = vpack.c.b16 %v2877, %v2876
        %v2952 = vpack.c.b16 %v2879, %v2878
        %v2953 = vpack.c.b16 %v2881, %v2880
        %v2954 = vpack.c.b16 %v2883, %v2882
        %v2955 = vpack.c.b16 %v2885, %v2884
        %v2956 = vpack.c.b16 %v2887, %v2886
        %v2957 = vpack.c.b16 %v2889, %v2888
        %v2958 = vpack.c.b16 %v2891, %v2890
        %v2959 = vpack.c.b16 %v2893, %v2892
        %v2960 = vpack.c.b16 %v2895, %v2894
        %v2961 = vpack.c.b16 %v2897, %v2896
        %3026 = vmatprep.subr.bf16.mxu0 0
        %3027 = vmatpush1.bf16.msra.mxu0 %v2905
        %3028 = vmatprep.subr.bf16.mxu0 0
        %3029 = vmatpush1.bf16.msra.mxu0 %v2904
        %3030 = vmatprep.subr.bf16.mxu0 0
        %3031 = vmatpush1.bf16.msra.mxu0 %v2903
        %3032 = vmatprep.subr.bf16.mxu0 0
        %3033 = vmatpush1.bf16.msra.mxu0 %v2902
        %3034 = vmatprep.subr.bf16.mxu0 0
        %3035 = vmatpush1.bf16.msra.mxu0 %v2901
        %3036 = vmatprep.subr.bf16.mxu0 0
        %3037 = vmatpush1.bf16.msra.mxu0 %v2900
        %3038 = vmatprep.subr.bf16.mxu0 0
        %3039 = vmatpush1.bf16.msra.mxu0 %v2899
        %3040 = vmatprep.subr.bf16.mxu0 0
        %3041 = vmatpush1.bf16.msra.mxu0 %v2898
        %3042 = vmatprep.subr.bf16.mxu0 0
        %3043 = vmatpush2.bf16.msra.mxu0 %v2913
        %3044 = vmatprep.subr.bf16.mxu0 0
        %3045 = vmatpush2.bf16.msra.mxu0 %v2912
        %3046 = vmatprep.subr.bf16.mxu0 0
        %3047 = vmatpush2.bf16.msra.mxu0 %v2911
        %3048 = vmatprep.subr.bf16.mxu0 0
        %3049 = vmatpush2.bf16.msra.mxu0 %v2910
        %3050 = vmatprep.subr.bf16.mxu0 0
        %3051 = vmatpush2.bf16.msra.mxu0 %v2909
        %3052 = vmatprep.subr.bf16.mxu0 0
        %3053 = vmatpush2.bf16.msra.mxu0 %v2908
        %3054 = vmatprep.subr.bf16.mxu0 0
        %3055 = vmatpush2.bf16.msra.mxu0 %v2907
        %3056 = vmatprep.subr.bf16.mxu0 0
        %3057 = vmatpush2.bf16.msra.mxu0 %v2906
        %3058 = vmatprep.mubr.bf16.mxu0 %v2380
        %3059 = vmatmul.mubr.bf16.gmra.mxu0 %v2379
        %v3060 = vpop.f32.mrf.mxu0
        %v3061 = vadd.f32 %v2640, %v3060
        %v3062 = vpop.f32.mrf.mxu0
        %v3063 = vpop.f32.mrf.mxu0
        %v3064 = vadd.f32 %v2640, %v3063
        %v3065 = vpop.f32.mrf.mxu0
        %3066 = vmatprep.mubr.bf16.mxu0 %v2388
        %3067 = vmatmul.mubr.bf16.gmra.mxu0 %v2387
        %v3068 = vpop.f32.mrf.mxu0
        %v3069 = vadd.f32 %v2640, %v3068
        %v3070 = vpop.f32.mrf.mxu0
        %v3071 = vpop.f32.mrf.mxu0
        %v3072 = vadd.f32 %v2640, %v3071
        %v3073 = vpop.f32.mrf.mxu0
        %3074 = vmatprep.mubr.bf16.mxu0 %v2396
        %3075 = vmatmul.mubr.bf16.gmra.mxu0 %v2395
        %v3076 = vpop.f32.mrf.mxu0
        %v3077 = vadd.f32 %v2640, %v3076
        %v3078 = vpop.f32.mrf.mxu0
        %v3079 = vpop.f32.mrf.mxu0
        %v3080 = vadd.f32 %v2640, %v3079
        %v3081 = vpop.f32.mrf.mxu0
        %3082 = vmatprep.mubr.bf16.mxu0 %v2404
        %3083 = vmatmul.mubr.bf16.gmra.mxu0 %v2403
        %v3084 = vpop.f32.mrf.mxu0
        %v3085 = vadd.f32 %v2640, %v3084
        %v3086 = vpop.f32.mrf.mxu0
        %v3087 = vpop.f32.mrf.mxu0
        %v3088 = vadd.f32 %v2640, %v3087
        %v3089 = vpop.f32.mrf.mxu0
        %3090 = vmatprep.mubr.bf16.mxu0 %v2412
        %3091 = vmatmul.mubr.bf16.gmra.mxu0 %v2411
        %v3092 = vpop.f32.mrf.mxu0
        %v3093 = vadd.f32 %v2640, %v3092
        %v3094 = vpop.f32.mrf.mxu0
        %v3095 = vpop.f32.mrf.mxu0
        %v3096 = vadd.f32 %v2640, %v3095
        %v3097 = vpop.f32.mrf.mxu0
        %3098 = vmatprep.mubr.bf16.mxu0 %v2420
        %3099 = vmatmul.mubr.bf16.gmra.mxu0 %v2419
        %v3100 = vpop.f32.mrf.mxu0
        %v3101 = vadd.f32 %v2640, %v3100
        %v3102 = vpop.f32.mrf.mxu0
        %v3103 = vpop.f32.mrf.mxu0
        %v3104 = vadd.f32 %v2640, %v3103
        %v3105 = vpop.f32.mrf.mxu0
        %3106 = vmatprep.mubr.bf16.mxu0 %v2428
        %3107 = vmatmul.mubr.bf16.gmra.mxu0 %v2427
        %v3108 = vpop.f32.mrf.mxu0
        %v3109 = vadd.f32 %v2640, %v3108
        %v3110 = vpop.f32.mrf.mxu0
        %v3111 = vpop.f32.mrf.mxu0
        %v3112 = vadd.f32 %v2640, %v3111
        %v3113 = vpop.f32.mrf.mxu0
        %3114 = vmatprep.mubr.bf16.mxu0 %v2436
        %3115 = vmatmul.mubr.bf16.gmra.mxu0 %v2435
        %v3116 = vpop.f32.mrf.mxu0
        %v3117 = vadd.f32 %v2640, %v3116
        %v3118 = vpop.f32.mrf.mxu0
        %v3119 = vpop.f32.mrf.mxu0
        %v3120 = vadd.f32 %v2640, %v3119
        %v3121 = vpop.f32.mrf.mxu0
        %3122 = vmatprep.mubr.bf16.mxu0 %v2444
        %3123 = vmatmul.mubr.bf16.gmra.mxu0 %v2443
        %v3124 = vpop.f32.mrf.mxu0
        %v3125 = vadd.f32 %v2640, %v3124
        %v3126 = vpop.f32.mrf.mxu0
        %v3127 = vpop.f32.mrf.mxu0
        %v3128 = vadd.f32 %v2640, %v3127
        %v3129 = vpop.f32.mrf.mxu0
        %3130 = vmatprep.mubr.bf16.mxu0 %v2452
        %3131 = vmatmul.mubr.bf16.gmra.mxu0 %v2451
        %v3132 = vpop.f32.mrf.mxu0
        %v3133 = vadd.f32 %v2640, %v3132
        %v3134 = vpop.f32.mrf.mxu0
        %v3135 = vpop.f32.mrf.mxu0
        %v3136 = vadd.f32 %v2640, %v3135
        %v3137 = vpop.f32.mrf.mxu0
        %3138 = vmatprep.mubr.bf16.mxu0 %v2460
        %3139 = vmatmul.mubr.bf16.gmra.mxu0 %v2459
        %v3140 = vpop.f32.mrf.mxu0
        %v3141 = vadd.f32 %v2640, %v3140
        %v3142 = vpop.f32.mrf.mxu0
        %v3143 = vpop.f32.mrf.mxu0
        %v3144 = vadd.f32 %v2640, %v3143
        %v3145 = vpop.f32.mrf.mxu0
        %3146 = vmatprep.mubr.bf16.mxu0 %v2468
        %3147 = vmatmul.mubr.bf16.gmra.mxu0 %v2467
        %v3148 = vpop.f32.mrf.mxu0
        %v3149 = vadd.f32 %v2640, %v3148
        %v3150 = vpop.f32.mrf.mxu0
        %v3151 = vpop.f32.mrf.mxu0
        %v3152 = vadd.f32 %v2640, %v3151
        %v3153 = vpop.f32.mrf.mxu0
        %3154 = vmatprep.mubr.bf16.mxu0 %v2476
        %3155 = vmatmul.mubr.bf16.gmra.mxu0 %v2475
        %v3156 = vpop.f32.mrf.mxu0
        %v3157 = vadd.f32 %v2640, %v3156
        %v3158 = vpop.f32.mrf.mxu0
        %v3159 = vpop.f32.mrf.mxu0
        %v3160 = vadd.f32 %v2640, %v3159
        %v3161 = vpop.f32.mrf.mxu0
        %3162 = vmatprep.mubr.bf16.mxu0 %v2484
        %3163 = vmatmul.mubr.bf16.gmra.mxu0 %v2483
        %v3164 = vpop.f32.mrf.mxu0
        %v3165 = vadd.f32 %v2640, %v3164
        %v3166 = vpop.f32.mrf.mxu0
        %v3167 = vpop.f32.mrf.mxu0
        %v3168 = vadd.f32 %v2640, %v3167
        %v3169 = vpop.f32.mrf.mxu0
        %3170 = vmatprep.mubr.bf16.mxu0 %v2492
        %3171 = vmatmul.mubr.bf16.gmra.mxu0 %v2491
        %v3172 = vpop.f32.mrf.mxu0
        %v3173 = vadd.f32 %v2640, %v3172
        %v3174 = vpop.f32.mrf.mxu0
        %v3175 = vpop.f32.mrf.mxu0
        %v3176 = vadd.f32 %v2640, %v3175
        %v3177 = vpop.f32.mrf.mxu0
        %3178 = vmatprep.mubr.bf16.mxu0 %v2500
        %3179 = vmatmul.mubr.bf16.gmra.mxu0 %v2499
        %v3180 = vpop.f32.mrf.mxu0
        %v3181 = vadd.f32 %v2640, %v3180
        %v3182 = vpop.f32.mrf.mxu0
        %v3183 = vpop.f32.mrf.mxu0
        %v3184 = vadd.f32 %v2640, %v3183
        %v3185 = vpop.f32.mrf.mxu0
        %3186 = vdwg.mxu0
        %3187 = vmatprep.subr.bf16.mxu0 0
        %3188 = vmatpush1.bf16.msra.mxu0 %v2921
        %3189 = vmatprep.subr.bf16.mxu0 0
        %3190 = vmatpush1.bf16.msra.mxu0 %v2920
        %3191 = vmatprep.subr.bf16.mxu0 0
        %3192 = vmatpush1.bf16.msra.mxu0 %v2919
        %3193 = vmatprep.subr.bf16.mxu0 0
        %3194 = vmatpush1.bf16.msra.mxu0 %v2918
        %3195 = vmatprep.subr.bf16.mxu0 0
        %3196 = vmatpush1.bf16.msra.mxu0 %v2917
        %3197 = vmatprep.subr.bf16.mxu0 0
        %3198 = vmatpush1.bf16.msra.mxu0 %v2916
        %3199 = vmatprep.subr.bf16.mxu0 0
        %3200 = vmatpush1.bf16.msra.mxu0 %v2915
        %3201 = vmatprep.subr.bf16.mxu0 0
        %3202 = vmatpush1.bf16.msra.mxu0 %v2914
        %3203 = vmatprep.subr.bf16.mxu0 0
        %3204 = vmatpush2.bf16.msra.mxu0 %v2929
        %3205 = vmatprep.subr.bf16.mxu0 0
        %3206 = vmatpush2.bf16.msra.mxu0 %v2928
        %3207 = vmatprep.subr.bf16.mxu0 0
        %3208 = vmatpush2.bf16.msra.mxu0 %v2927
        %3209 = vmatprep.subr.bf16.mxu0 0
        %3210 = vmatpush2.bf16.msra.mxu0 %v2926
        %3211 = vmatprep.subr.bf16.mxu0 0
        %3212 = vmatpush2.bf16.msra.mxu0 %v2925
        %3213 = vmatprep.subr.bf16.mxu0 0
        %3214 = vmatpush2.bf16.msra.mxu0 %v2924
        %3215 = vmatprep.subr.bf16.mxu0 0
        %3216 = vmatpush2.bf16.msra.mxu0 %v2923
        %3217 = vmatprep.subr.bf16.mxu0 0
        %3218 = vmatpush2.bf16.msra.mxu0 %v2922
        %3219 = vmatprep.mubr.bf16.mxu0 %v2382
        %3220 = vmatmul.mubr.bf16.gmra.mxu0 %v2381
        %v3221 = vpop.f32.mrf.mxu0
        %v3222 = vadd.f32 %v3061, %v3221
        %v3223 = vpop.f32.mrf.mxu0
        %v3224 = vpop.f32.mrf.mxu0
        %v3225 = vadd.f32 %v3064, %v3224
        %v3226 = vpop.f32.mrf.mxu0
        %3227 = vmatprep.mubr.bf16.mxu0 %v2390
        %3228 = vmatmul.mubr.bf16.gmra.mxu0 %v2389
        %v3229 = vpop.f32.mrf.mxu0
        %v3230 = vadd.f32 %v3069, %v3229
        %v3231 = vpop.f32.mrf.mxu0
        %v3232 = vpop.f32.mrf.mxu0
        %v3233 = vadd.f32 %v3072, %v3232
        %v3234 = vpop.f32.mrf.mxu0
        %3235 = vmatprep.mubr.bf16.mxu0 %v2398
        %3236 = vmatmul.mubr.bf16.gmra.mxu0 %v2397
        %v3237 = vpop.f32.mrf.mxu0
        %v3238 = vadd.f32 %v3077, %v3237
        %v3239 = vpop.f32.mrf.mxu0
        %v3240 = vpop.f32.mrf.mxu0
        %v3241 = vadd.f32 %v3080, %v3240
        %v3242 = vpop.f32.mrf.mxu0
        %3243 = vmatprep.mubr.bf16.mxu0 %v2406
        %3244 = vmatmul.mubr.bf16.gmra.mxu0 %v2405
        %v3245 = vpop.f32.mrf.mxu0
        %v3246 = vadd.f32 %v3085, %v3245
        %v3247 = vpop.f32.mrf.mxu0
        %v3248 = vpop.f32.mrf.mxu0
        %v3249 = vadd.f32 %v3088, %v3248
        %v3250 = vpop.f32.mrf.mxu0
        %3251 = vmatprep.mubr.bf16.mxu0 %v2414
        %3252 = vmatmul.mubr.bf16.gmra.mxu0 %v2413
        %v3253 = vpop.f32.mrf.mxu0
        %v3254 = vadd.f32 %v3093, %v3253
        %v3255 = vpop.f32.mrf.mxu0
        %v3256 = vpop.f32.mrf.mxu0
        %v3257 = vadd.f32 %v3096, %v3256
        %v3258 = vpop.f32.mrf.mxu0
        %3259 = vmatprep.mubr.bf16.mxu0 %v2422
        %3260 = vmatmul.mubr.bf16.gmra.mxu0 %v2421
        %v3261 = vpop.f32.mrf.mxu0
        %v3262 = vadd.f32 %v3101, %v3261
        %v3263 = vpop.f32.mrf.mxu0
        %v3264 = vpop.f32.mrf.mxu0
        %v3265 = vadd.f32 %v3104, %v3264
        %v3266 = vpop.f32.mrf.mxu0
        %3267 = vmatprep.mubr.bf16.mxu0 %v2430
        %3268 = vmatmul.mubr.bf16.gmra.mxu0 %v2429
        %v3269 = vpop.f32.mrf.mxu0
        %v3270 = vadd.f32 %v3109, %v3269
        %v3271 = vpop.f32.mrf.mxu0
        %v3272 = vpop.f32.mrf.mxu0
        %v3273 = vadd.f32 %v3112, %v3272
        %v3274 = vpop.f32.mrf.mxu0
        %3275 = vmatprep.mubr.bf16.mxu0 %v2438
        %3276 = vmatmul.mubr.bf16.gmra.mxu0 %v2437
        %v3277 = vpop.f32.mrf.mxu0
        %v3278 = vadd.f32 %v3117, %v3277
        %v3279 = vpop.f32.mrf.mxu0
        %v3280 = vpop.f32.mrf.mxu0
        %v3281 = vadd.f32 %v3120, %v3280
        %v3282 = vpop.f32.mrf.mxu0
        %3283 = vmatprep.mubr.bf16.mxu0 %v2446
        %3284 = vmatmul.mubr.bf16.gmra.mxu0 %v2445
        %v3285 = vpop.f32.mrf.mxu0
        %v3286 = vadd.f32 %v3125, %v3285
        %v3287 = vpop.f32.mrf.mxu0
        %v3288 = vpop.f32.mrf.mxu0
        %v3289 = vadd.f32 %v3128, %v3288
        %v3290 = vpop.f32.mrf.mxu0
        %3291 = vmatprep.mubr.bf16.mxu0 %v2454
        %3292 = vmatmul.mubr.bf16.gmra.mxu0 %v2453
        %v3293 = vpop.f32.mrf.mxu0
        %v3294 = vadd.f32 %v3133, %v3293
        %v3295 = vpop.f32.mrf.mxu0
        %v3296 = vpop.f32.mrf.mxu0
        %v3297 = vadd.f32 %v3136, %v3296
        %v3298 = vpop.f32.mrf.mxu0
        %3299 = vmatprep.mubr.bf16.mxu0 %v2462
        %3300 = vmatmul.mubr.bf16.gmra.mxu0 %v2461
        %v3301 = vpop.f32.mrf.mxu0
        %v3302 = vadd.f32 %v3141, %v3301
        %v3303 = vpop.f32.mrf.mxu0
        %v3304 = vpop.f32.mrf.mxu0
        %v3305 = vadd.f32 %v3144, %v3304
        %v3306 = vpop.f32.mrf.mxu0
        %3307 = vmatprep.mubr.bf16.mxu0 %v2470
        %3308 = vmatmul.mubr.bf16.gmra.mxu0 %v2469
        %v3309 = vpop.f32.mrf.mxu0
        %v3310 = vadd.f32 %v3149, %v3309
        %v3311 = vpop.f32.mrf.mxu0
        %v3312 = vpop.f32.mrf.mxu0
        %v3313 = vadd.f32 %v3152, %v3312
        %v3314 = vpop.f32.mrf.mxu0
        %3315 = vmatprep.mubr.bf16.mxu0 %v2478
        %3316 = vmatmul.mubr.bf16.gmra.mxu0 %v2477
        %v3317 = vpop.f32.mrf.mxu0
        %v3318 = vadd.f32 %v3157, %v3317
        %v3319 = vpop.f32.mrf.mxu0
        %v3320 = vpop.f32.mrf.mxu0
        %v3321 = vadd.f32 %v3160, %v3320
        %v3322 = vpop.f32.mrf.mxu0
        %3323 = vmatprep.mubr.bf16.mxu0 %v2486
        %3324 = vmatmul.mubr.bf16.gmra.mxu0 %v2485
        %v3325 = vpop.f32.mrf.mxu0
        %v3326 = vadd.f32 %v3165, %v3325
        %v3327 = vpop.f32.mrf.mxu0
        %v3328 = vpop.f32.mrf.mxu0
        %v3329 = vadd.f32 %v3168, %v3328
        %v3330 = vpop.f32.mrf.mxu0
        %3331 = vmatprep.mubr.bf16.mxu0 %v2494
        %3332 = vmatmul.mubr.bf16.gmra.mxu0 %v2493
        %v3333 = vpop.f32.mrf.mxu0
        %v3334 = vadd.f32 %v3173, %v3333
        %v3335 = vpop.f32.mrf.mxu0
        %v3336 = vpop.f32.mrf.mxu0
        %v3337 = vadd.f32 %v3176, %v3336
        %v3338 = vpop.f32.mrf.mxu0
        %3339 = vmatprep.mubr.bf16.mxu0 %v2502
        %3340 = vmatmul.mubr.bf16.gmra.mxu0 %v2501
        %v3341 = vpop.f32.mrf.mxu0
        %v3342 = vadd.f32 %v3181, %v3341
        %v3343 = vpop.f32.mrf.mxu0
        %v3344 = vpop.f32.mrf.mxu0
        %v3345 = vadd.f32 %v3184, %v3344
        %v3346 = vpop.f32.mrf.mxu0
        %3347 = vdwg.mxu0
        %3348 = vmatprep.subr.bf16.mxu0 0
        %3349 = vmatpush1.bf16.msra.mxu0 %v2937
        %3350 = vmatprep.subr.bf16.mxu0 0
        %3351 = vmatpush1.bf16.msra.mxu0 %v2936
        %3352 = vmatprep.subr.bf16.mxu0 0
        %3353 = vmatpush1.bf16.msra.mxu0 %v2935
        %3354 = vmatprep.subr.bf16.mxu0 0
        %3355 = vmatpush1.bf16.msra.mxu0 %v2934
        %3356 = vmatprep.subr.bf16.mxu0 0
        %3357 = vmatpush1.bf16.msra.mxu0 %v2933
        %3358 = vmatprep.subr.bf16.mxu0 0
        %3359 = vmatpush1.bf16.msra.mxu0 %v2932
        %3360 = vmatprep.subr.bf16.mxu0 0
        %3361 = vmatpush1.bf16.msra.mxu0 %v2931
        %3362 = vmatprep.subr.bf16.mxu0 0
        %3363 = vmatpush1.bf16.msra.mxu0 %v2930
        %3364 = vmatprep.subr.bf16.mxu0 0
        %3365 = vmatpush2.bf16.msra.mxu0 %v2945
        %3366 = vmatprep.subr.bf16.mxu0 0
        %3367 = vmatpush2.bf16.msra.mxu0 %v2944
        %3368 = vmatprep.subr.bf16.mxu0 0
        %3369 = vmatpush2.bf16.msra.mxu0 %v2943
        %3370 = vmatprep.subr.bf16.mxu0 0
        %3371 = vmatpush2.bf16.msra.mxu0 %v2942
        %3372 = vmatprep.subr.bf16.mxu0 0
        %3373 = vmatpush2.bf16.msra.mxu0 %v2941
        %3374 = vmatprep.subr.bf16.mxu0 0
        %3375 = vmatpush2.bf16.msra.mxu0 %v2940
        %3376 = vmatprep.subr.bf16.mxu0 0
        %3377 = vmatpush2.bf16.msra.mxu0 %v2939
        %3378 = vmatprep.subr.bf16.mxu0 0
        %3379 = vmatpush2.bf16.msra.mxu0 %v2938
        %3380 = vmatprep.mubr.bf16.mxu0 %v2384
        %3381 = vmatmul.mubr.bf16.gmra.mxu0 %v2383
        %v3382 = vpop.f32.mrf.mxu0
        %v3383 = vadd.f32 %v3222, %v3382
        %v3384 = vpop.f32.mrf.mxu0
        %v3385 = vpop.f32.mrf.mxu0
        %v3386 = vadd.f32 %v3225, %v3385
        %v3387 = vpop.f32.mrf.mxu0
        %3388 = vmatprep.mubr.bf16.mxu0 %v2392
        %3389 = vmatmul.mubr.bf16.gmra.mxu0 %v2391
        %v3390 = vpop.f32.mrf.mxu0
        %v3391 = vadd.f32 %v3230, %v3390
        %v3392 = vpop.f32.mrf.mxu0
        %v3393 = vpop.f32.mrf.mxu0
        %v3394 = vadd.f32 %v3233, %v3393
        %v3395 = vpop.f32.mrf.mxu0
        %3396 = vmatprep.mubr.bf16.mxu0 %v2400
        %3397 = vmatmul.mubr.bf16.gmra.mxu0 %v2399
        %v3398 = vpop.f32.mrf.mxu0
        %v3399 = vadd.f32 %v3238, %v3398
        %v3400 = vpop.f32.mrf.mxu0
        %v3401 = vpop.f32.mrf.mxu0
        %v3402 = vadd.f32 %v3241, %v3401
        %v3403 = vpop.f32.mrf.mxu0
        %3404 = vmatprep.mubr.bf16.mxu0 %v2408
        %3405 = vmatmul.mubr.bf16.gmra.mxu0 %v2407
        %v3406 = vpop.f32.mrf.mxu0
        %v3407 = vadd.f32 %v3246, %v3406
        %v3408 = vpop.f32.mrf.mxu0
        %v3409 = vpop.f32.mrf.mxu0
        %v3410 = vadd.f32 %v3249, %v3409
        %v3411 = vpop.f32.mrf.mxu0
        %3412 = vmatprep.mubr.bf16.mxu0 %v2416
        %3413 = vmatmul.mubr.bf16.gmra.mxu0 %v2415
        %v3414 = vpop.f32.mrf.mxu0
        %v3415 = vadd.f32 %v3254, %v3414
        %v3416 = vpop.f32.mrf.mxu0
        %v3417 = vpop.f32.mrf.mxu0
        %v3418 = vadd.f32 %v3257, %v3417
        %v3419 = vpop.f32.mrf.mxu0
        %3420 = vmatprep.mubr.bf16.mxu0 %v2424
        %3421 = vmatmul.mubr.bf16.gmra.mxu0 %v2423
        %v3422 = vpop.f32.mrf.mxu0
        %v3423 = vadd.f32 %v3262, %v3422
        %v3424 = vpop.f32.mrf.mxu0
        %v3425 = vpop.f32.mrf.mxu0
        %v3426 = vadd.f32 %v3265, %v3425
        %v3427 = vpop.f32.mrf.mxu0
        %3428 = vmatprep.mubr.bf16.mxu0 %v2432
        %3429 = vmatmul.mubr.bf16.gmra.mxu0 %v2431
        %v3430 = vpop.f32.mrf.mxu0
        %v3431 = vadd.f32 %v3270, %v3430
        %v3432 = vpop.f32.mrf.mxu0
        %v3433 = vpop.f32.mrf.mxu0
        %v3434 = vadd.f32 %v3273, %v3433
        %v3435 = vpop.f32.mrf.mxu0
        %3436 = vmatprep.mubr.bf16.mxu0 %v2440
        %3437 = vmatmul.mubr.bf16.gmra.mxu0 %v2439
        %v3438 = vpop.f32.mrf.mxu0
        %v3439 = vadd.f32 %v3278, %v3438
        %v3440 = vpop.f32.mrf.mxu0
        %v3441 = vpop.f32.mrf.mxu0
        %v3442 = vadd.f32 %v3281, %v3441
        %v3443 = vpop.f32.mrf.mxu0
        %3444 = vmatprep.mubr.bf16.mxu0 %v2448
        %3445 = vmatmul.mubr.bf16.gmra.mxu0 %v2447
        %v3446 = vpop.f32.mrf.mxu0
        %v3447 = vadd.f32 %v3286, %v3446
        %v3448 = vpop.f32.mrf.mxu0
        %v3449 = vpop.f32.mrf.mxu0
        %v3450 = vadd.f32 %v3289, %v3449
        %v3451 = vpop.f32.mrf.mxu0
        %3452 = vmatprep.mubr.bf16.mxu0 %v2456
        %3453 = vmatmul.mubr.bf16.gmra.mxu0 %v2455
        %v3454 = vpop.f32.mrf.mxu0
        %v3455 = vadd.f32 %v3294, %v3454
        %v3456 = vpop.f32.mrf.mxu0
        %v3457 = vpop.f32.mrf.mxu0
        %v3458 = vadd.f32 %v3297, %v3457
        %v3459 = vpop.f32.mrf.mxu0
        %3460 = vmatprep.mubr.bf16.mxu0 %v2464
        %3461 = vmatmul.mubr.bf16.gmra.mxu0 %v2463
        %v3462 = vpop.f32.mrf.mxu0
        %v3463 = vadd.f32 %v3302, %v3462
        %v3464 = vpop.f32.mrf.mxu0
        %v3465 = vpop.f32.mrf.mxu0
        %v3466 = vadd.f32 %v3305, %v3465
        %v3467 = vpop.f32.mrf.mxu0
        %3468 = vmatprep.mubr.bf16.mxu0 %v2472
        %3469 = vmatmul.mubr.bf16.gmra.mxu0 %v2471
        %v3470 = vpop.f32.mrf.mxu0
        %v3471 = vadd.f32 %v3310, %v3470
        %v3472 = vpop.f32.mrf.mxu0
        %v3473 = vpop.f32.mrf.mxu0
        %v3474 = vadd.f32 %v3313, %v3473
        %v3475 = vpop.f32.mrf.mxu0
        %3476 = vmatprep.mubr.bf16.mxu0 %v2480
        %3477 = vmatmul.mubr.bf16.gmra.mxu0 %v2479
        %v3478 = vpop.f32.mrf.mxu0
        %v3479 = vadd.f32 %v3318, %v3478
        %v3480 = vpop.f32.mrf.mxu0
        %v3481 = vpop.f32.mrf.mxu0
        %v3482 = vadd.f32 %v3321, %v3481
        %v3483 = vpop.f32.mrf.mxu0
        %3484 = vmatprep.mubr.bf16.mxu0 %v2488
        %3485 = vmatmul.mubr.bf16.gmra.mxu0 %v2487
        %v3486 = vpop.f32.mrf.mxu0
        %v3487 = vadd.f32 %v3326, %v3486
        %v3488 = vpop.f32.mrf.mxu0
        %v3489 = vpop.f32.mrf.mxu0
        %v3490 = vadd.f32 %v3329, %v3489
        %v3491 = vpop.f32.mrf.mxu0
        %3492 = vmatprep.mubr.bf16.mxu0 %v2496
        %3493 = vmatmul.mubr.bf16.gmra.mxu0 %v2495
        %v3494 = vpop.f32.mrf.mxu0
        %v3495 = vadd.f32 %v3334, %v3494
        %v3496 = vpop.f32.mrf.mxu0
        %v3497 = vpop.f32.mrf.mxu0
        %v3498 = vadd.f32 %v3337, %v3497
        %v3499 = vpop.f32.mrf.mxu0
        %3500 = vmatprep.mubr.bf16.mxu0 %v2504
        %3501 = vmatmul.mubr.bf16.gmra.mxu0 %v2503
        %v3502 = vpop.f32.mrf.mxu0
        %v3503 = vadd.f32 %v3342, %v3502
        %v3504 = vpop.f32.mrf.mxu0
        %v3505 = vpop.f32.mrf.mxu0
        %v3506 = vadd.f32 %v3345, %v3505
        %v3507 = vpop.f32.mrf.mxu0
        %3508 = vdwg.mxu0
        %3509 = vmatprep.subr.bf16.mxu0 0
        %3510 = vmatpush1.bf16.msra.mxu0 %v2953
        %3511 = vmatprep.subr.bf16.mxu0 0
        %3512 = vmatpush1.bf16.msra.mxu0 %v2952
        %3513 = vmatprep.subr.bf16.mxu0 0
        %3514 = vmatpush1.bf16.msra.mxu0 %v2951
        %3515 = vmatprep.subr.bf16.mxu0 0
        %3516 = vmatpush1.bf16.msra.mxu0 %v2950
        %3517 = vmatprep.subr.bf16.mxu0 0
        %3518 = vmatpush1.bf16.msra.mxu0 %v2949
        %3519 = vmatprep.subr.bf16.mxu0 0
        %3520 = vmatpush1.bf16.msra.mxu0 %v2948
        %3521 = vmatprep.subr.bf16.mxu0 0
        %3522 = vmatpush1.bf16.msra.mxu0 %v2947
        %3523 = vmatprep.subr.bf16.mxu0 0
        %3524 = vmatpush1.bf16.msra.mxu0 %v2946
        %3525 = vmatprep.subr.bf16.mxu0 0
        %3526 = vmatpush2.bf16.msra.mxu0 %v2961
        %3527 = vmatprep.subr.bf16.mxu0 0
        %3528 = vmatpush2.bf16.msra.mxu0 %v2960
        %3529 = vmatprep.subr.bf16.mxu0 0
        %3530 = vmatpush2.bf16.msra.mxu0 %v2959
        %3531 = vmatprep.subr.bf16.mxu0 0
        %3532 = vmatpush2.bf16.msra.mxu0 %v2958
        %3533 = vmatprep.subr.bf16.mxu0 0
        %3534 = vmatpush2.bf16.msra.mxu0 %v2957
        %3535 = vmatprep.subr.bf16.mxu0 0
        %3536 = vmatpush2.bf16.msra.mxu0 %v2956
        %3537 = vmatprep.subr.bf16.mxu0 0
        %3538 = vmatpush2.bf16.msra.mxu0 %v2955
        %3539 = vmatprep.subr.bf16.mxu0 0
        %3540 = vmatpush2.bf16.msra.mxu0 %v2954
        %3541 = vmatprep.mubr.bf16.mxu0 %v2386
        %3542 = vmatmul.mubr.bf16.gmra.mxu0 %v2385
        %v3543 = vpop.f32.mrf.mxu0
        %v3544 = vadd.f32 %v3383, %v3543
        %v3545 = vpop.f32.mrf.mxu0
        %v3546 = vpop.f32.mrf.mxu0
        %v3547 = vadd.f32 %v3386, %v3546
        %v3548 = vpop.f32.mrf.mxu0
        %3549 = vmatprep.mubr.bf16.mxu0 %v2394
        %3550 = vmatmul.mubr.bf16.gmra.mxu0 %v2393
        %v3551 = vpop.f32.mrf.mxu0
        %v3552 = vadd.f32 %v3391, %v3551
        %v3553 = vpop.f32.mrf.mxu0
        %v3554 = vpop.f32.mrf.mxu0
        %v3555 = vadd.f32 %v3394, %v3554
        %v3556 = vpop.f32.mrf.mxu0
        %3557 = vmatprep.mubr.bf16.mxu0 %v2402
        %3558 = vmatmul.mubr.bf16.gmra.mxu0 %v2401
        %v3559 = vpop.f32.mrf.mxu0
        %v3560 = vadd.f32 %v3399, %v3559
        %v3561 = vpop.f32.mrf.mxu0
        %v3562 = vpop.f32.mrf.mxu0
        %v3563 = vadd.f32 %v3402, %v3562
        %v3564 = vpop.f32.mrf.mxu0
        %3565 = vmatprep.mubr.bf16.mxu0 %v2410
        %3566 = vmatmul.mubr.bf16.gmra.mxu0 %v2409
        %v3567 = vpop.f32.mrf.mxu0
        %v3568 = vadd.f32 %v3407, %v3567
        %v3569 = vpop.f32.mrf.mxu0
        %v3570 = vpop.f32.mrf.mxu0
        %v3571 = vadd.f32 %v3410, %v3570
        %v3572 = vpop.f32.mrf.mxu0
        %3573 = vmatprep.mubr.bf16.mxu0 %v2418
        %3574 = vmatmul.mubr.bf16.gmra.mxu0 %v2417
        %v3575 = vpop.f32.mrf.mxu0
        %v3576 = vadd.f32 %v3415, %v3575
        %v3577 = vpop.f32.mrf.mxu0
        %v3578 = vpop.f32.mrf.mxu0
        %v3579 = vadd.f32 %v3418, %v3578
        %v3580 = vpop.f32.mrf.mxu0
        %3581 = vmatprep.mubr.bf16.mxu0 %v2426
        %3582 = vmatmul.mubr.bf16.gmra.mxu0 %v2425
        %v3583 = vpop.f32.mrf.mxu0
        %v3584 = vadd.f32 %v3423, %v3583
        %v3585 = vpop.f32.mrf.mxu0
        %v3586 = vpop.f32.mrf.mxu0
        %v3587 = vadd.f32 %v3426, %v3586
        %v3588 = vpop.f32.mrf.mxu0
        %3589 = vmatprep.mubr.bf16.mxu0 %v2434
        %3590 = vmatmul.mubr.bf16.gmra.mxu0 %v2433
        %v3591 = vpop.f32.mrf.mxu0
        %v3592 = vadd.f32 %v3431, %v3591
        %v3593 = vpop.f32.mrf.mxu0
        %v3594 = vpop.f32.mrf.mxu0
        %v3595 = vadd.f32 %v3434, %v3594
        %v3596 = vpop.f32.mrf.mxu0
        %3597 = vmatprep.mubr.bf16.mxu0 %v2442
        %3598 = vmatmul.mubr.bf16.gmra.mxu0 %v2441
        %v3599 = vpop.f32.mrf.mxu0
        %v3600 = vadd.f32 %v3439, %v3599
        %v3601 = vpop.f32.mrf.mxu0
        %v3602 = vpop.f32.mrf.mxu0
        %v3603 = vadd.f32 %v3442, %v3602
        %v3604 = vpop.f32.mrf.mxu0
        %3605 = vmatprep.mubr.bf16.mxu0 %v2450
        %3606 = vmatmul.mubr.bf16.gmra.mxu0 %v2449
        %v3607 = vpop.f32.mrf.mxu0
        %v3608 = vadd.f32 %v3447, %v3607
        %v3609 = vpop.f32.mrf.mxu0
        %v3610 = vpop.f32.mrf.mxu0
        %v3611 = vadd.f32 %v3450, %v3610
        %v3612 = vpop.f32.mrf.mxu0
        %3613 = vmatprep.mubr.bf16.mxu0 %v2458
        %3614 = vmatmul.mubr.bf16.gmra.mxu0 %v2457
        %v3615 = vpop.f32.mrf.mxu0
        %v3616 = vadd.f32 %v3455, %v3615
        %v3617 = vpop.f32.mrf.mxu0
        %v3618 = vpop.f32.mrf.mxu0
        %v3619 = vadd.f32 %v3458, %v3618
        %v3620 = vpop.f32.mrf.mxu0
        %3621 = vmatprep.mubr.bf16.mxu0 %v2466
        %3622 = vmatmul.mubr.bf16.gmra.mxu0 %v2465
        %v3623 = vpop.f32.mrf.mxu0
        %v3624 = vadd.f32 %v3463, %v3623
        %v3625 = vpop.f32.mrf.mxu0
        %v3626 = vpop.f32.mrf.mxu0
        %v3627 = vadd.f32 %v3466, %v3626
        %v3628 = vpop.f32.mrf.mxu0
        %3629 = vmatprep.mubr.bf16.mxu0 %v2474
        %3630 = vmatmul.mubr.bf16.gmra.mxu0 %v2473
        %v3631 = vpop.f32.mrf.mxu0
        %v3632 = vadd.f32 %v3471, %v3631
        %v3633 = vpop.f32.mrf.mxu0
        %v3634 = vpop.f32.mrf.mxu0
        %v3635 = vadd.f32 %v3474, %v3634
        %v3636 = vpop.f32.mrf.mxu0
        %3637 = vmatprep.mubr.bf16.mxu0 %v2482
        %3638 = vmatmul.mubr.bf16.gmra.mxu0 %v2481
        %v3639 = vpop.f32.mrf.mxu0
        %v3640 = vadd.f32 %v3479, %v3639
        %v3641 = vpop.f32.mrf.mxu0
        %v3642 = vpop.f32.mrf.mxu0
        %v3643 = vadd.f32 %v3482, %v3642
        %v3644 = vpop.f32.mrf.mxu0
        %3645 = vmatprep.mubr.bf16.mxu0 %v2490
        %3646 = vmatmul.mubr.bf16.gmra.mxu0 %v2489
        %v3647 = vpop.f32.mrf.mxu0
        %v3648 = vadd.f32 %v3487, %v3647
        %v3649 = vpop.f32.mrf.mxu0
        %v3650 = vpop.f32.mrf.mxu0
        %v3651 = vadd.f32 %v3490, %v3650
        %v3652 = vpop.f32.mrf.mxu0
        %3653 = vmatprep.mubr.bf16.mxu0 %v2498
        %3654 = vmatmul.mubr.bf16.gmra.mxu0 %v2497
        %v3655 = vpop.f32.mrf.mxu0
        %v3656 = vadd.f32 %v3495, %v3655
        %v3657 = vpop.f32.mrf.mxu0
        %v3658 = vpop.f32.mrf.mxu0
        %v3659 = vadd.f32 %v3498, %v3658
        %v3660 = vpop.f32.mrf.mxu0
        %3661 = vmatprep.mubr.bf16.mxu0 %v2506
        %3662 = vmatmul.mubr.bf16.gmra.mxu0 %v2505
        %v3663 = vpop.f32.mrf.mxu0
        %v3664 = vadd.f32 %v3503, %v3663
        %v3665 = vpop.f32.mrf.mxu0
        %v3666 = vpop.f32.mrf.mxu0
        %v3667 = vadd.f32 %v3506, %v3666
        %v3668 = vpop.f32.mrf.mxu0
        %3669 = vdwg.mxu0
        %3670 = vst [vmem:[%s332] sm:$0xff] %v3544
        %3671 = vst [vmem:[%s332 + $0x8] sm:$0xff] %v3547
        %3672 = vst [vmem:[%s332 + $0x10] sm:$0xff] %v3552
        %3673 = vst [vmem:[%s332 + $0x18] sm:$0xff] %v3555
        %3674 = vst [vmem:[%s332 + $0x20] sm:$0xff] %v3560
        %3675 = vst [vmem:[%s332 + $0x28] sm:$0xff] %v3563
        %3676 = vst [vmem:[%s332 + $0x30] sm:$0xff] %v3568
        %3677 = vst [vmem:[%s332 + $0x38] sm:$0xff] %v3571
        %3678 = vst [vmem:[%s332 + $0x40] sm:$0xff] %v3576
        %3679 = vst [vmem:[%s332 + $0x48] sm:$0xff] %v3579
        %3680 = vst [vmem:[%s332 + $0x50] sm:$0xff] %v3584
        %3681 = vst [vmem:[%s332 + $0x58] sm:$0xff] %v3587
        %3682 = vst [vmem:[%s332 + $0x60] sm:$0xff] %v3592
        %3683 = vst [vmem:[%s332 + $0x68] sm:$0xff] %v3595
        %3684 = vst [vmem:[%s332 + $0x70] sm:$0xff] %v3600
        %3685 = vst [vmem:[%s332 + $0x78] sm:$0xff] %v3603
        %3686 = vst [vmem:[%s332 + $0x80] sm:$0xff] %v3608
        %3687 = vst [vmem:[%s332 + $0x88] sm:$0xff] %v3611
        %3688 = vst [vmem:[%s332 + $0x90] sm:$0xff] %v3616
        %3689 = vst [vmem:[%s332 + $0x98] sm:$0xff] %v3619
        %3690 = vst [vmem:[%s332 + $0xa0] sm:$0xff] %v3624
        %3691 = vst [vmem:[%s332 + $0xa8] sm:$0xff] %v3627
        %3692 = vst [vmem:[%s332 + $0xb0] sm:$0xff] %v3632
        %3693 = vst [vmem:[%s332 + $0xb8] sm:$0xff] %v3635
        %3694 = vst [vmem:[%s332 + $0xc0] sm:$0xff] %v3640
        %3695 = vst [vmem:[%s332 + $0xc8] sm:$0xff] %v3643
        %3696 = vst [vmem:[%s332 + $0xd0] sm:$0xff] %v3648
        %3697 = vst [vmem:[%s332 + $0xd8] sm:$0xff] %v3651
        %3698 = vst [vmem:[%s332 + $0xe0] sm:$0xff] %v3656
        %3699 = vst [vmem:[%s332 + $0xe8] sm:$0xff] %v3659
        %3700 = vst [vmem:[%s332 + $0xf0] sm:$0xff] %v3664
        %3701 = vst [vmem:[%s332 + $0xf8] sm:$0xff] %v3667
        %v3702 = vld [vmem:[%s5] sm:$0xff]
        %v3703 = vld [vmem:[%s5 + $0x8] sm:$0xff]
        %v3704 = vld [vmem:[%s5 + $0x10] sm:$0xff]
        %v3705 = vld [vmem:[%s5 + $0x18] sm:$0xff]
        %v3706 = vld [vmem:[%s5 + $0x20] sm:$0xff]
        %v3707 = vld [vmem:[%s5 + $0x28] sm:$0xff]
        %v3708 = vld [vmem:[%s5 + $0x30] sm:$0xff]
        %v3709 = vld [vmem:[%s5 + $0x38] sm:$0xff]
        %v3710 = vld [vmem:[%s6] sm:$0xf]
        %v3711 = vld [vmem:[%s6 + $0x4] sm:$0xf]
        %v3712 = vld [vmem:[%s6 + $0x8] sm:$0xf]
        %v3713 = vld [vmem:[%s6 + $0xc] sm:$0xf]
        %v3714 = vld [vmem:[%s6 + $0x10] sm:$0xf]
        %v3715 = vld [vmem:[%s6 + $0x14] sm:$0xf]
        %v3716 = vld [vmem:[%s6 + $0x18] sm:$0xf]
        %v3717 = vld [vmem:[%s6 + $0x1c] sm:$0xf]
        %v3718 = vld [vmem:[%s6 + $0x20] sm:$0xf]
        %v3719 = vld [vmem:[%s6 + $0x24] sm:$0xf]
        %v3720 = vld [vmem:[%s6 + $0x28] sm:$0xf]
        %v3721 = vld [vmem:[%s6 + $0x2c] sm:$0xf]
        %v3722 = vld [vmem:[%s6 + $0x30] sm:$0xf]
        %v3723 = vld [vmem:[%s6 + $0x34] sm:$0xf]
        %v3724 = vld [vmem:[%s6 + $0x38] sm:$0xf]
        %v3725 = vld [vmem:[%s6 + $0x3c] sm:$0xf]
        %v3726 = vld [vmem:[%s6 + $0x40] sm:$0xf]
        %v3727 = vld [vmem:[%s6 + $0x44] sm:$0xf]
        %v3728 = vld [vmem:[%s6 + $0x48] sm:$0xf]
        %v3729 = vld [vmem:[%s6 + $0x4c] sm:$0xf]
        %v3730 = vld [vmem:[%s6 + $0x50] sm:$0xf]
        %v3731 = vld [vmem:[%s6 + $0x54] sm:$0xf]
        %v3732 = vld [vmem:[%s6 + $0x58] sm:$0xf]
        %v3733 = vld [vmem:[%s6 + $0x5c] sm:$0xf]
        %v3734 = vld [vmem:[%s6 + $0x60] sm:$0xf]
        %v3735 = vld [vmem:[%s6 + $0x64] sm:$0xf]
        %v3736 = vld [vmem:[%s6 + $0x68] sm:$0xf]
        %v3737 = vld [vmem:[%s6 + $0x6c] sm:$0xf]
        %v3738 = vld [vmem:[%s6 + $0x70] sm:$0xf]
        %v3739 = vld [vmem:[%s6 + $0x74] sm:$0xf]
        %v3740 = vld [vmem:[%s6 + $0x78] sm:$0xf]
        %v3741 = vld [vmem:[%s6 + $0x7c] sm:$0xf]
        %v3742 = vld [vmem:[%s6 + $0x80] sm:$0xf]
        %v3743 = vld [vmem:[%s6 + $0x84] sm:$0xf]
        %v3744 = vld [vmem:[%s6 + $0x88] sm:$0xf]
        %v3745 = vld [vmem:[%s6 + $0x8c] sm:$0xf]
        %v3746 = vld [vmem:[%s6 + $0x90] sm:$0xf]
        %v3747 = vld [vmem:[%s6 + $0x94] sm:$0xf]
        %v3748 = vld [vmem:[%s6 + $0x98] sm:$0xf]
        %v3749 = vld [vmem:[%s6 + $0x9c] sm:$0xf]
        %v3750 = vld [vmem:[%s6 + $0xa0] sm:$0xf]
        %v3751 = vld [vmem:[%s6 + $0xa4] sm:$0xf]
        %v3752 = vld [vmem:[%s6 + $0xa8] sm:$0xf]
        %v3753 = vld [vmem:[%s6 + $0xac] sm:$0xf]
        %v3754 = vld [vmem:[%s6 + $0xb0] sm:$0xf]
        %v3755 = vld [vmem:[%s6 + $0xb4] sm:$0xf]
        %v3756 = vld [vmem:[%s6 + $0xb8] sm:$0xf]
        %v3757 = vld [vmem:[%s6 + $0xbc] sm:$0xf]
        %v3758 = vld [vmem:[%s6 + $0xc0] sm:$0xf]
        %v3759 = vld [vmem:[%s6 + $0xc4] sm:$0xf]
        %v3760 = vld [vmem:[%s6 + $0xc8] sm:$0xf]
        %v3761 = vld [vmem:[%s6 + $0xcc] sm:$0xf]
        %v3762 = vld [vmem:[%s6 + $0xd0] sm:$0xf]
        %v3763 = vld [vmem:[%s6 + $0xd4] sm:$0xf]
        %v3764 = vld [vmem:[%s6 + $0xd8] sm:$0xf]
        %v3765 = vld [vmem:[%s6 + $0xdc] sm:$0xf]
        %v3766 = vld [vmem:[%s6 + $0xe0] sm:$0xf]
        %v3767 = vld [vmem:[%s6 + $0xe4] sm:$0xf]
        %v3768 = vld [vmem:[%s6 + $0xe8] sm:$0xf]
        %v3769 = vld [vmem:[%s6 + $0xec] sm:$0xf]
        %v3770 = vld [vmem:[%s6 + $0xf0] sm:$0xf]
        %v3771 = vld [vmem:[%s6 + $0xf4] sm:$0xf]
        %v3772 = vld [vmem:[%s6 + $0xf8] sm:$0xf]
        %v3773 = vld [vmem:[%s6 + $0xfc] sm:$0xf]
        %v3774 = vld [vmem:[%s6 + $0x100] sm:$0xf]
        %v3775 = vld [vmem:[%s6 + $0x104] sm:$0xf]
        %v3776 = vld [vmem:[%s6 + $0x108] sm:$0xf]
        %v3777 = vld [vmem:[%s6 + $0x10c] sm:$0xf]
        %v3778 = vld [vmem:[%s6 + $0x110] sm:$0xf]
        %v3779 = vld [vmem:[%s6 + $0x114] sm:$0xf]
        %v3780 = vld [vmem:[%s6 + $0x118] sm:$0xf]
        %v3781 = vld [vmem:[%s6 + $0x11c] sm:$0xf]
        %v3782 = vld [vmem:[%s6 + $0x120] sm:$0xf]
        %v3783 = vld [vmem:[%s6 + $0x124] sm:$0xf]
        %v3784 = vld [vmem:[%s6 + $0x128] sm:$0xf]
        %v3785 = vld [vmem:[%s6 + $0x12c] sm:$0xf]
        %v3786 = vld [vmem:[%s6 + $0x130] sm:$0xf]
        %v3787 = vld [vmem:[%s6 + $0x134] sm:$0xf]
        %v3788 = vld [vmem:[%s6 + $0x138] sm:$0xf]
        %v3789 = vld [vmem:[%s6 + $0x13c] sm:$0xf]
        %v3790 = vld [vmem:[%s6 + $0x140] sm:$0xf]
        %v3791 = vld [vmem:[%s6 + $0x144] sm:$0xf]
        %v3792 = vld [vmem:[%s6 + $0x148] sm:$0xf]
        %v3793 = vld [vmem:[%s6 + $0x14c] sm:$0xf]
        %v3794 = vld [vmem:[%s6 + $0x150] sm:$0xf]
        %v3795 = vld [vmem:[%s6 + $0x154] sm:$0xf]
        %v3796 = vld [vmem:[%s6 + $0x158] sm:$0xf]
        %v3797 = vld [vmem:[%s6 + $0x15c] sm:$0xf]
        %v3798 = vld [vmem:[%s6 + $0x160] sm:$0xf]
        %v3799 = vld [vmem:[%s6 + $0x164] sm:$0xf]
        %v3800 = vld [vmem:[%s6 + $0x168] sm:$0xf]
        %v3801 = vld [vmem:[%s6 + $0x16c] sm:$0xf]
        %v3802 = vld [vmem:[%s6 + $0x170] sm:$0xf]
        %v3803 = vld [vmem:[%s6 + $0x174] sm:$0xf]
        %v3804 = vld [vmem:[%s6 + $0x178] sm:$0xf]
        %v3805 = vld [vmem:[%s6 + $0x17c] sm:$0xf]
        %v3806 = vld [vmem:[%s6 + $0x180] sm:$0xf]
        %v3807 = vld [vmem:[%s6 + $0x184] sm:$0xf]
        %v3808 = vld [vmem:[%s6 + $0x188] sm:$0xf]
        %v3809 = vld [vmem:[%s6 + $0x18c] sm:$0xf]
        %v3810 = vld [vmem:[%s6 + $0x190] sm:$0xf]
        %v3811 = vld [vmem:[%s6 + $0x194] sm:$0xf]
        %v3812 = vld [vmem:[%s6 + $0x198] sm:$0xf]
        %v3813 = vld [vmem:[%s6 + $0x19c] sm:$0xf]
        %v3814 = vld [vmem:[%s6 + $0x1a0] sm:$0xf]
        %v3815 = vld [vmem:[%s6 + $0x1a4] sm:$0xf]
        %v3816 = vld [vmem:[%s6 + $0x1a8] sm:$0xf]
        %v3817 = vld [vmem:[%s6 + $0x1ac] sm:$0xf]
        %v3818 = vld [vmem:[%s6 + $0x1b0] sm:$0xf]
        %v3819 = vld [vmem:[%s6 + $0x1b4] sm:$0xf]
        %v3820 = vld [vmem:[%s6 + $0x1b8] sm:$0xf]
        %v3821 = vld [vmem:[%s6 + $0x1bc] sm:$0xf]
        %v3822 = vld [vmem:[%s6 + $0x1c0] sm:$0xf]
        %v3823 = vld [vmem:[%s6 + $0x1c4] sm:$0xf]
        %v3824 = vld [vmem:[%s6 + $0x1c8] sm:$0xf]
        %v3825 = vld [vmem:[%s6 + $0x1cc] sm:$0xf]
        %v3826 = vld [vmem:[%s6 + $0x1d0] sm:$0xf]
        %v3827 = vld [vmem:[%s6 + $0x1d4] sm:$0xf]
        %v3828 = vld [vmem:[%s6 + $0x1d8] sm:$0xf]
        %v3829 = vld [vmem:[%s6 + $0x1dc] sm:$0xf]
        %v3830 = vld [vmem:[%s6 + $0x1e0] sm:$0xf]
        %v3831 = vld [vmem:[%s6 + $0x1e4] sm:$0xf]
        %v3832 = vld [vmem:[%s6 + $0x1e8] sm:$0xf]
        %v3833 = vld [vmem:[%s6 + $0x1ec] sm:$0xf]
        %v3834 = vld [vmem:[%s6 + $0x1f0] sm:$0xf]
        %v3835 = vld [vmem:[%s6 + $0x1f4] sm:$0xf]
        %v3836 = vld [vmem:[%s6 + $0x1f8] sm:$0xf]
        %v3837 = vld [vmem:[%s6 + $0x1fc] sm:$0xf]
        %v3838 = vld [vmem:[%s7] sm:$0x1]
        %v3840 = vlaneseq
        %v3841 = vshrl.u32 %v3840, 7
        %v3842 = vsub.s32 0, %v3841
        %v3843 = vrot.slane %v3838, %v3842
        %v3853 = vunpack.c.l.b16 %v3702
        %v3854 = vunpack.c.h.b16 %v3702
        %v3855 = vunpack.c.l.b16 %v3703
        %v3856 = vunpack.c.h.b16 %v3703
        %v3857 = vunpack.c.l.b16 %v3704
        %v3858 = vunpack.c.h.b16 %v3704
        %v3859 = vunpack.c.l.b16 %v3705
        %v3860 = vunpack.c.h.b16 %v3705
        %v3861 = vunpack.c.l.b16 %v3706
        %v3862 = vunpack.c.h.b16 %v3706
        %v3863 = vunpack.c.l.b16 %v3707
        %v3864 = vunpack.c.h.b16 %v3707
        %v3865 = vunpack.c.l.b16 %v3708
        %v3866 = vunpack.c.h.b16 %v3708
        %v3867 = vunpack.c.l.b16 %v3709
        %v3868 = vunpack.c.h.b16 %v3709
        %v3869 = vpack.c.b16 %v3861, %v3853
        %v3870 = vpack.c.b16 %v3862, %v3854
        %v3871 = vpack.c.b16 %v3863, %v3855
        %v3872 = vpack.c.b16 %v3864, %v3856
        %v3873 = vpack.c.b16 %v3865, %v3857
        %v3874 = vpack.c.b16 %v3866, %v3858
        %v3875 = vpack.c.b16 %v3867, %v3859
        %v3876 = vpack.c.b16 %v3868, %v3860
        %v4013 = vunpack.c.l.b16 %v3710
        %v4014 = vunpack.c.l.b16 %v3711
        %v4015 = vunpack.c.l.b16 %v3712
        %v4016 = vunpack.c.l.b16 %v3713
        %v4017 = vunpack.c.l.b16 %v3714
        %v4018 = vunpack.c.l.b16 %v3715
        %v4019 = vunpack.c.l.b16 %v3716
        %v4020 = vunpack.c.l.b16 %v3717
        %v4021 = vunpack.c.l.b16 %v3718
        %v4022 = vunpack.c.l.b16 %v3719
        %v4023 = vunpack.c.l.b16 %v3720
        %v4024 = vunpack.c.l.b16 %v3721
        %v4025 = vunpack.c.l.b16 %v3722
        %v4026 = vunpack.c.l.b16 %v3723
        %v4027 = vunpack.c.l.b16 %v3724
        %v4028 = vunpack.c.l.b16 %v3725
        %v4029 = vunpack.c.l.b16 %v3726
        %v4030 = vunpack.c.l.b16 %v3727
        %v4031 = vunpack.c.l.b16 %v3728
        %v4032 = vunpack.c.l.b16 %v3729
        %v4033 = vunpack.c.l.b16 %v3730
        %v4034 = vunpack.c.l.b16 %v3731
        %v4035 = vunpack.c.l.b16 %v3732
        %v4036 = vunpack.c.l.b16 %v3733
        %v4037 = vunpack.c.l.b16 %v3734
        %v4038 = vunpack.c.l.b16 %v3735
        %v4039 = vunpack.c.l.b16 %v3736
        %v4040 = vunpack.c.l.b16 %v3737
        %v4041 = vunpack.c.l.b16 %v3738
        %v4042 = vunpack.c.l.b16 %v3739
        %v4043 = vunpack.c.l.b16 %v3740
        %v4044 = vunpack.c.l.b16 %v3741
        %v4045 = vunpack.c.l.b16 %v3742
        %v4046 = vunpack.c.l.b16 %v3743
        %v4047 = vunpack.c.l.b16 %v3744
        %v4048 = vunpack.c.l.b16 %v3745
        %v4049 = vunpack.c.l.b16 %v3746
        %v4050 = vunpack.c.l.b16 %v3747
        %v4051 = vunpack.c.l.b16 %v3748
        %v4052 = vunpack.c.l.b16 %v3749
        %v4053 = vunpack.c.l.b16 %v3750
        %v4054 = vunpack.c.l.b16 %v3751
        %v4055 = vunpack.c.l.b16 %v3752
        %v4056 = vunpack.c.l.b16 %v3753
        %v4057 = vunpack.c.l.b16 %v3754
        %v4058 = vunpack.c.l.b16 %v3755
        %v4059 = vunpack.c.l.b16 %v3756
        %v4060 = vunpack.c.l.b16 %v3757
        %v4061 = vunpack.c.l.b16 %v3758
        %v4062 = vunpack.c.l.b16 %v3759
        %v4063 = vunpack.c.l.b16 %v3760
        %v4064 = vunpack.c.l.b16 %v3761
        %v4065 = vunpack.c.l.b16 %v3762
        %v4066 = vunpack.c.l.b16 %v3763
        %v4067 = vunpack.c.l.b16 %v3764
        %v4068 = vunpack.c.l.b16 %v3765
        %v4069 = vunpack.c.l.b16 %v3766
        %v4070 = vunpack.c.l.b16 %v3767
        %v4071 = vunpack.c.l.b16 %v3768
        %v4072 = vunpack.c.l.b16 %v3769
        %v4073 = vunpack.c.l.b16 %v3770
        %v4074 = vunpack.c.l.b16 %v3771
        %v4075 = vunpack.c.l.b16 %v3772
        %v4076 = vunpack.c.l.b16 %v3773
        %v4077 = vunpack.c.l.b16 %v3774
        %v4078 = vunpack.c.l.b16 %v3775
        %v4079 = vunpack.c.l.b16 %v3776
        %v4080 = vunpack.c.l.b16 %v3777
        %v4081 = vunpack.c.l.b16 %v3778
        %v4082 = vunpack.c.l.b16 %v3779
        %v4083 = vunpack.c.l.b16 %v3780
        %v4084 = vunpack.c.l.b16 %v3781
        %v4085 = vunpack.c.l.b16 %v3782
        %v4086 = vunpack.c.l.b16 %v3783
        %v4087 = vunpack.c.l.b16 %v3784
        %v4088 = vunpack.c.l.b16 %v3785
        %v4089 = vunpack.c.l.b16 %v3786
        %v4090 = vunpack.c.l.b16 %v3787
        %v4091 = vunpack.c.l.b16 %v3788
        %v4092 = vunpack.c.l.b16 %v3789
        %v4093 = vunpack.c.l.b16 %v3790
        %v4094 = vunpack.c.l.b16 %v3791
        %v4095 = vunpack.c.l.b16 %v3792
        %v4096 = vunpack.c.l.b16 %v3793
        %v4097 = vunpack.c.l.b16 %v3794
        %v4098 = vunpack.c.l.b16 %v3795
        %v4099 = vunpack.c.l.b16 %v3796
        %v4100 = vunpack.c.l.b16 %v3797
        %v4101 = vunpack.c.l.b16 %v3798
        %v4102 = vunpack.c.l.b16 %v3799
        %v4103 = vunpack.c.l.b16 %v3800
        %v4104 = vunpack.c.l.b16 %v3801
        %v4105 = vunpack.c.l.b16 %v3802
        %v4106 = vunpack.c.l.b16 %v3803
        %v4107 = vunpack.c.l.b16 %v3804
        %v4108 = vunpack.c.l.b16 %v3805
        %v4109 = vunpack.c.l.b16 %v3806
        %v4110 = vunpack.c.l.b16 %v3807
        %v4111 = vunpack.c.l.b16 %v3808
        %v4112 = vunpack.c.l.b16 %v3809
        %v4113 = vunpack.c.l.b16 %v3810
        %v4114 = vunpack.c.l.b16 %v3811
        %v4115 = vunpack.c.l.b16 %v3812
        %v4116 = vunpack.c.l.b16 %v3813
        %v4117 = vunpack.c.l.b16 %v3814
        %v4118 = vunpack.c.l.b16 %v3815
        %v4119 = vunpack.c.l.b16 %v3816
        %v4120 = vunpack.c.l.b16 %v3817
        %v4121 = vunpack.c.l.b16 %v3818
        %v4122 = vunpack.c.l.b16 %v3819
        %v4123 = vunpack.c.l.b16 %v3820
        %v4124 = vunpack.c.l.b16 %v3821
        %v4125 = vunpack.c.l.b16 %v3822
        %v4126 = vunpack.c.l.b16 %v3823
        %v4127 = vunpack.c.l.b16 %v3824
        %v4128 = vunpack.c.l.b16 %v3825
        %v4129 = vunpack.c.l.b16 %v3826
        %v4130 = vunpack.c.l.b16 %v3827
        %v4131 = vunpack.c.l.b16 %v3828
        %v4132 = vunpack.c.l.b16 %v3829
        %v4133 = vunpack.c.l.b16 %v3830
        %v4134 = vunpack.c.l.b16 %v3831
        %v4135 = vunpack.c.l.b16 %v3832
        %v4136 = vunpack.c.l.b16 %v3833
        %v4137 = vunpack.c.l.b16 %v3834
        %v4138 = vunpack.c.l.b16 %v3835
        %v4139 = vunpack.c.l.b16 %v3836
        %v4140 = vunpack.c.l.b16 %v3837
        %v4141 = vpack.c.b16 %v4014, %v4013
        %v4142 = vpack.c.b16 %v4016, %v4015
        %v4143 = vpack.c.b16 %v4018, %v4017
        %v4144 = vpack.c.b16 %v4020, %v4019
        %v4145 = vpack.c.b16 %v4022, %v4021
        %v4146 = vpack.c.b16 %v4024, %v4023
        %v4147 = vpack.c.b16 %v4026, %v4025
        %v4148 = vpack.c.b16 %v4028, %v4027
        %v4149 = vpack.c.b16 %v4030, %v4029
        %v4150 = vpack.c.b16 %v4032, %v4031
        %v4151 = vpack.c.b16 %v4034, %v4033
        %v4152 = vpack.c.b16 %v4036, %v4035
        %v4153 = vpack.c.b16 %v4038, %v4037
        %v4154 = vpack.c.b16 %v4040, %v4039
        %v4155 = vpack.c.b16 %v4042, %v4041
        %v4156 = vpack.c.b16 %v4044, %v4043
        %v4157 = vpack.c.b16 %v4046, %v4045
        %v4158 = vpack.c.b16 %v4048, %v4047
        %v4159 = vpack.c.b16 %v4050, %v4049
        %v4160 = vpack.c.b16 %v4052, %v4051
        %v4161 = vpack.c.b16 %v4054, %v4053
        %v4162 = vpack.c.b16 %v4056, %v4055
        %v4163 = vpack.c.b16 %v4058, %v4057
        %v4164 = vpack.c.b16 %v4060, %v4059
        %v4165 = vpack.c.b16 %v4062, %v4061
        %v4166 = vpack.c.b16 %v4064, %v4063
        %v4167 = vpack.c.b16 %v4066, %v4065
        %v4168 = vpack.c.b16 %v4068, %v4067
        %v4169 = vpack.c.b16 %v4070, %v4069
        %v4170 = vpack.c.b16 %v4072, %v4071
        %v4171 = vpack.c.b16 %v4074, %v4073
        %v4172 = vpack.c.b16 %v4076, %v4075
        %v4173 = vpack.c.b16 %v4078, %v4077
        %v4174 = vpack.c.b16 %v4080, %v4079
        %v4175 = vpack.c.b16 %v4082, %v4081
        %v4176 = vpack.c.b16 %v4084, %v4083
        %v4177 = vpack.c.b16 %v4086, %v4085
        %v4178 = vpack.c.b16 %v4088, %v4087
        %v4179 = vpack.c.b16 %v4090, %v4089
        %v4180 = vpack.c.b16 %v4092, %v4091
        %v4181 = vpack.c.b16 %v4094, %v4093
        %v4182 = vpack.c.b16 %v4096, %v4095
        %v4183 = vpack.c.b16 %v4098, %v4097
        %v4184 = vpack.c.b16 %v4100, %v4099
        %v4185 = vpack.c.b16 %v4102, %v4101
        %v4186 = vpack.c.b16 %v4104, %v4103
        %v4187 = vpack.c.b16 %v4106, %v4105
        %v4188 = vpack.c.b16 %v4108, %v4107
        %v4189 = vpack.c.b16 %v4110, %v4109
        %v4190 = vpack.c.b16 %v4112, %v4111
        %v4191 = vpack.c.b16 %v4114, %v4113
        %v4192 = vpack.c.b16 %v4116, %v4115
        %v4193 = vpack.c.b16 %v4118, %v4117
        %v4194 = vpack.c.b16 %v4120, %v4119
        %v4195 = vpack.c.b16 %v4122, %v4121
        %v4196 = vpack.c.b16 %v4124, %v4123
        %v4197 = vpack.c.b16 %v4126, %v4125
        %v4198 = vpack.c.b16 %v4128, %v4127
        %v4199 = vpack.c.b16 %v4130, %v4129
        %v4200 = vpack.c.b16 %v4132, %v4131
        %v4201 = vpack.c.b16 %v4134, %v4133
        %v4202 = vpack.c.b16 %v4136, %v4135
        %v4203 = vpack.c.b16 %v4138, %v4137
        %v4204 = vpack.c.b16 %v4140, %v4139
        %4269 = vmatprep.subr.bf16.mxu0 0
        %4270 = vmatpush1.bf16.msra.mxu0 %v4148
        %4271 = vmatprep.subr.bf16.mxu0 0
        %4272 = vmatpush1.bf16.msra.mxu0 %v4147
        %4273 = vmatprep.subr.bf16.mxu0 0
        %4274 = vmatpush1.bf16.msra.mxu0 %v4146
        %4275 = vmatprep.subr.bf16.mxu0 0
        %4276 = vmatpush1.bf16.msra.mxu0 %v4145
        %4277 = vmatprep.subr.bf16.mxu0 0
        %4278 = vmatpush1.bf16.msra.mxu0 %v4144
        %4279 = vmatprep.subr.bf16.mxu0 0
        %4280 = vmatpush1.bf16.msra.mxu0 %v4143
        %4281 = vmatprep.subr.bf16.mxu0 0
        %4282 = vmatpush1.bf16.msra.mxu0 %v4142
        %4283 = vmatprep.subr.bf16.mxu0 0
        %4284 = vmatpush1.bf16.msra.mxu0 %v4141
        %4285 = vmatprep.subr.bf16.mxu0 0
        %4286 = vmatpush2.bf16.msra.mxu0 %v4156
        %4287 = vmatprep.subr.bf16.mxu0 0
        %4288 = vmatpush2.bf16.msra.mxu0 %v4155
        %4289 = vmatprep.subr.bf16.mxu0 0
        %4290 = vmatpush2.bf16.msra.mxu0 %v4154
        %4291 = vmatprep.subr.bf16.mxu0 0
        %4292 = vmatpush2.bf16.msra.mxu0 %v4153
        %4293 = vmatprep.subr.bf16.mxu0 0
        %4294 = vmatpush2.bf16.msra.mxu0 %v4152
        %4295 = vmatprep.subr.bf16.mxu0 0
        %4296 = vmatpush2.bf16.msra.mxu0 %v4151
        %4297 = vmatprep.subr.bf16.mxu0 0
        %4298 = vmatpush2.bf16.msra.mxu0 %v4150
        %4299 = vmatprep.subr.bf16.mxu0 0
        %4300 = vmatpush2.bf16.msra.mxu0 %v4149
        %4301 = vmatprep.mubr.bf16.mxu0 %v3870
        %4302 = vmatmul.mubr.bf16.gmra.mxu0 %v3869
        %v4303 = vpop.f32.mrf.mxu0
        %v4304 = vadd.f32 %v3843, %v4303
        %v4305 = vpop.f32.mrf.mxu0
        %v4306 = vpop.f32.mrf.mxu0
        %v4307 = vadd.f32 %v3843, %v4306
        %v4308 = vpop.f32.mrf.mxu0
        %4309 = vdwg.mxu0
        %4310 = vmatprep.subr.bf16.mxu0 0
        %4311 = vmatpush1.bf16.msra.mxu0 %v4164
        %4312 = vmatprep.subr.bf16.mxu0 0
        %4313 = vmatpush1.bf16.msra.mxu0 %v4163
        %4314 = vmatprep.subr.bf16.mxu0 0
        %4315 = vmatpush1.bf16.msra.mxu0 %v4162
        %4316 = vmatprep.subr.bf16.mxu0 0
        %4317 = vmatpush1.bf16.msra.mxu0 %v4161
        %4318 = vmatprep.subr.bf16.mxu0 0
        %4319 = vmatpush1.bf16.msra.mxu0 %v4160
        %4320 = vmatprep.subr.bf16.mxu0 0
        %4321 = vmatpush1.bf16.msra.mxu0 %v4159
        %4322 = vmatprep.subr.bf16.mxu0 0
        %4323 = vmatpush1.bf16.msra.mxu0 %v4158
        %4324 = vmatprep.subr.bf16.mxu0 0
        %4325 = vmatpush1.bf16.msra.mxu0 %v4157
        %4326 = vmatprep.subr.bf16.mxu0 0
        %4327 = vmatpush2.bf16.msra.mxu0 %v4172
        %4328 = vmatprep.subr.bf16.mxu0 0
        %4329 = vmatpush2.bf16.msra.mxu0 %v4171
        %4330 = vmatprep.subr.bf16.mxu0 0
        %4331 = vmatpush2.bf16.msra.mxu0 %v4170
        %4332 = vmatprep.subr.bf16.mxu0 0
        %4333 = vmatpush2.bf16.msra.mxu0 %v4169
        %4334 = vmatprep.subr.bf16.mxu0 0
        %4335 = vmatpush2.bf16.msra.mxu0 %v4168
        %4336 = vmatprep.subr.bf16.mxu0 0
        %4337 = vmatpush2.bf16.msra.mxu0 %v4167
        %4338 = vmatprep.subr.bf16.mxu0 0
        %4339 = vmatpush2.bf16.msra.mxu0 %v4166
        %4340 = vmatprep.subr.bf16.mxu0 0
        %4341 = vmatpush2.bf16.msra.mxu0 %v4165
        %4342 = vmatprep.mubr.bf16.mxu0 %v3872
        %4343 = vmatmul.mubr.bf16.gmra.mxu0 %v3871
        %v4344 = vpop.f32.mrf.mxu0
        %v4345 = vadd.f32 %v4304, %v4344
        %v4346 = vpop.f32.mrf.mxu0
        %v4347 = vpop.f32.mrf.mxu0
        %v4348 = vadd.f32 %v4307, %v4347
        %v4349 = vpop.f32.mrf.mxu0
        %4350 = vdwg.mxu0
        %4351 = vmatprep.subr.bf16.mxu0 0
        %4352 = vmatpush1.bf16.msra.mxu0 %v4180
        %4353 = vmatprep.subr.bf16.mxu0 0
        %4354 = vmatpush1.bf16.msra.mxu0 %v4179
        %4355 = vmatprep.subr.bf16.mxu0 0
        %4356 = vmatpush1.bf16.msra.mxu0 %v4178
        %4357 = vmatprep.subr.bf16.mxu0 0
        %4358 = vmatpush1.bf16.msra.mxu0 %v4177
        %4359 = vmatprep.subr.bf16.mxu0 0
        %4360 = vmatpush1.bf16.msra.mxu0 %v4176
        %4361 = vmatprep.subr.bf16.mxu0 0
        %4362 = vmatpush1.bf16.msra.mxu0 %v4175
        %4363 = vmatprep.subr.bf16.mxu0 0
        %4364 = vmatpush1.bf16.msra.mxu0 %v4174
        %4365 = vmatprep.subr.bf16.mxu0 0
        %4366 = vmatpush1.bf16.msra.mxu0 %v4173
        %4367 = vmatprep.subr.bf16.mxu0 0
        %4368 = vmatpush2.bf16.msra.mxu0 %v4188
        %4369 = vmatprep.subr.bf16.mxu0 0
        %4370 = vmatpush2.bf16.msra.mxu0 %v4187
        %4371 = vmatprep.subr.bf16.mxu0 0
        %4372 = vmatpush2.bf16.msra.mxu0 %v4186
        %4373 = vmatprep.subr.bf16.mxu0 0
        %4374 = vmatpush2.bf16.msra.mxu0 %v4185
        %4375 = vmatprep.subr.bf16.mxu0 0
        %4376 = vmatpush2.bf16.msra.mxu0 %v4184
        %4377 = vmatprep.subr.bf16.mxu0 0
        %4378 = vmatpush2.bf16.msra.mxu0 %v4183
        %4379 = vmatprep.subr.bf16.mxu0 0
        %4380 = vmatpush2.bf16.msra.mxu0 %v4182
        %4381 = vmatprep.subr.bf16.mxu0 0
        %4382 = vmatpush2.bf16.msra.mxu0 %v4181
        %4383 = vmatprep.mubr.bf16.mxu0 %v3874
        %4384 = vmatmul.mubr.bf16.gmra.mxu0 %v3873
        %v4385 = vpop.f32.mrf.mxu0
        %v4386 = vadd.f32 %v4345, %v4385
        %v4387 = vpop.f32.mrf.mxu0
        %v4388 = vpop.f32.mrf.mxu0
        %v4389 = vadd.f32 %v4348, %v4388
        %v4390 = vpop.f32.mrf.mxu0
        %4391 = vdwg.mxu0
        %4392 = vmatprep.subr.bf16.mxu0 0
        %4393 = vmatpush1.bf16.msra.mxu0 %v4196
        %4394 = vmatprep.subr.bf16.mxu0 0
        %4395 = vmatpush1.bf16.msra.mxu0 %v4195
        %4396 = vmatprep.subr.bf16.mxu0 0
        %4397 = vmatpush1.bf16.msra.mxu0 %v4194
        %4398 = vmatprep.subr.bf16.mxu0 0
        %4399 = vmatpush1.bf16.msra.mxu0 %v4193
        %4400 = vmatprep.subr.bf16.mxu0 0
        %4401 = vmatpush1.bf16.msra.mxu0 %v4192
        %4402 = vmatprep.subr.bf16.mxu0 0
        %4403 = vmatpush1.bf16.msra.mxu0 %v4191
        %4404 = vmatprep.subr.bf16.mxu0 0
        %4405 = vmatpush1.bf16.msra.mxu0 %v4190
        %4406 = vmatprep.subr.bf16.mxu0 0
        %4407 = vmatpush1.bf16.msra.mxu0 %v4189
        %4408 = vmatprep.subr.bf16.mxu0 0
        %4409 = vmatpush2.bf16.msra.mxu0 %v4204
        %4410 = vmatprep.subr.bf16.mxu0 0
        %4411 = vmatpush2.bf16.msra.mxu0 %v4203
        %4412 = vmatprep.subr.bf16.mxu0 0
        %4413 = vmatpush2.bf16.msra.mxu0 %v4202
        %4414 = vmatprep.subr.bf16.mxu0 0
        %4415 = vmatpush2.bf16.msra.mxu0 %v4201
        %4416 = vmatprep.subr.bf16.mxu0 0
        %4417 = vmatpush2.bf16.msra.mxu0 %v4200
        %4418 = vmatprep.subr.bf16.mxu0 0
        %4419 = vmatpush2.bf16.msra.mxu0 %v4199
        %4420 = vmatprep.subr.bf16.mxu0 0
        %4421 = vmatpush2.bf16.msra.mxu0 %v4198
        %4422 = vmatprep.subr.bf16.mxu0 0
        %4423 = vmatpush2.bf16.msra.mxu0 %v4197
        %4424 = vmatprep.mubr.bf16.mxu0 %v3876
        %4425 = vmatmul.mubr.bf16.gmra.mxu0 %v3875
        %v4426 = vpop.f32.mrf.mxu0
        %v4427 = vadd.f32 %v4386, %v4426
        %v4428 = vpop.f32.mrf.mxu0
        %v4429 = vpop.f32.mrf.mxu0
        %v4430 = vadd.f32 %v4389, %v4429
        %v4431 = vpop.f32.mrf.mxu0
        %4432 = vdwg.mxu0
        %4433 = vst [vmem:[%s339] sm:$0xff] %v4427
        %4434 = vst [vmem:[%s339 + $0x8] sm:$0xff] %v4430
        %s4435 = sand.u32 %s208, 1
        %s4436 = scalar_lea.sflag [#allocation3], %s4435
        %s4437 = sand.u32 %s208, 1
        %s4438 = smul.addr %s4437, 256
        %s4439 = scalar_lea.vmem [#allocation2], %s4438
        %s4440 = sand.u32 %s234, 1
        %s4441 = scalar_lea.sflag [#allocation5], %s4440
        %s4442 = sand.u32 %s234, 1
        %s4443 = smul.addr %s4442, 16
        %s4444 = scalar_lea.vmem [#allocation4], %s4443
        // Predicated region
        $region53: #{_heads_call.1} parent=51 // pred_check
          %p4445 = pneg %p218
        $region54: #{_heads_call.1} parent=51 // pred_check_branch
          %4447 = sbr.rel (%p4445) target = $region56
        $region55: #{_heads_call.1} parent=51 // pred_region
          %s4448 = smul.u32 32, %s27
          %s4450 = ssub.s32 4096, 4096
          %4451 = vsyncadd %s4436, %s4450
          %s4452 = smul.addr %s4448, 128
          %s4453 = scalar_lea.hbm %s8, %s4452
          %s4454 = sshll.u32 %s4439, 4
          %s4455 = int_to_ptr.vmem [resolvable:$true] %s4454
          %4460 = dma.vmem_to_hbm [thread:$0]  %s4455, 4096, %s4453, %s4436, 128, 128, 8
        $region56: #{_heads_call.1} parent=51 // pred_fallthru
          _
        // Predicated region
        $region57: #{_heads_call.1} parent=51 // pred_check
          %p4461 = pneg %p244
        $region58: #{_heads_call.1} parent=51 // pred_check_branch
          %4463 = sbr.rel (%p4461) target = $region60
        $region59: #{_heads_call.1} parent=51 // pred_region
          %s4465 = ssub.s32 256, 256
          %4466 = vsyncadd %s4441, %s4465
          %s4467 = smul.addr %s27, 2
          %s4468 = smul.addr %s4467, 128
          %s4469 = scalar_lea.hbm %s9, %s4468
          %s4470 = sshll.u32 %s4444, 4
          %s4471 = int_to_ptr.vmem [resolvable:$true] %s4470
          %4476 = dma.vmem_to_hbm [thread:$0]  %s4471, 256, %s4469, %s4441, 128, 128, 8
        $region60: #{_heads_call.1} parent=51 // pred_fallthru
          _
      $region52: #{_heads_call.1} parent=5 // pred_fallthru
        _
      %p4477 = scmp.le.s32.totalorder 2, %s22
      // Predicated region
      $region61: #{_heads_call.1} parent=5 // pred_check
        %p4478 = pneg %p4477
      $region62: #{_heads_call.1} parent=5 // pred_check_branch
        %4480 = sbr.rel (%p4478) target = $region64
      $region63: #{_heads_call.1} parent=5 // pred_region
        %s4481 = ssub.s32 %s22, 2
        // Predicated region
        $region65: #{_heads_call.1} parent=63 // pred_check
          %p4482 = pneg %p224
        $region66: #{_heads_call.1} parent=63 // pred_check_branch
          %4484 = sbr.rel (%p4482) target = $region68
        $region67: #{_heads_call.1} parent=63 // pred_region
          %s4485 = sand.u32 %s209, 1
          %s4486 = scalar_lea.sflag [#allocation3], %s4485
          %s4487 = sand.u32 %s209, 1
          %s4488 = smul.addr %s4487, 256
          %s4489 = scalar_lea.vmem [#allocation2], %s4488
          %4490 = dma.done %s4486, 4096
        $region68: #{_heads_call.1} parent=63 // pred_fallthru
          _
        // Predicated region
        $region69: #{_heads_call.1} parent=63 // pred_check
          %p4491 = pneg %p250
        $region70: #{_heads_call.1} parent=63 // pred_check_branch
          %4493 = sbr.rel (%p4491) target = $region72
        $region71: #{_heads_call.1} parent=63 // pred_region
          %s4494 = sand.u32 %s235, 1
          %s4495 = scalar_lea.sflag [#allocation5], %s4494
          %s4496 = sand.u32 %s235, 1
          %s4497 = smul.addr %s4496, 16
          %s4498 = scalar_lea.vmem [#allocation4], %s4497
          %4499 = dma.done %s4495, 256
        $region72: #{_heads_call.1} parent=63 // pred_fallthru
          _
      $region64: #{_heads_call.1} parent=5 // pred_fallthru
        _
    $region6: #{_heads_call.1} parent=1 // loop_footer
      %s26 = sadd.s32 1, %s22
    $region7: #{_heads_call.1} parent=1 // loop_footer_branch
      %21 = sbr.rel target = $region3
    $region8: #{_heads_call.1} parent=1 // loop_exit
      _
    %4500 = vsyncpa [#allocation3], 1
    %s4501 = scalar_lea.sflag [#allocation3], 1
    %4502 = vsyncpa %s4501, 1
    %4503 = vsyncpa [#allocation5], 1
    %s4504 = scalar_lea.sflag [#allocation5], 1
    %4505 = vsyncpa %s4504, 1

</llo_original>
